<compile_context>
chip_gen: v6e
topology: v6e:2x2x1
jax: 0.10.0
libtpu: 0.0.40
codegen_flags: <defaults>
</compile_context>

<pallas_src>
import functools
import math

import jax
import jax.numpy as jnp
from jax.experimental import pallas as pl
from jax.experimental.pallas import tpu as pltpu


LN_EPS = 1e-5
NEG_INF = -1e30
VMEM_LIMIT_BYTES = 48 * 1024 * 1024   # safe on v5e/v6e (128 MiB) and v7x (64 MiB)


# --------------------------------------------------------------------------
# small helpers
# --------------------------------------------------------------------------
def _round_up(x, m):
    return ((x + m - 1) // m) * m


def _pad_to(a, shape):
    return jnp.pad(a, [(0, t - s) for s, t in zip(a.shape, shape)])


def _pick_tile(total, candidates=(1024, 512, 256, 128, 64, 32, 16, 8)):
    for c in candidates:
        if total % c == 0:
            return c
    return total


def _pick_batch_tile(batch):
    # Bigger Bt amortizes per-block weight DMA over more images.  Bt must be a
    # multiple of 8 (BlockSpec sublane rule) unless it covers the whole batch.
    for bt in (16, 8):
        if batch % bt == 0:
            return bt
    return batch


def _masked_layernorm(x, gamma, beta, feat_ok, n_feat):
    # x: (R, E_pad) f32; feat_ok: (1, E_pad) bool (hoisted by caller).
    # Padded lanes are masked out of BOTH the mean and the variance.
    xm = jnp.where(feat_ok, x, 0.0)
    mean = jnp.sum(xm, axis=-1, keepdims=True) / n_feat
    diff = x - mean
    var = jnp.sum(jnp.where(feat_ok, diff, 0.0) ** 2, axis=-1,
                  keepdims=True) / n_feat
    return diff * jax.lax.rsqrt(var + LN_EPS) * gamma + beta


# --------------------------------------------------------------------------
# Pallas kernels
# --------------------------------------------------------------------------
def patch_embed_kernel(p_ref, w_ref, b_ref, out_ref):
    # fused (conv-as-matmul @ embedding Linear): (Rt, P_pad) @ (P_pad, E_pad)
    out_ref[...] = (jnp.dot(p_ref[...], w_ref[...],
                            preferred_element_type=jnp.float32) + b_ref[...])


def encoder_stack_kernel(x_ref, wqkv_ref, bqkv_ref, wo_ref, bo_ref,
                         g1_ref, be1_ref, w1_ref, bf1_ref, w2_ref, bf2_ref,
                         g2_ref, be2_ref, clsw_ref, clsb_ref,
                         out_ref, acc_ref,
                         *, head, qk_pad, v_pad, e_real, n_real, class_num):
    # grid = (batch_tile, block); activation carried in acc_ref across blocks.
    l = pl.program_id(1)

    @pl.when(l == 0)
    def _():
        acc_ref[...] = x_ref[...]

    bt, n_pad, e_pad = acc_ref.shape
    r = bt * n_pad

    # hoisted masks (JAX does not CSE broadcast_in_dim -> build once per block)
    feat_ok = jax.lax.broadcasted_iota(jnp.int32, (1, e_pad), 1) < e_real
    key_ok = jax.lax.broadcasted_iota(jnp.int32, (n_pad, n_pad), 1) < n_real

    x2 = acc_ref[...].reshape(r, e_pad)              # (Bt*N_pad, E_pad) f32
    x16 = x2.astype(jnp.bfloat16)

    # fused Q|K|V projection: one wide lane-dense matmul, batch folded in rows.
    # (1/sqrt(qk) already folded into the Q weights/bias at prepare time.)
    qkv = jnp.dot(x16, wqkv_ref[0],
                  preferred_element_type=jnp.float32) + bqkv_ref[0]
    qkv3 = qkv.reshape(bt, n_pad, 2 * head * qk_pad + head * v_pad)
    k_base = head * qk_pad
    v_base = 2 * head * qk_pad

    # per-head attention; all lane slices are at 128-aligned static offsets.
    # TODO(synk): for head_dim=64 production ViTs de-pad qk/v to head_dim and
    # convert this static loop to lax.fori_loop to bound live ranges.
    outs = []
    for h in range(head):
        q = qkv3[:, :, h * qk_pad:(h + 1) * qk_pad].astype(jnp.bfloat16)
        k = qkv3[:, :, k_base + h * qk_pad:
                       k_base + (h + 1) * qk_pad].astype(jnp.bfloat16)
        v = qkv3[:, :, v_base + h * v_pad:
                       v_base + (h + 1) * v_pad].astype(jnp.bfloat16)
        s = jnp.einsum("bqd,bkd->bqk", q, k, preferred_element_type=jnp.float32)
        s = jnp.where(key_ok, s, NEG_INF)            # mask padded key tokens
        s = s - jnp.max(s, axis=-1, keepdims=True)
        e = jnp.exp(s)
        p = e * pl.reciprocal(jnp.sum(e, axis=-1, keepdims=True), approx=True)
        outs.append(jnp.einsum("bqk,bkd->bqd", p.astype(jnp.bfloat16), v,
                               preferred_element_type=jnp.float32))

    # single output projection: contraction over head*v_pad (no per-head adds)
    o_cat = jnp.concatenate(outs, axis=-1).reshape(r, head * v_pad)
    z = jnp.dot(o_cat.astype(jnp.bfloat16), wo_ref[0],
                preferred_element_type=jnp.float32) + bo_ref[0]

    o1 = _masked_layernorm(z + x2, g1_ref[0], be1_ref[0], feat_ok, e_real)

    # FFN.  TODO(synk): tile over F (extra 'arbitrary' axis) for F>=3072 on v7x.
    ff = jnp.dot(o1.astype(jnp.bfloat16), w1_ref[0],
                 preferred_element_type=jnp.float32) + bf1_ref[0]
    ff = jnp.maximum(ff, 0.0)
    ff = jnp.dot(ff.astype(jnp.bfloat16), w2_ref[0],
                 preferred_element_type=jnp.float32) + bf2_ref[0]

    o2 = _masked_layernorm(o1 + ff, g2_ref[0], be2_ref[0], feat_ok, e_real)
    acc_ref[...] = o2.reshape(bt, n_pad, e_pad)

    # fused class head on the CLS token only (no full-token HBM writeback)
    @pl.when(l == pl.num_programs(1) - 1)
    def _():
        cls_tok = acc_ref[:, 0, :]                                  # (Bt, E_pad)
        logits = jnp.dot(cls_tok.astype(jnp.bfloat16), clsw_ref[...],
                         preferred_element_type=jnp.float32) + clsb_ref[...]
        cmask = jax.lax.broadcasted_iota(jnp.int32, logits.shape, 1) < class_num
        logits = jnp.where(cmask, logits, NEG_INF)
        logits = logits - jnp.max(logits, axis=-1, keepdims=True)
        e = jnp.exp(logits)
        out_ref[...] = e / jnp.sum(e, axis=-1, keepdims=True)       # exact softmax


# --------------------------------------------------------------------------
# pallas_call wrappers
# --------------------------------------------------------------------------
def patch_embed(patches, w_fused, b_fused):
    r, p_pad = patches.shape
    e_pad = w_fused.shape[1]
    rt = _pick_tile(r)
    return pl.pallas_call(
        patch_embed_kernel,
        out_shape=jax.ShapeDtypeStruct((r, e_pad), jnp.float32),
        grid=(r // rt,),
        in_specs=[pl.BlockSpec((rt, p_pad), lambda i: (i, 0)),
                  pl.BlockSpec((p_pad, e_pad), lambda i: (0, 0)),
                  pl.BlockSpec((1, e_pad), lambda i: (0, 0))],
        out_specs=pl.BlockSpec((rt, e_pad), lambda i: (i, 0)),
        compiler_params=pltpu.CompilerParams(
            dimension_semantics=("parallel",),
            vmem_limit_bytes=VMEM_LIMIT_BYTES),
    )(patches, w_fused, b_fused)


def encoder_stack(y, blocks, cls_w, cls_b, *, head, qk_pad, v_pad,
                  e_real, n_real, class_num, batch_tile):
    B, n_pad, e_pad = y.shape
    L = blocks["wqkv"].shape[0]
    c_pad = cls_w.shape[1]
    nb = B // batch_tile

    names = ["wqkv", "bqkv", "wo", "bo", "g1", "be1",
             "w1", "bf1", "w2", "bf2", "g2", "be2"]

    def wspec(arr):
        nd = arr.ndim
        return pl.BlockSpec((1,) + arr.shape[1:],
                            lambda ib, l, nd=nd: (l,) + (0,) * (nd - 1))

    kern = functools.partial(
        encoder_stack_kernel, head=head, qk_pad=qk_pad, v_pad=v_pad,
        e_real=e_real, n_real=n_real, class_num=class_num)

    return pl.pallas_call(
        kern,
        out_shape=jax.ShapeDtypeStruct((B, c_pad), jnp.float32),
        grid=(nb, L),
        in_specs=[pl.BlockSpec((batch_tile, n_pad, e_pad),
                               lambda ib, l: (ib, 0, 0))]
                 + [wspec(blocks[n]) for n in names]
                 + [pl.BlockSpec(cls_w.shape, lambda ib, l: (0, 0)),
                    pl.BlockSpec(cls_b.shape, lambda ib, l: (0, 0))],
        out_specs=pl.BlockSpec((batch_tile, c_pad), lambda ib, l: (ib, 0)),
        scratch_shapes=[pltpu.VMEM((batch_tile, n_pad, e_pad), jnp.float32)],
        compiler_params=pltpu.CompilerParams(
            dimension_semantics=("parallel", "arbitrary"),
            vmem_limit_bytes=VMEM_LIMIT_BYTES),
    )(y, *[blocks[n] for n in names], cls_w, cls_b)


# --------------------------------------------------------------------------
# Full forward pass (glue in JAX, compute in Pallas)
# --------------------------------------------------------------------------
def vision_transformer_forward(x, prepared, *, patch_size, head, q_k_size,
                               v_size, embedding_size, num_tokens, class_num):
    B, C, H, W = x.shape
    pc = H // patch_size
    np_ = pc * pc
    p_feat = C * patch_size * patch_size
    p_pad, e_pad = prepared["pe_w"].shape
    n_pad = _round_up(num_tokens, 16)         # 16: bf16 sublane packing
    qk_pad = _round_up(q_k_size, 128)
    v_pad = _round_up(v_size, 128)

    # im2col in bf16: (B,C,pc,p,pc,p) -> (B,pc,pc,C,p,p) -> (B*Np, C*p*p)
    patches = x.reshape(B, C, pc, patch_size, pc, patch_size)
    patches = patches.transpose(0, 2, 4, 1, 3, 5).reshape(B * np_, p_feat)
    r_pad = _round_up(B * np_, 8)
    patches = _pad_to(patches.astype(jnp.bfloat16), (r_pad, p_pad))

    emb = patch_embed(patches, prepared["pe_w"], prepared["pe_b"])[:B * np_]
    emb = emb.reshape(B, np_, e_pad)

    cls = jnp.broadcast_to(prepared["cls"], (B, 1, e_pad))
    y = jnp.concatenate([cls, emb], axis=1) + prepared["pos"]       # (B, Np+1, E)
    y = jnp.pad(y, ((0, 0), (0, n_pad - num_tokens), (0, 0)))       # (B, N_pad, E)

    bt = _pick_batch_tile(B)
    probs = encoder_stack(y, prepared["blocks"], prepared["cls_w"],
                          prepared["cls_b"], head=head, qk_pad=qk_pad,
                          v_pad=v_pad, e_real=embedding_size,
                          n_real=num_tokens, class_num=class_num,
                          batch_tile=bt)
    return probs[:, :class_num]


# --------------------------------------------------------------------------
# Parameter construction (matching the PyTorch module) + preparation
# (fusion, scale folding, per-head 128-aligned packing, lane padding, bf16)
# --------------------------------------------------------------------------
def init_params(key, *, in_channel, patch_size, embedding_size, q_k_size,
                v_size, f_size, head, nblocks, class_num, num_patches):
    keys = iter(jax.random.split(key, 128))

    def rnd(shape, scale=0.02):
        return jax.random.normal(next(keys), shape, jnp.float32) * scale

    P = in_channel * patch_size * patch_size       # conv in-features per patch
    OC = P                                         # conv out_channels = p*p*C
    E = embedding_size
    params = {
        "wc": rnd((P, OC)), "bc": rnd((1, OC)),          # conv-as-matmul
        "we": rnd((OC, E)), "be": rnd((1, E)),           # patch embedding Linear
        "cls": rnd((1, 1, E)),                           # CLS token
        "pos": rnd((1, num_patches + 1, E)),             # position embedding
        "blocks": [],
        "wcls": rnd((E, class_num)), "bcls": rnd((1, class_num)),
    }
    for _ in range(nblocks):
        params["blocks"].append({
            "wq": rnd((E, head * q_k_size)), "bq": rnd((1, head * q_k_size)),
            "wk": rnd((E, head * q_k_size)), "bk": rnd((1, head * q_k_size)),
            "wv": rnd((E, head * v_size)),   "bv": rnd((1, head * v_size)),
            "wo": rnd((head * v_size, E)),   "bo": rnd((1, E)),
            "g1": jnp.ones((1, E), jnp.float32), "beta1": jnp.zeros((1, E), jnp.float32),
            "w1": rnd((E, f_size)), "bf1": rnd((1, f_size)),
            "w2": rnd((f_size, E)), "bf2": rnd((1, E)),
            "g2": jnp.ones((1, E), jnp.float32), "beta2": jnp.zeros((1, E), jnp.float32),
        })
    return params


def prepare_params(params, *, head, q_k_size, v_size):
    E = params["we"].shape[1]
    P = params["wc"].shape[0]
    F = params["blocks"][0]["w1"].shape[1]
    C = params["wcls"].shape[1]
    E_pad = _round_up(E, 128)
    P_pad = _round_up(P, 128)
    QK_pad = _round_up(q_k_size, 128)
    V_pad = _round_up(v_size, 128)
    F_pad = _round_up(F, 128)
    C_pad = _round_up(C, 128)
    scale = 1.0 / math.sqrt(q_k_size)

    # fuse the two chained affine layers of the patch embedding
    w_fused = params["wc"] @ params["we"]
    b_fused = params["bc"] @ params["we"] + params["be"]

    prepared = {
        "pe_w": _pad_to(w_fused, (P_pad, E_pad)).astype(jnp.bfloat16),
        "pe_b": _pad_to(b_fused, (1, E_pad)),
        "cls": _pad_to(params["cls"], (1, 1, E_pad)),
        "pos": _pad_to(params["pos"], params["pos"].shape[:2] + (E_pad,)),
        "cls_w": _pad_to(params["wcls"], (E_pad, C_pad)).astype(jnp.bfloat16),
        "cls_b": _pad_to(params["bcls"], (1, C_pad)),
    }

    def split_cols(w, size, pad):
        # (E, head*size) -> (E_pad, head*pad), each head at a 128-aligned offset
        out = jnp.zeros((E_pad, head * pad), jnp.float32)
        for h in range(head):
            out = out.at[:E, h * pad:h * pad + size].set(w[:, h * size:(h + 1) * size])
        return out

    def split_bias(b, size, pad):
        out = jnp.zeros((1, head * pad), jnp.float32)
        for h in range(head):
            out = out.at[:, h * pad:h * pad + size].set(b[:, h * size:(h + 1) * size])
        return out

    def split_rows(w, size, pad):
        # (head*size, E) -> (head*pad, E_pad)
        out = jnp.zeros((head * pad, E_pad), jnp.float32)
        for h in range(head):
            out = out.at[h * pad:h * pad + size, :E].set(w[h * size:(h + 1) * size, :])
        return out

    acc = {k: [] for k in ["wqkv", "bqkv", "wo", "bo", "g1", "be1",
                           "w1", "bf1", "w2", "bf2", "g2", "be2"]}
    for blk in params["blocks"]:
        # fold 1/sqrt(qk) into the Q projection (one-time weight prep)
        wq = split_cols(blk["wq"], q_k_size, QK_pad) * scale
        bq = split_bias(blk["bq"], q_k_size, QK_pad) * scale
        wk = split_cols(blk["wk"], q_k_size, QK_pad)
        bk = split_bias(blk["bk"], q_k_size, QK_pad)
        wv = split_cols(blk["wv"], v_size, V_pad)
        bv = split_bias(blk["bv"], v_size, V_pad)
        acc["wqkv"].append(jnp.concatenate([wq, wk, wv], axis=1).astype(jnp.bfloat16))
        acc["bqkv"].append(jnp.concatenate([bq, bk, bv], axis=1))
        acc["wo"].append(split_rows(blk["wo"], v_size, V_pad).astype(jnp.bfloat16))
        acc["bo"].append(_pad_to(blk["bo"], (1, E_pad)))
        acc["g1"].append(_pad_to(blk["g1"], (1, E_pad)))
        acc["be1"].append(_pad_to(blk["beta1"], (1, E_pad)))
        acc["w1"].append(_pad_to(blk["w1"], (E_pad, F_pad)).astype(jnp.bfloat16))
        acc["bf1"].append(_pad_to(blk["bf1"], (1, F_pad)))
        acc["w2"].append(_pad_to(blk["w2"], (F_pad, E_pad)).astype(jnp.bfloat16))
        acc["bf2"].append(_pad_to(blk["bf2"], (1, E_pad)))
        acc["g2"].append(_pad_to(blk["g2"], (1, E_pad)))
        acc["be2"].append(_pad_to(blk["beta2"], (1, E_pad)))
    prepared["blocks"] = {k: jnp.stack(v) for k, v in acc.items()}
    return prepared


# --------------------------------------------------------------------------
if __name__ == "__main__":
    img_size, patch_size, in_channel = 16, 4, 4
    embedding_size, q_k_size, v_size, f_size = 32, 16, 16, 64
    head, nblocks, class_num = 2, 2, 10
    B = 2
    num_patches = (img_size // patch_size) ** 2

    key = jax.random.PRNGKey(0)
    kx, kp = jax.random.split(key)
    x = jax.random.normal(kx, (B, in_channel, img_size, img_size), jnp.float32)
    params = init_params(kp, in_channel=in_channel, patch_size=patch_size,
                         embedding_size=embedding_size, q_k_size=q_k_size,
                         v_size=v_size, f_size=f_size, head=head,
                         nblocks=nblocks, class_num=class_num,
                         num_patches=num_patches)
    prepared = prepare_params(params, head=head, q_k_size=q_k_size, v_size=v_size)

    fwd = jax.jit(functools.partial(vision_transformer_forward,
                                    patch_size=patch_size, head=head,
                                    q_k_size=q_k_size, v_size=v_size,
                                    embedding_size=embedding_size,
                                    num_tokens=num_patches + 1,
                                    class_num=class_num))
    out = jax.block_until_ready(fwd(x, prepared))

    assert out.shape == (B, class_num)
    assert bool(jnp.all(jnp.isfinite(out)))
    assert bool(jnp.allclose(jnp.sum(out, axis=1), 1.0, atol=1e-5))  # softmax rows
    print("KERNEL_OK")
</pallas_src>

<mosaic_0001>
module attributes {stable_mosaic.version = 11 : i64} {
  func.func @patch_embed_kernel(%arg0: i32, %arg1: memref<32x128xbf16, #tpu.memory_space<vmem>>, %arg2: memref<128x128xbf16, #tpu.memory_space<vmem>>, %arg3: memref<1x128xf32, #tpu.memory_space<vmem>>, %arg4: memref<32x128xf32, #tpu.memory_space<vmem>>) attributes {dimension_semantics = [#tpu.dimension_semantics<parallel>], iteration_bounds = array<i64: 1>, scalar_prefetch = 0 : i64, scratch_operands = 0 : i64, tpu.core_type = #tpu.core_type<tc>, window_params = [{transform_indices = @transform_0, window_bounds = array<i64: 32, 128>}, {pipeline_mode = #tpu.pipeline_mode<synchronous>, transform_indices = @transform_1, window_bounds = array<i64: 128, 128>}, {pipeline_mode = #tpu.pipeline_mode<synchronous>, transform_indices = @transform_2, window_bounds = array<i64: 1, 128>}, {transform_indices = @transform_3, window_bounds = array<i64: 32, 128>}]} {
    %c0 = arith.constant 0 : index
    %c0_0 = arith.constant 0 : index
    %0 = vector.load %arg1[%c0, %c0_0] : memref<32x128xbf16, #tpu.memory_space<vmem>>, vector<32x128xbf16>
    %c0_1 = arith.constant 0 : index
    %c0_2 = arith.constant 0 : index
    %1 = vector.load %arg2[%c0_1, %c0_2] : memref<128x128xbf16, #tpu.memory_space<vmem>>, vector<128x128xbf16>
    %cst = arith.constant dense<0.000000e+00> : vector<32x128xf32>
    %2 = tpu.matmul %0, %1, %cst {dimension_numbers = #tpu.dot_dimension_numbers<[1], [0], [0], [1], [0, 0, 1, 1], [], []>} : vector<32x128xbf16>, vector<128x128xbf16>, vector<32x128xf32> -> vector<32x128xf32>
    %c0_3 = arith.constant 0 : index
    %c0_4 = arith.constant 0 : index
    %3 = vector.load %arg3[%c0_3, %c0_4] : memref<1x128xf32, #tpu.memory_space<vmem>>, vector<1x128xf32>
    %4 = vector.broadcast %3 : vector<1x128xf32> to vector<32x128xf32>
    %5 = arith.addf %2, %4 : vector<32x128xf32>
    %c0_5 = arith.constant 0 : index
    %c0_6 = arith.constant 0 : index
    %6 = vector.load %arg4[%c0_5, %c0_6] : memref<32x128xf32, #tpu.memory_space<vmem>>, vector<32x128xf32>
    tpu.vector_store %arg4[%c0_5, %c0_6], %5 {strides = array<i32>} : memref<32x128xf32, #tpu.memory_space<vmem>>, vector<32x128xf32>,
    return
  }
  func.func @transform_0(%arg0: i32) -> (i32, i32) {
    %c0_i32 = arith.constant 0 : i32
    %c0_i32_0 = arith.constant 0 : i32
    return %arg0, %c0_i32 : i32, i32
  }
  func.func @transform_1(%arg0: i32) -> (i32, i32) {
    %c0_i32 = arith.constant 0 : i32
    %c0_i32_0 = arith.constant 0 : i32
    %c0_i32_1 = arith.constant 0 : i32
    return %c0_i32, %c0_i32_0 : i32, i32
  }
  func.func @transform_2(%arg0: i32) -> (i32, i32) {
    %c0_i32 = arith.constant 0 : i32
    %c0_i32_0 = arith.constant 0 : i32
    %c0_i32_1 = arith.constant 0 : i32
    return %c0_i32, %c0_i32_0 : i32, i32
  }
  func.func @transform_3(%arg0: i32) -> (i32, i32) {
    %c0_i32 = arith.constant 0 : i32
    %c0_i32_0 = arith.constant 0 : i32
    return %arg0, %c0_i32 : i32, i32
  }
}

module attributes {stable_mosaic.version = 11 : i64} {
  func.func @encoder_stack_kernel(%arg0: i32, %arg1: i32, %arg2: memref<2x32x128xf32, #tpu.memory_space<vmem>>, %arg3: memref<1x128x768xbf16, #tpu.memory_space<vmem>>, %arg4: memref<1x1x768xf32, #tpu.memory_space<vmem>>, %arg5: memref<1x256x128xbf16, #tpu.memory_space<vmem>>, %arg6: memref<1x1x128xf32, #tpu.memory_space<vmem>>, %arg7: memref<1x1x128xf32, #tpu.memory_space<vmem>>, %arg8: memref<1x1x128xf32, #tpu.memory_space<vmem>>, %arg9: memref<1x128x128xbf16, #tpu.memory_space<vmem>>, %arg10: memref<1x1x128xf32, #tpu.memory_space<vmem>>, %arg11: memref<1x128x128xbf16, #tpu.memory_space<vmem>>, %arg12: memref<1x1x128xf32, #tpu.memory_space<vmem>>, %arg13: memref<1x1x128xf32, #tpu.memory_space<vmem>>, %arg14: memref<1x1x128xf32, #tpu.memory_space<vmem>>, %arg15: memref<128x128xbf16, #tpu.memory_space<vmem>>, %arg16: memref<1x128xf32, #tpu.memory_space<vmem>>, %arg17: memref<2x128xf32, #tpu.memory_space<vmem>>, %arg18: memref<2x32x128xf32, #tpu.memory_space<vmem>>) attributes {dimension_semantics = [#tpu.dimension_semantics<parallel>, #tpu.dimension_semantics<arbitrary>], iteration_bounds = array<i64: 1, 2>, scalar_prefetch = 0 : i64, scratch_operands = 1 : i64, tpu.core_type = #tpu.core_type<tc>, window_params = [{transform_indices = @transform_0, window_bounds = array<i64: 2, 32, 128>}, {transform_indices = @transform_1, window_bounds = array<i64: 1, 128, 768>}, {transform_indices = @transform_2, window_bounds = array<i64: 1, 1, 768>}, {transform_indices = @transform_3, window_bounds = array<i64: 1, 256, 128>}, {transform_indices = @transform_4, window_bounds = array<i64: 1, 1, 128>}, {transform_indices = @transform_5, window_bounds = array<i64: 1, 1, 128>}, {transform_indices = @transform_6, window_bounds = array<i64: 1, 1, 128>}, {transform_indices = @transform_7, window_bounds = array<i64: 1, 128, 128>}, {transform_indices = @transform_8, window_bounds = array<i64: 1, 1, 128>}, {transform_indices = @transform_9, window_bounds = array<i64: 1, 128, 128>}, {transform_indices = @transform_10, window_bounds = array<i64: 1, 1, 128>}, {transform_indices = @transform_11, window_bounds = array<i64: 1, 1, 128>}, {transform_indices = @transform_12, window_bounds = array<i64: 1, 1, 128>}, {pipeline_mode = #tpu.pipeline_mode<synchronous>, transform_indices = @transform_13, window_bounds = array<i64: 128, 128>}, {pipeline_mode = #tpu.pipeline_mode<synchronous>, transform_indices = @transform_14, window_bounds = array<i64: 1, 128>}, {transform_indices = @transform_15, window_bounds = array<i64: 2, 128>}]} {
    %c0_i32 = arith.constant 0 : i32
    %0 = arith.cmpi eq, %arg1, %c0_i32 : i32
    %1 = arith.extui %0 : i1 to i32
    %c0_i32_0 = arith.constant 0 : i32
    %2 = arith.cmpi ne, %1, %c0_i32_0 : i32
    scf.if %2 {
      %c0_71 = arith.constant 0 : index
      %c0_72 = arith.constant 0 : index
      %c0_73 = arith.constant 0 : index
      %165 = vector.load %arg2[%c0_71, %c0_72, %c0_73] : memref<2x32x128xf32, #tpu.memory_space<vmem>>, vector<2x32x128xf32>
      %c0_74 = arith.constant 0 : index
      %c0_75 = arith.constant 0 : index
      %c0_76 = arith.constant 0 : index
      %166 = vector.load %arg18[%c0_74, %c0_75, %c0_76] : memref<2x32x128xf32, #tpu.memory_space<vmem>>, vector<2x32x128xf32>
      tpu.vector_store %arg18[%c0_74, %c0_75, %c0_76], %165 {strides = array<i32>} : memref<2x32x128xf32, #tpu.memory_space<vmem>>, vector<2x32x128xf32>,
    } else {
    }
    %3 = tpu.iota {dimensions = array<i32: 1>} : vector<1x128xi32>
    %c32_i32 = arith.constant 32 : i32
    %4 = vector.broadcast %c32_i32 : i32 to vector<1x128xi32>
    %5 = arith.cmpi slt, %3, %4 : vector<1x128xi32>
    %6 = tpu.iota {dimensions = array<i32: 1>} : vector<32x32xi32>
    %c17_i32 = arith.constant 17 : i32
    %7 = vector.broadcast %c17_i32 : i32 to vector<32x32xi32>
    %8 = arith.cmpi slt, %6, %7 : vector<32x32xi32>
    %c0 = arith.constant 0 : index
    %c0_1 = arith.constant 0 : index
    %c0_2 = arith.constant 0 : index
    %9 = vector.load %arg18[%c0, %c0_1, %c0_2] : memref<2x32x128xf32, #tpu.memory_space<vmem>>, vector<2x32x128xf32>
    %10 = vector.shape_cast %9 : vector<2x32x128xf32> to vector<64x128xf32>
    %11 = arith.truncf %10 : vector<64x128xf32> to vector<64x128xbf16>
    %c0_3 = arith.constant 0 : index
    %c0_4 = arith.constant 0 : index
    %c0_5 = arith.constant 0 : index
    %12 = vector.load %arg3[%c0_3, %c0_4, %c0_5] : memref<1x128x768xbf16, #tpu.memory_space<vmem>>, vector<1x128x768xbf16>
    %13 = vector.shape_cast %12 : vector<1x128x768xbf16> to vector<128x768xbf16>
    %cst = arith.constant dense<0.000000e+00> : vector<64x768xf32>
    %14 = tpu.matmul %11, %13, %cst {dimension_numbers = #tpu.dot_dimension_numbers<[1], [0], [0], [1], [0, 0, 1, 1], [], []>} : vector<64x128xbf16>, vector<128x768xbf16>, vector<64x768xf32> -> vector<64x768xf32>
    %c0_6 = arith.constant 0 : index
    %c0_7 = arith.constant 0 : index
    %c0_8 = arith.constant 0 : index
    %15 = vector.load %arg4[%c0_6, %c0_7, %c0_8] : memref<1x1x768xf32, #tpu.memory_space<vmem>>, vector<1x1x768xf32>
    %16 = vector.shape_cast %15 : vector<1x1x768xf32> to vector<1x768xf32>
    %17 = vector.broadcast %16 : vector<1x768xf32> to vector<64x768xf32>
    %18 = arith.addf %14, %17 : vector<64x768xf32>
    %19 = vector.shape_cast %18 : vector<64x768xf32> to vector<2x32x768xf32>
    %20 = vector.extract_strided_slice %19 {offsets = [0, 0, 0], sizes = [2, 32, 128], strides = [1, 1, 1]} : vector<2x32x768xf32> to vector<2x32x128xf32>
    %21 = arith.truncf %20 : vector<2x32x128xf32> to vector<2x32x128xbf16>
    %22 = vector.extract_strided_slice %19 {offsets = [0, 0, 256], sizes = [2, 32, 128], strides = [1, 1, 1]} : vector<2x32x768xf32> to vector<2x32x128xf32>
    %23 = arith.truncf %22 : vector<2x32x128xf32> to vector<2x32x128xbf16>
    %24 = vector.extract_strided_slice %19 {offsets = [0, 0, 512], sizes = [2, 32, 128], strides = [1, 1, 1]} : vector<2x32x768xf32> to vector<2x32x128xf32>
    %25 = arith.truncf %24 : vector<2x32x128xf32> to vector<2x32x128xbf16>
    "tpu.trace_start"() <{level = 10 : i32, message = "bqd,bkd->bqk"}> : () -> ()
    %cst_9 = arith.constant dense<0.000000e+00> : vector<2x32x32xf32>
    %26 = tpu.matmul %21, %23, %cst_9 {dimension_numbers = #tpu.dot_dimension_numbers<[2], [2], [1], [1], [0, 0, 0, 1, 1, 1], [0], [0]>} : vector<2x32x128xbf16>, vector<2x32x128xbf16>, vector<2x32x32xf32> -> vector<2x32x32xf32>
    %cst_10 = arith.constant -1.000000e+30 : f32
    "tpu.trace_stop"() : () -> ()
    %27 = vector.shape_cast %8 : vector<32x32xi1> to vector<1x32x32xi1>
    %28 = vector.broadcast %27 : vector<1x32x32xi1> to vector<2x32x32xi1>
    %29 = vector.broadcast %cst_10 : f32 to vector<2x32x32xf32>
    %30 = arith.select %28, %26, %29 : vector<2x32x32xi1>, vector<2x32x32xf32>
    %cst_11 = arith.constant dense<0xFF800000> : vector<2x32xf32>
    %31 = vector.multi_reduction <maximumf>, %30, %cst_11 [2] : vector<2x32x32xf32> to vector<2x32xf32>
    %32 = vector.shape_cast %31 : vector<2x32xf32> to vector<2x32x1xf32>
    %33 = vector.broadcast %32 : vector<2x32x1xf32> to vector<2x32x32xf32>
    %34 = arith.subf %30, %33 : vector<2x32x32xf32>
    %35 = math.exp %34 : vector<2x32x32xf32>
    %cst_12 = arith.constant dense<0.000000e+00> : vector<2x32xf32>
    %36 = vector.multi_reduction <add>, %35, %cst_12 [2] : vector<2x32x32xf32> to vector<2x32xf32>
    %37 = vector.shape_cast %36 : vector<2x32xf32> to vector<2x32x1xf32>
    %38 = tpu.reciprocal %37 {approx = true} : vector<2x32x1xf32> -> vector<2x32x1xf32>
    %39 = vector.broadcast %38 : vector<2x32x1xf32> to vector<2x32x32xf32>
    %40 = arith.mulf %35, %39 : vector<2x32x32xf32>
    %41 = arith.truncf %40 : vector<2x32x32xf32> to vector<2x32x32xbf16>
    "tpu.trace_start"() <{level = 10 : i32, message = "bqk,bkd->bqd"}> : () -> ()
    %cst_13 = arith.constant dense<0.000000e+00> : vector<2x32x128xf32>
    %42 = tpu.matmul %41, %25, %cst_13 {dimension_numbers = #tpu.dot_dimension_numbers<[2], [1], [1], [2], [0, 0, 0, 1, 1, 2], [0], [0]>} : vector<2x32x32xbf16>, vector<2x32x128xbf16>, vector<2x32x128xf32> -> vector<2x32x128xf32>
    "tpu.trace_stop"() : () -> ()
    %43 = vector.extract_strided_slice %19 {offsets = [0, 0, 128], sizes = [2, 32, 128], strides = [1, 1, 1]} : vector<2x32x768xf32> to vector<2x32x128xf32>
    %44 = arith.truncf %43 : vector<2x32x128xf32> to vector<2x32x128xbf16>
    %45 = vector.extract_strided_slice %19 {offsets = [0, 0, 384], sizes = [2, 32, 128], strides = [1, 1, 1]} : vector<2x32x768xf32> to vector<2x32x128xf32>
    %46 = arith.truncf %45 : vector<2x32x128xf32> to vector<2x32x128xbf16>
    %47 = vector.extract_strided_slice %19 {offsets = [0, 0, 640], sizes = [2, 32, 128], strides = [1, 1, 1]} : vector<2x32x768xf32> to vector<2x32x128xf32>
    %48 = arith.truncf %47 : vector<2x32x128xf32> to vector<2x32x128xbf16>
    "tpu.trace_start"() <{level = 10 : i32, message = "bqd,bkd->bqk"}> : () -> ()
    %cst_14 = arith.constant dense<0.000000e+00> : vector<2x32x32xf32>
    %49 = tpu.matmul %44, %46, %cst_14 {dimension_numbers = #tpu.dot_dimension_numbers<[2], [2], [1], [1], [0, 0, 0, 1, 1, 1], [0], [0]>} : vector<2x32x128xbf16>, vector<2x32x128xbf16>, vector<2x32x32xf32> -> vector<2x32x32xf32>
    %cst_15 = arith.constant -1.000000e+30 : f32
    "tpu.trace_stop"() : () -> ()
    %50 = vector.shape_cast %8 : vector<32x32xi1> to vector<1x32x32xi1>
    %51 = vector.broadcast %50 : vector<1x32x32xi1> to vector<2x32x32xi1>
    %52 = vector.broadcast %cst_15 : f32 to vector<2x32x32xf32>
    %53 = arith.select %51, %49, %52 : vector<2x32x32xi1>, vector<2x32x32xf32>
    %cst_16 = arith.constant dense<0xFF800000> : vector<2x32xf32>
    %54 = vector.multi_reduction <maximumf>, %53, %cst_16 [2] : vector<2x32x32xf32> to vector<2x32xf32>
    %55 = vector.shape_cast %54 : vector<2x32xf32> to vector<2x32x1xf32>
    %56 = vector.broadcast %55 : vector<2x32x1xf32> to vector<2x32x32xf32>
    %57 = arith.subf %53, %56 : vector<2x32x32xf32>
    %58 = math.exp %57 : vector<2x32x32xf32>
    %cst_17 = arith.constant dense<0.000000e+00> : vector<2x32xf32>
    %59 = vector.multi_reduction <add>, %58, %cst_17 [2] : vector<2x32x32xf32> to vector<2x32xf32>
    %60 = vector.shape_cast %59 : vector<2x32xf32> to vector<2x32x1xf32>
    %61 = tpu.reciprocal %60 {approx = true} : vector<2x32x1xf32> -> vector<2x32x1xf32>
    %62 = vector.broadcast %61 : vector<2x32x1xf32> to vector<2x32x32xf32>
    %63 = arith.mulf %58, %62 : vector<2x32x32xf32>
    %64 = arith.truncf %63 : vector<2x32x32xf32> to vector<2x32x32xbf16>
    "tpu.trace_start"() <{level = 10 : i32, message = "bqk,bkd->bqd"}> : () -> ()
    %cst_18 = arith.constant dense<0.000000e+00> : vector<2x32x128xf32>
    %65 = tpu.matmul %64, %48, %cst_18 {dimension_numbers = #tpu.dot_dimension_numbers<[2], [1], [1], [2], [0, 0, 0, 1, 1, 2], [0], [0]>} : vector<2x32x32xbf16>, vector<2x32x128xbf16>, vector<2x32x128xf32> -> vector<2x32x128xf32>
    "tpu.trace_stop"() : () -> ()
    %66 = tpu.concatenate %42, %65 in 2 : vector<2x32x128xf32>, vector<2x32x128xf32> -> vector<2x32x256xf32>
    %67 = vector.shape_cast %66 : vector<2x32x256xf32> to vector<64x256xf32>
    %68 = arith.truncf %67 : vector<64x256xf32> to vector<64x256xbf16>
    %c0_19 = arith.constant 0 : index
    %c0_20 = arith.constant 0 : index
    %c0_21 = arith.constant 0 : index
    %69 = vector.load %arg5[%c0_19, %c0_20, %c0_21] : memref<1x256x128xbf16, #tpu.memory_space<vmem>>, vector<1x256x128xbf16>
    %70 = vector.shape_cast %69 : vector<1x256x128xbf16> to vector<256x128xbf16>
    %cst_22 = arith.constant dense<0.000000e+00> : vector<64x128xf32>
    %71 = tpu.matmul %68, %70, %cst_22 {dimension_numbers = #tpu.dot_dimension_numbers<[1], [0], [0], [1], [0, 0, 1, 1], [], []>} : vector<64x256xbf16>, vector<256x128xbf16>, vector<64x128xf32> -> vector<64x128xf32>
    %c0_23 = arith.constant 0 : index
    %c0_24 = arith.constant 0 : index
    %c0_25 = arith.constant 0 : index
    %72 = vector.load %arg6[%c0_23, %c0_24, %c0_25] : memref<1x1x128xf32, #tpu.memory_space<vmem>>, vector<1x1x128xf32>
    %73 = vector.shape_cast %72 : vector<1x1x128xf32> to vector<1x128xf32>
    %74 = vector.broadcast %73 : vector<1x128xf32> to vector<64x128xf32>
    %75 = arith.addf %71, %74 : vector<64x128xf32>
    %76 = arith.addf %75, %10 : vector<64x128xf32>
    %c0_26 = arith.constant 0 : index
    %c0_27 = arith.constant 0 : index
    %c0_28 = arith.constant 0 : index
    %77 = vector.load %arg7[%c0_26, %c0_27, %c0_28] : memref<1x1x128xf32, #tpu.memory_space<vmem>>, vector<1x1x128xf32>
    %78 = vector.shape_cast %77 : vector<1x1x128xf32> to vector<1x128xf32>
    %c0_29 = arith.constant 0 : index
    %c0_30 = arith.constant 0 : index
    %c0_31 = arith.constant 0 : index
    %79 = vector.load %arg8[%c0_29, %c0_30, %c0_31] : memref<1x1x128xf32, #tpu.memory_space<vmem>>, vector<1x1x128xf32>
    %80 = vector.shape_cast %79 : vector<1x1x128xf32> to vector<1x128xf32>
    %cst_32 = arith.constant 0.000000e+00 : f32
    %81 = vector.shape_cast %5 : vector<1x128xi1> to vector<1x128xi1>
    %82 = vector.broadcast %81 : vector<1x128xi1> to vector<64x128xi1>
    %83 = vector.broadcast %cst_32 : f32 to vector<64x128xf32>
    %84 = arith.select %82, %76, %83 : vector<64x128xi1>, vector<64x128xf32>
    %cst_33 = arith.constant dense<0.000000e+00> : vector<64xf32>
    %85 = vector.multi_reduction <add>, %84, %cst_33 [1] : vector<64x128xf32> to vector<64xf32>
    %86 = vector.shape_cast %85 : vector<64xf32> to vector<64x1xf32>
    %cst_34 = arith.constant 3.200000e+01 : f32
    %87 = vector.broadcast %cst_34 : f32 to vector<64x1xf32>
    %88 = arith.divf %86, %87 : vector<64x1xf32>
    %89 = vector.broadcast %88 : vector<64x1xf32> to vector<64x128xf32>
    %90 = arith.subf %76, %89 : vector<64x128xf32>
    %cst_35 = arith.constant 0.000000e+00 : f32
    %91 = vector.shape_cast %5 : vector<1x128xi1> to vector<1x128xi1>
    %92 = vector.broadcast %91 : vector<1x128xi1> to vector<64x128xi1>
    %93 = vector.broadcast %cst_35 : f32 to vector<64x128xf32>
    %94 = arith.select %92, %90, %93 : vector<64x128xi1>, vector<64x128xf32>
    %95 = arith.mulf %94, %94 : vector<64x128xf32>
    %cst_36 = arith.constant dense<0.000000e+00> : vector<64xf32>
    %96 = vector.multi_reduction <add>, %95, %cst_36 [1] : vector<64x128xf32> to vector<64xf32>
    %97 = vector.shape_cast %96 : vector<64xf32> to vector<64x1xf32>
    %cst_37 = arith.constant 3.200000e+01 : f32
    %98 = vector.broadcast %cst_37 : f32 to vector<64x1xf32>
    %99 = arith.divf %97, %98 : vector<64x1xf32>
    %cst_38 = arith.constant 9.99999974E-6 : f32
    %100 = vector.broadcast %cst_38 : f32 to vector<64x1xf32>
    %101 = arith.addf %99, %100 : vector<64x1xf32>
    %102 = math.rsqrt %101 : vector<64x1xf32>
    %103 = vector.broadcast %102 : vector<64x1xf32> to vector<64x128xf32>
    %104 = arith.mulf %90, %103 : vector<64x128xf32>
    %105 = vector.broadcast %78 : vector<1x128xf32> to vector<64x128xf32>
    %106 = arith.mulf %104, %105 : vector<64x128xf32>
    %107 = vector.broadcast %80 : vector<1x128xf32> to vector<64x128xf32>
    %108 = arith.addf %106, %107 : vector<64x128xf32>
    %109 = arith.truncf %108 : vector<64x128xf32> to vector<64x128xbf16>
    %c0_39 = arith.constant 0 : index
    %c0_40 = arith.constant 0 : index
    %c0_41 = arith.constant 0 : index
    %110 = vector.load %arg9[%c0_39, %c0_40, %c0_41] : memref<1x128x128xbf16, #tpu.memory_space<vmem>>, vector<1x128x128xbf16>
    %111 = vector.shape_cast %110 : vector<1x128x128xbf16> to vector<128x128xbf16>
    %cst_42 = arith.constant dense<0.000000e+00> : vector<64x128xf32>
    %112 = tpu.matmul %109, %111, %cst_42 {dimension_numbers = #tpu.dot_dimension_numbers<[1], [0], [0], [1], [0, 0, 1, 1], [], []>} : vector<64x128xbf16>, vector<128x128xbf16>, vector<64x128xf32> -> vector<64x128xf32>
    %c0_43 = arith.constant 0 : index
    %c0_44 = arith.constant 0 : index
    %c0_45 = arith.constant 0 : index
    %113 = vector.load %arg10[%c0_43, %c0_44, %c0_45] : memref<1x1x128xf32, #tpu.memory_space<vmem>>, vector<1x1x128xf32>
    %114 = vector.shape_cast %113 : vector<1x1x128xf32> to vector<1x128xf32>
    %115 = vector.broadcast %114 : vector<1x128xf32> to vector<64x128xf32>
    %116 = arith.addf %112, %115 : vector<64x128xf32>
    %cst_46 = arith.constant 0.000000e+00 : f32
    %117 = vector.broadcast %cst_46 : f32 to vector<64x128xf32>
    %118 = arith.maximumf %116, %117 : vector<64x128xf32>
    %119 = arith.truncf %118 : vector<64x128xf32> to vector<64x128xbf16>
    %c0_47 = arith.constant 0 : index
    %c0_48 = arith.constant 0 : index
    %c0_49 = arith.constant 0 : index
    %120 = vector.load %arg11[%c0_47, %c0_48, %c0_49] : memref<1x128x128xbf16, #tpu.memory_space<vmem>>, vector<1x128x128xbf16>
    %121 = vector.shape_cast %120 : vector<1x128x128xbf16> to vector<128x128xbf16>
    %cst_50 = arith.constant dense<0.000000e+00> : vector<64x128xf32>
    %122 = tpu.matmul %119, %121, %cst_50 {dimension_numbers = #tpu.dot_dimension_numbers<[1], [0], [0], [1], [0, 0, 1, 1], [], []>} : vector<64x128xbf16>, vector<128x128xbf16>, vector<64x128xf32> -> vector<64x128xf32>
    %c0_51 = arith.constant 0 : index
    %c0_52 = arith.constant 0 : index
    %c0_53 = arith.constant 0 : index
    %123 = vector.load %arg12[%c0_51, %c0_52, %c0_53] : memref<1x1x128xf32, #tpu.memory_space<vmem>>, vector<1x1x128xf32>
    %124 = vector.shape_cast %123 : vector<1x1x128xf32> to vector<1x128xf32>
    %125 = vector.broadcast %124 : vector<1x128xf32> to vector<64x128xf32>
    %126 = arith.addf %122, %125 : vector<64x128xf32>
    %127 = arith.addf %108, %126 : vector<64x128xf32>
    %c0_54 = arith.constant 0 : index
    %c0_55 = arith.constant 0 : index
    %c0_56 = arith.constant 0 : index
    %128 = vector.load %arg13[%c0_54, %c0_55, %c0_56] : memref<1x1x128xf32, #tpu.memory_space<vmem>>, vector<1x1x128xf32>
    %129 = vector.shape_cast %128 : vector<1x1x128xf32> to vector<1x128xf32>
    %c0_57 = arith.constant 0 : index
    %c0_58 = arith.constant 0 : index
    %c0_59 = arith.constant 0 : index
    %130 = vector.load %arg14[%c0_57, %c0_58, %c0_59] : memref<1x1x128xf32, #tpu.memory_space<vmem>>, vector<1x1x128xf32>
    %131 = vector.shape_cast %130 : vector<1x1x128xf32> to vector<1x128xf32>
    %cst_60 = arith.constant 0.000000e+00 : f32
    %132 = vector.shape_cast %5 : vector<1x128xi1> to vector<1x128xi1>
    %133 = vector.broadcast %132 : vector<1x128xi1> to vector<64x128xi1>
    %134 = vector.broadcast %cst_60 : f32 to vector<64x128xf32>
    %135 = arith.select %133, %127, %134 : vector<64x128xi1>, vector<64x128xf32>
    %cst_61 = arith.constant dense<0.000000e+00> : vector<64xf32>
    %136 = vector.multi_reduction <add>, %135, %cst_61 [1] : vector<64x128xf32> to vector<64xf32>
    %137 = vector.shape_cast %136 : vector<64xf32> to vector<64x1xf32>
    %cst_62 = arith.constant 3.200000e+01 : f32
    %138 = vector.broadcast %cst_62 : f32 to vector<64x1xf32>
    %139 = arith.divf %137, %138 : vector<64x1xf32>
    %140 = vector.broadcast %139 : vector<64x1xf32> to vector<64x128xf32>
    %141 = arith.subf %127, %140 : vector<64x128xf32>
    %cst_63 = arith.constant 0.000000e+00 : f32
    %142 = vector.shape_cast %5 : vector<1x128xi1> to vector<1x128xi1>
    %143 = vector.broadcast %142 : vector<1x128xi1> to vector<64x128xi1>
    %144 = vector.broadcast %cst_63 : f32 to vector<64x128xf32>
    %145 = arith.select %143, %141, %144 : vector<64x128xi1>, vector<64x128xf32>
    %146 = arith.mulf %145, %145 : vector<64x128xf32>
    %cst_64 = arith.constant dense<0.000000e+00> : vector<64xf32>
    %147 = vector.multi_reduction <add>, %146, %cst_64 [1] : vector<64x128xf32> to vector<64xf32>
    %148 = vector.shape_cast %147 : vector<64xf32> to vector<64x1xf32>
    %cst_65 = arith.constant 3.200000e+01 : f32
    %149 = vector.broadcast %cst_65 : f32 to vector<64x1xf32>
    %150 = arith.divf %148, %149 : vector<64x1xf32>
    %cst_66 = arith.constant 9.99999974E-6 : f32
    %151 = vector.broadcast %cst_66 : f32 to vector<64x1xf32>
    %152 = arith.addf %150, %151 : vector<64x1xf32>
    %153 = math.rsqrt %152 : vector<64x1xf32>
    %154 = vector.broadcast %153 : vector<64x1xf32> to vector<64x128xf32>
    %155 = arith.mulf %141, %154 : vector<64x128xf32>
    %156 = vector.broadcast %129 : vector<1x128xf32> to vector<64x128xf32>
    %157 = arith.mulf %155, %156 : vector<64x128xf32>
    %158 = vector.broadcast %131 : vector<1x128xf32> to vector<64x128xf32>
    %159 = arith.addf %157, %158 : vector<64x128xf32>
    %160 = vector.shape_cast %159 : vector<64x128xf32> to vector<2x32x128xf32>
    %c0_67 = arith.constant 0 : index
    %c0_68 = arith.constant 0 : index
    %c0_69 = arith.constant 0 : index
    %161 = vector.load %arg18[%c0_67, %c0_68, %c0_69] : memref<2x32x128xf32, #tpu.memory_space<vmem>>, vector<2x32x128xf32>
    tpu.vector_store %arg18[%c0_67, %c0_68, %c0_69], %160 {strides = array<i32>} : memref<2x32x128xf32, #tpu.memory_space<vmem>>, vector<2x32x128xf32>,
    %c1_i32 = arith.constant 1 : i32
    %162 = arith.cmpi eq, %arg1, %c1_i32 : i32
    %163 = arith.extui %162 : i1 to i32
    %c0_i32_70 = arith.constant 0 : i32
    %164 = arith.cmpi ne, %163, %c0_i32_70 : i32
    scf.if %164 {
      %c0_71 = arith.constant 0 : index
      %c0_72 = arith.constant 0 : index
      %c0_73 = arith.constant 0 : index
      %165 = vector.load %arg18[%c0_71, %c0_72, %c0_73] : memref<2x32x128xf32, #tpu.memory_space<vmem>>, vector<2x1x128xf32>
      %166 = vector.shape_cast %165 : vector<2x1x128xf32> to vector<2x128xf32>
      %167 = arith.truncf %166 : vector<2x128xf32> to vector<2x128xbf16>
      %c0_74 = arith.constant 0 : index
      %c0_75 = arith.constant 0 : index
      %168 = vector.load %arg15[%c0_74, %c0_75] : memref<128x128xbf16, #tpu.memory_space<vmem>>, vector<128x128xbf16>
      %cst_76 = arith.constant dense<0.000000e+00> : vector<2x128xf32>
      %169 = tpu.matmul %167, %168, %cst_76 {dimension_numbers = #tpu.dot_dimension_numbers<[1], [0], [0], [1], [0, 0, 1, 1], [], []>} : vector<2x128xbf16>, vector<128x128xbf16>, vector<2x128xf32> -> vector<2x128xf32>
      %c0_77 = arith.constant 0 : index
      %c0_78 = arith.constant 0 : index
      %170 = vector.load %arg16[%c0_77, %c0_78] : memref<1x128xf32, #tpu.memory_space<vmem>>, vector<1x128xf32>
      %171 = vector.broadcast %170 : vector<1x128xf32> to vector<2x128xf32>
      %172 = arith.addf %169, %171 : vector<2x128xf32>
      %173 = tpu.iota {dimensions = array<i32: 1>} : vector<2x128xi32>
      %c10_i32 = arith.constant 10 : i32
      %174 = vector.broadcast %c10_i32 : i32 to vector<2x128xi32>
      %175 = arith.cmpi slt, %173, %174 : vector<2x128xi32>
      %cst_79 = arith.constant -1.000000e+30 : f32
      %176 = vector.broadcast %cst_79 : f32 to vector<2x128xf32>
      %177 = arith.select %175, %172, %176 : vector<2x128xi1>, vector<2x128xf32>
      %cst_80 = arith.constant dense<0xFF800000> : vector<2xf32>
      %178 = vector.multi_reduction <maximumf>, %177, %cst_80 [1] : vector<2x128xf32> to vector<2xf32>
      %179 = vector.shape_cast %178 : vector<2xf32> to vector<2x1xf32>
      %180 = vector.broadcast %179 : vector<2x1xf32> to vector<2x128xf32>
      %181 = arith.subf %177, %180 : vector<2x128xf32>
      %182 = math.exp %181 : vector<2x128xf32>
      %cst_81 = arith.constant dense<0.000000e+00> : vector<2xf32>
      %183 = vector.multi_reduction <add>, %182, %cst_81 [1] : vector<2x128xf32> to vector<2xf32>
      %184 = vector.shape_cast %183 : vector<2xf32> to vector<2x1xf32>
      %185 = vector.broadcast %184 : vector<2x1xf32> to vector<2x128xf32>
      %186 = arith.divf %182, %185 : vector<2x128xf32>
      %c0_82 = arith.constant 0 : index
      %c0_83 = arith.constant 0 : index
      %187 = vector.load %arg17[%c0_82, %c0_83] : memref<2x128xf32, #tpu.memory_space<vmem>>, vector<2x128xf32>
      tpu.vector_store %arg17[%c0_82, %c0_83], %186 {strides = array<i32>} : memref<2x128xf32, #tpu.memory_space<vmem>>, vector<2x128xf32>,
    } else {
    }
    return
  }
  func.func @transform_0(%arg0: i32, %arg1: i32) -> (i32, i32, i32) {
    %c0_i32 = arith.constant 0 : i32
    %c0_i32_0 = arith.constant 0 : i32
    %c0_i32_1 = arith.constant 0 : i32
    return %arg0, %c0_i32, %c0_i32_0 : i32, i32, i32
  }
  func.func @transform_1(%arg0: i32, %arg1: i32) -> (i32, i32, i32) {
    %c0_i32 = arith.constant 0 : i32
    %c0_i32_0 = arith.constant 0 : i32
    %c0_i32_1 = arith.constant 0 : i32
    return %arg1, %c0_i32, %c0_i32_0 : i32, i32, i32
  }
  func.func @transform_2(%arg0: i32, %arg1: i32) -> (i32, i32, i32) {
    %c0_i32 = arith.constant 0 : i32
    %c0_i32_0 = arith.constant 0 : i32
    %c0_i32_1 = arith.constant 0 : i32
    return %arg1, %c0_i32, %c0_i32_0 : i32, i32, i32
  }
  func.func @transform_3(%arg0: i32, %arg1: i32) -> (i32, i32, i32) {
    %c0_i32 = arith.constant 0 : i32
    %c0_i32_0 = arith.constant 0 : i32
    %c0_i32_1 = arith.constant 0 : i32
    return %arg1, %c0_i32, %c0_i32_0 : i32, i32, i32
  }
  func.func @transform_4(%arg0: i32, %arg1: i32) -> (i32, i32, i32) {
    %c0_i32 = arith.constant 0 : i32
    %c0_i32_0 = arith.constant 0 : i32
    %c0_i32_1 = arith.constant 0 : i32
    return %arg1, %c0_i32, %c0_i32_0 : i32, i32, i32
  }
  func.func @transform_5(%arg0: i32, %arg1: i32) -> (i32, i32, i32) {
    %c0_i32 = arith.constant 0 : i32
    %c0_i32_0 = arith.constant 0 : i32
    %c0_i32_1 = arith.constant 0 : i32
    return %arg1, %c0_i32, %c0_i32_0 : i32, i32, i32
  }
  func.func @transform_6(%arg0: i32, %arg1: i32) -> (i32, i32, i32) {
    %c0_i32 = arith.constant 0 : i32
    %c0_i32_0 = arith.constant 0 : i32
    %c0_i32_1 = arith.constant 0 : i32
    return %arg1, %c0_i32, %c0_i32_0 : i32, i32, i32
  }
  func.func @transform_7(%arg0: i32, %arg1: i32) -> (i32, i32, i32) {
    %c0_i32 = arith.constant 0 : i32
    %c0_i32_0 = arith.constant 0 : i32
    %c0_i32_1 = arith.constant 0 : i32
    return %arg1, %c0_i32, %c0_i32_0 : i32, i32, i32
  }
  func.func @transform_8(%arg0: i32, %arg1: i32) -> (i32, i32, i32) {
    %c0_i32 = arith.constant 0 : i32
    %c0_i32_0 = arith.constant 0 : i32
    %c0_i32_1 = arith.constant 0 : i32
    return %arg1, %c0_i32, %c0_i32_0 : i32, i32, i32
  }
  func.func @transform_9(%arg0: i32, %arg1: i32) -> (i32, i32, i32) {
    %c0_i32 = arith.constant 0 : i32
    %c0_i32_0 = arith.constant 0 : i32
    %c0_i32_1 = arith.constant 0 : i32
    return %arg1, %c0_i32, %c0_i32_0 : i32, i32, i32
  }
  func.func @transform_10(%arg0: i32, %arg1: i32) -> (i32, i32, i32) {
    %c0_i32 = arith.constant 0 : i32
    %c0_i32_0 = arith.constant 0 : i32
    %c0_i32_1 = arith.constant 0 : i32
    return %arg1, %c0_i32, %c0_i32_0 : i32, i32, i32
  }
  func.func @transform_11(%arg0: i32, %arg1: i32) -> (i32, i32, i32) {
    %c0_i32 = arith.constant 0 : i32
    %c0_i32_0 = arith.constant 0 : i32
    %c0_i32_1 = arith.constant 0 : i32
    return %arg1, %c0_i32, %c0_i32_0 : i32, i32, i32
  }
  func.func @transform_12(%arg0: i32, %arg1: i32) -> (i32, i32, i32) {
    %c0_i32 = arith.constant 0 : i32
    %c0_i32_0 = arith.constant 0 : i32
    %c0_i32_1 = arith.constant 0 : i32
    return %arg1, %c0_i32, %c0_i32_0 : i32, i32, i32
  }
  func.func @transform_13(%arg0: i32, %arg1: i32) -> (i32, i32) {
    %c0_i32 = arith.constant 0 : i32
    %c0_i32_0 = arith.constant 0 : i32
    %c0_i32_1 = arith.constant 0 : i32
    return %c0_i32, %c0_i32_0 : i32, i32
  }
  func.func @transform_14(%arg0: i32, %arg1: i32) -> (i32, i32) {
    %c0_i32 = arith.constant 0 : i32
    %c0_i32_0 = arith.constant 0 : i32
    %c0_i32_1 = arith.constant 0 : i32
    return %c0_i32, %c0_i32_0 : i32, i32
  }
  func.func @transform_15(%arg0: i32, %arg1: i32) -> (i32, i32) {
    %c0_i32 = arith.constant 0 : i32
    %c0_i32_0 = arith.constant 0 : i32
    return %arg0, %c0_i32 : i32, i32
  }
}

</mosaic_0001>

<llo_original>
// kernel: vision_transformer_forward.2
$region0: #{vision_transformer_forward.2}
  #allocation0 [shape = 'u32[]', space=smem, size = 0x4, offset = 0x4, fixed_abs, tag = 'smem constant byte address 0x4 - core index']
  #allocation1 [shape = 'u32[144,128]{1,0:T(1,128)}', space=vmem, size = 0x12000, scoped, tag = 'internal scratch']
  %s0 = inlined_call_operand.vmem [shape: bf16[32,128], index: 0, kind: input, shape index: {}]
  %s1 = inlined_call_operand.vmem [shape: bf16[128,128], index: 1, kind: input, shape index: {}]
  %s2 = inlined_call_operand.vmem [shape: f32[1,128], index: 2, kind: input, shape index: {}]
  %s3 = inlined_call_operand.vmem [shape: f32[32,128], index: 3, kind: output, shape index: {}]
  %s4 = sld [smem:[#allocation0]]
  $region22: #{vision_transformer_forward.2} parent=0
    _
  %s6 = ssub.s32 1, %s4
  %s7 = scalar_select 0, %s6, %s4
  // Predicated region
  $region2: #{vision_transformer_forward.2} parent=0 // pred_check
    _
  $region3: #{vision_transformer_forward.2} parent=0 // pred_check_branch
    %9 = sbr.rel (0) target = $region5
  $region4: #{vision_transformer_forward.2} parent=0 // pred_region
    _
  $region5: #{vision_transformer_forward.2} parent=0 // pred_fallthru
    _
  // Predicated region
  $region6: #{vision_transformer_forward.2} parent=0 // pred_check
    _
  $region7: #{vision_transformer_forward.2} parent=0 // pred_check_branch
    %11 = sbr.rel (0) target = $region9
  $region8: #{vision_transformer_forward.2} parent=0 // pred_region
    _
  $region9: #{vision_transformer_forward.2} parent=0 // pred_fallthru
    _
  // Predicated region
  $region10: #{vision_transformer_forward.2} parent=0 // pred_check
    _
  $region11: #{vision_transformer_forward.2} parent=0 // pred_check_branch
    %13 = sbr.rel (0) target = $region13
  $region12: #{vision_transformer_forward.2} parent=0 // pred_region
    _
  $region13: #{vision_transformer_forward.2} parent=0 // pred_fallthru
    _
  %v15 = vld [vmem:[%s0] sm:$0xf]
  %v16 = vld [vmem:[%s0 + $0x4] sm:$0xf]
  %v17 = vld [vmem:[%s0 + $0x8] sm:$0xf]
  %v18 = vld [vmem:[%s0 + $0xc] sm:$0xf]
  %v19 = vld [vmem:[%s1] sm:$0xf]
  %v20 = vld [vmem:[%s1 + $0x4] sm:$0xf]
  %v21 = vld [vmem:[%s1 + $0x8] sm:$0xf]
  %v22 = vld [vmem:[%s1 + $0xc] sm:$0xf]
  %v23 = vld [vmem:[%s1 + $0x10] sm:$0xf]
  %v24 = vld [vmem:[%s1 + $0x14] sm:$0xf]
  %v25 = vld [vmem:[%s1 + $0x18] sm:$0xf]
  %v26 = vld [vmem:[%s1 + $0x1c] sm:$0xf]
  %v27 = vld [vmem:[%s1 + $0x20] sm:$0xf]
  %v28 = vld [vmem:[%s1 + $0x24] sm:$0xf]
  %v29 = vld [vmem:[%s1 + $0x28] sm:$0xf]
  %v30 = vld [vmem:[%s1 + $0x2c] sm:$0xf]
  %v31 = vld [vmem:[%s1 + $0x30] sm:$0xf]
  %v32 = vld [vmem:[%s1 + $0x34] sm:$0xf]
  %v33 = vld [vmem:[%s1 + $0x38] sm:$0xf]
  %v34 = vld [vmem:[%s1 + $0x3c] sm:$0xf]
  %v35 = vld [vmem:[%s2] sm:$0x1]
  %v37 = vlaneseq
  %v38 = vshrl.u32 %v37, 7
  %v39 = vsub.s32 0, %v38
  %v40 = vrot.slane %v35, %v39
  %v46 = vunpack.c.l.b16 %v15
  %v47 = vunpack.c.l.b16 %v16
  %v48 = vunpack.c.l.b16 %v17
  %v49 = vunpack.c.l.b16 %v18
  %v50 = vpack.c.b16 %v47, %v46
  %v51 = vpack.c.b16 %v49, %v48
  %v70 = vunpack.c.l.b16 %v19
  %v71 = vunpack.c.l.b16 %v20
  %v72 = vunpack.c.l.b16 %v21
  %v73 = vunpack.c.l.b16 %v22
  %v74 = vunpack.c.l.b16 %v23
  %v75 = vunpack.c.l.b16 %v24
  %v76 = vunpack.c.l.b16 %v25
  %v77 = vunpack.c.l.b16 %v26
  %v78 = vunpack.c.l.b16 %v27
  %v79 = vunpack.c.l.b16 %v28
  %v80 = vunpack.c.l.b16 %v29
  %v81 = vunpack.c.l.b16 %v30
  %v82 = vunpack.c.l.b16 %v31
  %v83 = vunpack.c.l.b16 %v32
  %v84 = vunpack.c.l.b16 %v33
  %v85 = vunpack.c.l.b16 %v34
  %v86 = vpack.c.b16 %v71, %v70
  %v87 = vpack.c.b16 %v73, %v72
  %v88 = vpack.c.b16 %v75, %v74
  %v89 = vpack.c.b16 %v77, %v76
  %v90 = vpack.c.b16 %v79, %v78
  %v91 = vpack.c.b16 %v81, %v80
  %v92 = vpack.c.b16 %v83, %v82
  %v93 = vpack.c.b16 %v85, %v84
  %102 = vmatprep.subr.bf16.mxu0 0
  %103 = vmatpush1.bf16.msra.mxu0 %v93
  %104 = vmatprep.subr.bf16.mxu0 0
  %105 = vmatpush1.bf16.msra.mxu0 %v92
  %106 = vmatprep.subr.bf16.mxu0 0
  %107 = vmatpush1.bf16.msra.mxu0 %v91
  %108 = vmatprep.subr.bf16.mxu0 0
  %109 = vmatpush1.bf16.msra.mxu0 %v90
  %110 = vmatprep.subr.bf16.mxu0 0
  %111 = vmatpush1.bf16.msra.mxu0 %v89
  %112 = vmatprep.subr.bf16.mxu0 0
  %113 = vmatpush1.bf16.msra.mxu0 %v88
  %114 = vmatprep.subr.bf16.mxu0 0
  %115 = vmatpush1.bf16.msra.mxu0 %v87
  %116 = vmatprep.subr.bf16.mxu0 0
  %117 = vmatpush1.bf16.msra.mxu0 %v86
  %118 = vmatprep.subr.bf16.mxu0 0
  %119 = vmatpush2.bf16.msra.mxu0 0
  %120 = vmatprep.subr.bf16.mxu0 0
  %121 = vmatpush2.bf16.msra.mxu0 0
  %122 = vmatprep.subr.bf16.mxu0 0
  %123 = vmatpush2.bf16.msra.mxu0 0
  %124 = vmatprep.subr.bf16.mxu0 0
  %125 = vmatpush2.bf16.msra.mxu0 0
  %126 = vmatprep.subr.bf16.mxu0 0
  %127 = vmatpush2.bf16.msra.mxu0 0
  %128 = vmatprep.subr.bf16.mxu0 0
  %129 = vmatpush2.bf16.msra.mxu0 0
  %130 = vmatprep.subr.bf16.mxu0 0
  %131 = vmatpush2.bf16.msra.mxu0 0
  %132 = vmatprep.subr.bf16.mxu0 0
  %133 = vmatpush2.bf16.msra.mxu0 0
  %134 = vmatprep.mubr.bf16.mxu0 0
  %135 = vmatmul.mubr.bf16.gmra.mxu0 %v50
  %v136 = vpop.f32.mrf.mxu0
  %v137 = vadd.f32 %v40, %v136
  %v138 = vpop.f32.mrf.mxu0
  %v139 = vpop.f32.mrf.mxu0
  %v140 = vadd.f32 %v40, %v139
  %v141 = vpop.f32.mrf.mxu0
  %142 = vmatprep.mubr.bf16.mxu0 0
  %143 = vmatmul.mubr.bf16.gmra.mxu0 %v51
  %v144 = vpop.f32.mrf.mxu0
  %v145 = vadd.f32 %v40, %v144
  %v146 = vpop.f32.mrf.mxu0
  %v147 = vpop.f32.mrf.mxu0
  %v148 = vadd.f32 %v40, %v147
  %v149 = vpop.f32.mrf.mxu0
  %150 = vdwg.mxu0
  %151 = vst [vmem:[%s3] sm:$0xff] %v137
  %152 = vst [vmem:[%s3 + $0x8] sm:$0xff] %v140
  %153 = vst [vmem:[%s3 + $0x10] sm:$0xff] %v145
  %154 = vst [vmem:[%s3 + $0x18] sm:$0xff] %v148
  // Predicated region
  $region14: #{vision_transformer_forward.2} parent=0 // pred_check
    _
  $region15: #{vision_transformer_forward.2} parent=0 // pred_check_branch
    %156 = sbr.rel (0) target = $region17
  $region16: #{vision_transformer_forward.2} parent=0 // pred_region
    _
  $region17: #{vision_transformer_forward.2} parent=0 // pred_fallthru
    _
  // Predicated region
  $region18: #{vision_transformer_forward.2} parent=0 // pred_check
    _
  $region19: #{vision_transformer_forward.2} parent=0 // pred_check_branch
    %158 = sbr.rel (0) target = $region21
  $region20: #{vision_transformer_forward.2} parent=0 // pred_region
    _
  $region21: #{vision_transformer_forward.2} parent=0 // pred_fallthru
    _

// kernel: vision_transformer_forward.3
$region0: #{vision_transformer_forward.3}
  #allocation0 [shape = 'u32[]', space=smem, size = 0x4, offset = 0x4, fixed_abs, tag = 'smem constant byte address 0x4 - core index']
  #allocation1 [shape = 'u32[144,128]{1,0:T(1,128)}', space=vmem, size = 0x12000, scoped, tag = 'internal scratch']
  #allocation2 [shape = 'f32[2,32,128]{2,1,0:T(8,128)}', space=vmem, size = 0x8000, scoped, tag = 'scratch operand']
  %s0 = inlined_call_operand.vmem [shape: f32[2,32,128], index: 0, kind: input, shape index: {}]
  %s1 = inlined_call_operand.vmem [shape: bf16[2,128,768], index: 1, kind: input, shape index: {}]
  %s2 = inlined_call_operand.vmem [shape: f32[2,1,768], index: 2, kind: input, shape index: {}]
  %s3 = inlined_call_operand.vmem [shape: bf16[2,256,128], index: 3, kind: input, shape index: {}]
  %s4 = inlined_call_operand.vmem [shape: f32[2,1,128], index: 4, kind: input, shape index: {}]
  %s5 = inlined_call_operand.vmem [shape: f32[2,1,128], index: 5, kind: input, shape index: {}]
  %s6 = inlined_call_operand.vmem [shape: f32[2,1,128], index: 6, kind: input, shape index: {}]
  %s7 = inlined_call_operand.vmem [shape: bf16[2,128,128], index: 7, kind: input, shape index: {}]
  %s8 = inlined_call_operand.vmem [shape: f32[2,1,128], index: 8, kind: input, shape index: {}]
  %s9 = inlined_call_operand.vmem [shape: bf16[2,128,128], index: 9, kind: input, shape index: {}]
  %s10 = inlined_call_operand.vmem [shape: f32[2,1,128], index: 10, kind: input, shape index: {}]
  %s11 = inlined_call_operand.vmem [shape: f32[2,1,128], index: 11, kind: input, shape index: {}]
  %s12 = inlined_call_operand.vmem [shape: f32[2,1,128], index: 12, kind: input, shape index: {}]
  %s13 = inlined_call_operand.vmem [shape: bf16[128,128], index: 13, kind: input, shape index: {}]
  %s14 = inlined_call_operand.vmem [shape: f32[1,128], index: 14, kind: input, shape index: {}]
  %s15 = inlined_call_operand.hbm [shape: f32[2,128], index: 15, kind: output, shape index: {}]
  %s16 = sld [smem:[#allocation0]]
  $region101: #{vision_transformer_forward.3} parent=0
    _
  %s18 = ssub.s32 1, %s16
  %s19 = scalar_select 0, %s18, %s16
  $region1: #{vision_transformer_forward.3} parent=0
    #allocation3 [shape = 'u8[1024]{0}', space=vmem, size = 0x400, scoped, tag = 'output window, operand 0, single buffered']
    #allocation4 [shape = 's32[2]{0}', space=sflag, size = 0x8, scoped, tag = 'scoped memory for vision_transformer_forward.3']
    %20 = vsyncpa [#allocation4], 0
    loop: start=0, step=1, limit=4
    $region2: #{vision_transformer_forward.3} parent=1 // loop_pre_header
      _
    $region3: #{vision_transformer_forward.3} parent=1 // loop_header
      %s22 = sphi 0, %s26
      %p23 = scmp.ge.s32.totalorder %s22, 4
      %s29 = sphi 0, %s41
      %s30 = sphi 0, %s37
      %s31 = sphi 0, %s29
      %s32 = sphi 0, %s30
      %s33 = sphi 0, %s31
      %s34 = sphi 0, %s32
      %s44 = sphi 0, %s46
      %s47 = sphi 0, %s44
      %s48 = sphi 0, %s47
      %s64 = sphi 0, %s48
      %s70 = sphi 0, %s72
      %s73 = sphi 0, %s70
      %s74 = sphi 0, %s73
      %s90 = sphi 0, %s74
      %s96 = sphi 0, %s98
      %s99 = sphi 0, %s96
      %s100 = sphi 0, %s99
      %s116 = sphi 0, %s100
      %s122 = sphi 0, %s124
      %s125 = sphi 0, %s122
      %s126 = sphi 0, %s125
      %s142 = sphi 0, %s126
      %s148 = sphi 0, %s150
      %s151 = sphi 0, %s148
      %s152 = sphi 0, %s151
      %s168 = sphi 0, %s152
      %s174 = sphi 0, %s176
      %s177 = sphi 0, %s174
      %s178 = sphi 0, %s177
      %s194 = sphi 0, %s178
      %s200 = sphi 0, %s202
      %s203 = sphi 0, %s200
      %s204 = sphi 0, %s203
      %s220 = sphi 0, %s204
      %s226 = sphi 0, %s228
      %s229 = sphi 0, %s226
      %s230 = sphi 0, %s229
      %s246 = sphi 0, %s230
      %s252 = sphi 0, %s254
      %s255 = sphi 0, %s252
      %s256 = sphi 0, %s255
      %s272 = sphi 0, %s256
      %s278 = sphi 0, %s280
      %s281 = sphi 0, %s278
      %s282 = sphi 0, %s281
      %s298 = sphi 0, %s282
      %s304 = sphi 0, %s306
      %s307 = sphi 0, %s304
      %s308 = sphi 0, %s307
      %s324 = sphi 0, %s308
      %s330 = sphi 0, %s332
      %s333 = sphi 0, %s330
      %s334 = sphi 0, %s333
      %s350 = sphi 0, %s334
      %s356 = sphi 0, %s358
      %s359 = sphi 0, %s356
      %s360 = sphi 0, %s359
      %s376 = sphi 0, %s360
      %s380 = sphi 0, %s380
      %s382 = sphi 0, %s380
      %s383 = sphi 0, %s382
      %s397 = sphi 0, %s383
      %s401 = sphi 0, %s401
      %s403 = sphi 0, %s401
      %s404 = sphi 0, %s403
      %s418 = sphi 0, %s404
      %s424 = sphi 0, %s426
      %s427 = sphi 0, %s424
      %s428 = sphi 0, %s427
      %s444 = sphi 0, %s428
    $region4: #{vision_transformer_forward.3} parent=1 // loop_header_branch
      %25 = sbr.rel (%p23) target = $region8
    $region5: #{vision_transformer_forward.3} parent=1 // loop_body
      %s27 = ssub.s32 %s22, 1
      %s28 = ssub.s32 %s22, 2
      %s35 = sadd.s32 1, %s30
      %p36 = scmp.ge.s32.totalorder %s35, 2
      %s37 = scalar_select %p36, 0, %s35
      %s38 = sadd.s32 1, %s29
      %s39 = scalar_select %p36, %s38, %s29
      %p40 = scmp.ge.s32.totalorder %s39, 1
      %s41 = scalar_select %p40, 0, %s39
      %s42 = ssub.s32 %s29, %s41
      %p43 = scmp.eq.s32.totalorder %s42, 0
      %s45 = sadd.s32 %s44, 1
      %s46 = scalar_select %p43, %s44, %s45
      %p49 = pneg %p43
      %p50 = scmp.eq.s32.totalorder %s22, 1
      %p51 = por %p49, %p50
      %p52 = scmp.ne.s32.totalorder %s44, %s47
      %p53 = scmp.eq.s32.totalorder %s22, 0
      %p54 = por %p52, %p53
      %p55 = scmp.ne.s32.totalorder %s44, %s47
      %p56 = scmp.eq.s32.totalorder %s27, 1
      %p57 = por %p55, %p56
      %p58 = scmp.ne.s32.totalorder %s47, %s48
      %p59 = scmp.eq.s32.totalorder %s27, 0
      %p60 = por %p58, %p59
      %p61 = scmp.ne.s32.totalorder %s47, %s48
      %p62 = scmp.eq.s32.totalorder %s28, 1
      %p63 = por %p61, %p62
      %p65 = scmp.ne.s32.totalorder %s48, %s64
      %p66 = scmp.eq.s32.totalorder %s28, 0
      %p67 = por %p65, %p66
      %s68 = ssub.s32 %s30, %s37
      %p69 = scmp.eq.s32.totalorder %s68, 0
      %s71 = sadd.s32 %s70, 1
      %s72 = scalar_select %p69, %s70, %s71
      %p75 = pneg %p69
      %p76 = scmp.eq.s32.totalorder %s22, 1
      %p77 = por %p75, %p76
      %p78 = scmp.ne.s32.totalorder %s70, %s73
      %p79 = scmp.eq.s32.totalorder %s22, 0
      %p80 = por %p78, %p79
      %p81 = scmp.ne.s32.totalorder %s70, %s73
      %p82 = scmp.eq.s32.totalorder %s27, 1
      %p83 = por %p81, %p82
      %p84 = scmp.ne.s32.totalorder %s73, %s74
      %p85 = scmp.eq.s32.totalorder %s27, 0
      %p86 = por %p84, %p85
      %p87 = scmp.ne.s32.totalorder %s73, %s74
      %p88 = scmp.eq.s32.totalorder %s28, 1
      %p89 = por %p87, %p88
      %p91 = scmp.ne.s32.totalorder %s74, %s90
      %p92 = scmp.eq.s32.totalorder %s28, 0
      %p93 = por %p91, %p92
      %s94 = ssub.s32 %s30, %s37
      %p95 = scmp.eq.s32.totalorder %s94, 0
      %s97 = sadd.s32 %s96, 1
      %s98 = scalar_select %p95, %s96, %s97
      %p101 = pneg %p95
      %p102 = scmp.eq.s32.totalorder %s22, 1
      %p103 = por %p101, %p102
      %p104 = scmp.ne.s32.totalorder %s96, %s99
      %p105 = scmp.eq.s32.totalorder %s22, 0
      %p106 = por %p104, %p105
      %p107 = scmp.ne.s32.totalorder %s96, %s99
      %p108 = scmp.eq.s32.totalorder %s27, 1
      %p109 = por %p107, %p108
      %p110 = scmp.ne.s32.totalorder %s99, %s100
      %p111 = scmp.eq.s32.totalorder %s27, 0
      %p112 = por %p110, %p111
      %p113 = scmp.ne.s32.totalorder %s99, %s100
      %p114 = scmp.eq.s32.totalorder %s28, 1
      %p115 = por %p113, %p114
      %p117 = scmp.ne.s32.totalorder %s100, %s116
      %p118 = scmp.eq.s32.totalorder %s28, 0
      %p119 = por %p117, %p118
      %s120 = ssub.s32 %s30, %s37
      %p121 = scmp.eq.s32.totalorder %s120, 0
      %s123 = sadd.s32 %s122, 1
      %s124 = scalar_select %p121, %s122, %s123
      %p127 = pneg %p121
      %p128 = scmp.eq.s32.totalorder %s22, 1
      %p129 = por %p127, %p128
      %p130 = scmp.ne.s32.totalorder %s122, %s125
      %p131 = scmp.eq.s32.totalorder %s22, 0
      %p132 = por %p130, %p131
      %p133 = scmp.ne.s32.totalorder %s122, %s125
      %p134 = scmp.eq.s32.totalorder %s27, 1
      %p135 = por %p133, %p134
      %p136 = scmp.ne.s32.totalorder %s125, %s126
      %p137 = scmp.eq.s32.totalorder %s27, 0
      %p138 = por %p136, %p137
      %p139 = scmp.ne.s32.totalorder %s125, %s126
      %p140 = scmp.eq.s32.totalorder %s28, 1
      %p141 = por %p139, %p140
      %p143 = scmp.ne.s32.totalorder %s126, %s142
      %p144 = scmp.eq.s32.totalorder %s28, 0
      %p145 = por %p143, %p144
      %s146 = ssub.s32 %s30, %s37
      %p147 = scmp.eq.s32.totalorder %s146, 0
      %s149 = sadd.s32 %s148, 1
      %s150 = scalar_select %p147, %s148, %s149
      %p153 = pneg %p147
      %p154 = scmp.eq.s32.totalorder %s22, 1
      %p155 = por %p153, %p154
      %p156 = scmp.ne.s32.totalorder %s148, %s151
      %p157 = scmp.eq.s32.totalorder %s22, 0
      %p158 = por %p156, %p157
      %p159 = scmp.ne.s32.totalorder %s148, %s151
      %p160 = scmp.eq.s32.totalorder %s27, 1
      %p161 = por %p159, %p160
      %p162 = scmp.ne.s32.totalorder %s151, %s152
      %p163 = scmp.eq.s32.totalorder %s27, 0
      %p164 = por %p162, %p163
      %p165 = scmp.ne.s32.totalorder %s151, %s152
      %p166 = scmp.eq.s32.totalorder %s28, 1
      %p167 = por %p165, %p166
      %p169 = scmp.ne.s32.totalorder %s152, %s168
      %p170 = scmp.eq.s32.totalorder %s28, 0
      %p171 = por %p169, %p170
      %s172 = ssub.s32 %s30, %s37
      %p173 = scmp.eq.s32.totalorder %s172, 0
      %s175 = sadd.s32 %s174, 1
      %s176 = scalar_select %p173, %s174, %s175
      %p179 = pneg %p173
      %p180 = scmp.eq.s32.totalorder %s22, 1
      %p181 = por %p179, %p180
      %p182 = scmp.ne.s32.totalorder %s174, %s177
      %p183 = scmp.eq.s32.totalorder %s22, 0
      %p184 = por %p182, %p183
      %p185 = scmp.ne.s32.totalorder %s174, %s177
      %p186 = scmp.eq.s32.totalorder %s27, 1
      %p187 = por %p185, %p186
      %p188 = scmp.ne.s32.totalorder %s177, %s178
      %p189 = scmp.eq.s32.totalorder %s27, 0
      %p190 = por %p188, %p189
      %p191 = scmp.ne.s32.totalorder %s177, %s178
      %p192 = scmp.eq.s32.totalorder %s28, 1
      %p193 = por %p191, %p192
      %p195 = scmp.ne.s32.totalorder %s178, %s194
      %p196 = scmp.eq.s32.totalorder %s28, 0
      %p197 = por %p195, %p196
      %s198 = ssub.s32 %s30, %s37
      %p199 = scmp.eq.s32.totalorder %s198, 0
      %s201 = sadd.s32 %s200, 1
      %s202 = scalar_select %p199, %s200, %s201
      %p205 = pneg %p199
      %p206 = scmp.eq.s32.totalorder %s22, 1
      %p207 = por %p205, %p206
      %p208 = scmp.ne.s32.totalorder %s200, %s203
      %p209 = scmp.eq.s32.totalorder %s22, 0
      %p210 = por %p208, %p209
      %p211 = scmp.ne.s32.totalorder %s200, %s203
      %p212 = scmp.eq.s32.totalorder %s27, 1
      %p213 = por %p211, %p212
      %p214 = scmp.ne.s32.totalorder %s203, %s204
      %p215 = scmp.eq.s32.totalorder %s27, 0
      %p216 = por %p214, %p215
      %p217 = scmp.ne.s32.totalorder %s203, %s204
      %p218 = scmp.eq.s32.totalorder %s28, 1
      %p219 = por %p217, %p218
      %p221 = scmp.ne.s32.totalorder %s204, %s220
      %p222 = scmp.eq.s32.totalorder %s28, 0
      %p223 = por %p221, %p222
      %s224 = ssub.s32 %s30, %s37
      %p225 = scmp.eq.s32.totalorder %s224, 0
      %s227 = sadd.s32 %s226, 1
      %s228 = scalar_select %p225, %s226, %s227
      %p231 = pneg %p225
      %p232 = scmp.eq.s32.totalorder %s22, 1
      %p233 = por %p231, %p232
      %p234 = scmp.ne.s32.totalorder %s226, %s229
      %p235 = scmp.eq.s32.totalorder %s22, 0
      %p236 = por %p234, %p235
      %p237 = scmp.ne.s32.totalorder %s226, %s229
      %p238 = scmp.eq.s32.totalorder %s27, 1
      %p239 = por %p237, %p238
      %p240 = scmp.ne.s32.totalorder %s229, %s230
      %p241 = scmp.eq.s32.totalorder %s27, 0
      %p242 = por %p240, %p241
      %p243 = scmp.ne.s32.totalorder %s229, %s230
      %p244 = scmp.eq.s32.totalorder %s28, 1
      %p245 = por %p243, %p244
      %p247 = scmp.ne.s32.totalorder %s230, %s246
      %p248 = scmp.eq.s32.totalorder %s28, 0
      %p249 = por %p247, %p248
      %s250 = ssub.s32 %s30, %s37
      %p251 = scmp.eq.s32.totalorder %s250, 0
      %s253 = sadd.s32 %s252, 1
      %s254 = scalar_select %p251, %s252, %s253
      %p257 = pneg %p251
      %p258 = scmp.eq.s32.totalorder %s22, 1
      %p259 = por %p257, %p258
      %p260 = scmp.ne.s32.totalorder %s252, %s255
      %p261 = scmp.eq.s32.totalorder %s22, 0
      %p262 = por %p260, %p261
      %p263 = scmp.ne.s32.totalorder %s252, %s255
      %p264 = scmp.eq.s32.totalorder %s27, 1
      %p265 = por %p263, %p264
      %p266 = scmp.ne.s32.totalorder %s255, %s256
      %p267 = scmp.eq.s32.totalorder %s27, 0
      %p268 = por %p266, %p267
      %p269 = scmp.ne.s32.totalorder %s255, %s256
      %p270 = scmp.eq.s32.totalorder %s28, 1
      %p271 = por %p269, %p270
      %p273 = scmp.ne.s32.totalorder %s256, %s272
      %p274 = scmp.eq.s32.totalorder %s28, 0
      %p275 = por %p273, %p274
      %s276 = ssub.s32 %s30, %s37
      %p277 = scmp.eq.s32.totalorder %s276, 0
      %s279 = sadd.s32 %s278, 1
      %s280 = scalar_select %p277, %s278, %s279
      %p283 = pneg %p277
      %p284 = scmp.eq.s32.totalorder %s22, 1
      %p285 = por %p283, %p284
      %p286 = scmp.ne.s32.totalorder %s278, %s281
      %p287 = scmp.eq.s32.totalorder %s22, 0
      %p288 = por %p286, %p287
      %p289 = scmp.ne.s32.totalorder %s278, %s281
      %p290 = scmp.eq.s32.totalorder %s27, 1
      %p291 = por %p289, %p290
      %p292 = scmp.ne.s32.totalorder %s281, %s282
      %p293 = scmp.eq.s32.totalorder %s27, 0
      %p294 = por %p292, %p293
      %p295 = scmp.ne.s32.totalorder %s281, %s282
      %p296 = scmp.eq.s32.totalorder %s28, 1
      %p297 = por %p295, %p296
      %p299 = scmp.ne.s32.totalorder %s282, %s298
      %p300 = scmp.eq.s32.totalorder %s28, 0
      %p301 = por %p299, %p300
      %s302 = ssub.s32 %s30, %s37
      %p303 = scmp.eq.s32.totalorder %s302, 0
      %s305 = sadd.s32 %s304, 1
      %s306 = scalar_select %p303, %s304, %s305
      %p309 = pneg %p303
      %p310 = scmp.eq.s32.totalorder %s22, 1
      %p311 = por %p309, %p310
      %p312 = scmp.ne.s32.totalorder %s304, %s307
      %p313 = scmp.eq.s32.totalorder %s22, 0
      %p314 = por %p312, %p313
      %p315 = scmp.ne.s32.totalorder %s304, %s307
      %p316 = scmp.eq.s32.totalorder %s27, 1
      %p317 = por %p315, %p316
      %p318 = scmp.ne.s32.totalorder %s307, %s308
      %p319 = scmp.eq.s32.totalorder %s27, 0
      %p320 = por %p318, %p319
      %p321 = scmp.ne.s32.totalorder %s307, %s308
      %p322 = scmp.eq.s32.totalorder %s28, 1
      %p323 = por %p321, %p322
      %p325 = scmp.ne.s32.totalorder %s308, %s324
      %p326 = scmp.eq.s32.totalorder %s28, 0
      %p327 = por %p325, %p326
      %s328 = ssub.s32 %s30, %s37
      %p329 = scmp.eq.s32.totalorder %s328, 0
      %s331 = sadd.s32 %s330, 1
      %s332 = scalar_select %p329, %s330, %s331
      %p335 = pneg %p329
      %p336 = scmp.eq.s32.totalorder %s22, 1
      %p337 = por %p335, %p336
      %p338 = scmp.ne.s32.totalorder %s330, %s333
      %p339 = scmp.eq.s32.totalorder %s22, 0
      %p340 = por %p338, %p339
      %p341 = scmp.ne.s32.totalorder %s330, %s333
      %p342 = scmp.eq.s32.totalorder %s27, 1
      %p343 = por %p341, %p342
      %p344 = scmp.ne.s32.totalorder %s333, %s334
      %p345 = scmp.eq.s32.totalorder %s27, 0
      %p346 = por %p344, %p345
      %p347 = scmp.ne.s32.totalorder %s333, %s334
      %p348 = scmp.eq.s32.totalorder %s28, 1
      %p349 = por %p347, %p348
      %p351 = scmp.ne.s32.totalorder %s334, %s350
      %p352 = scmp.eq.s32.totalorder %s28, 0
      %p353 = por %p351, %p352
      %s354 = ssub.s32 %s30, %s37
      %p355 = scmp.eq.s32.totalorder %s354, 0
      %s357 = sadd.s32 %s356, 1
      %s358 = scalar_select %p355, %s356, %s357
      %p361 = pneg %p355
      %p362 = scmp.eq.s32.totalorder %s22, 1
      %p363 = por %p361, %p362
      %p364 = scmp.ne.s32.totalorder %s356, %s359
      %p365 = scmp.eq.s32.totalorder %s22, 0
      %p366 = por %p364, %p365
      %p367 = scmp.ne.s32.totalorder %s356, %s359
      %p368 = scmp.eq.s32.totalorder %s27, 1
      %p369 = por %p367, %p368
      %p370 = scmp.ne.s32.totalorder %s359, %s360
      %p371 = scmp.eq.s32.totalorder %s27, 0
      %p372 = por %p370, %p371
      %p373 = scmp.ne.s32.totalorder %s359, %s360
      %p374 = scmp.eq.s32.totalorder %s28, 1
      %p375 = por %p373, %p374
      %p377 = scmp.ne.s32.totalorder %s360, %s376
      %p378 = scmp.eq.s32.totalorder %s28, 0
      %p379 = por %p377, %p378
      %s381 = sadd.s32 %s380, 1
      %p384 = scmp.eq.s32.totalorder %s22, 1
      %p385 = scmp.ne.s32.totalorder %s380, %s382
      %p386 = scmp.eq.s32.totalorder %s22, 0
      %p387 = por %p385, %p386
      %p388 = scmp.ne.s32.totalorder %s380, %s382
      %p389 = scmp.eq.s32.totalorder %s27, 1
      %p390 = por %p388, %p389
      %p391 = scmp.ne.s32.totalorder %s382, %s383
      %p392 = scmp.eq.s32.totalorder %s27, 0
      %p393 = por %p391, %p392
      %p394 = scmp.ne.s32.totalorder %s382, %s383
      %p395 = scmp.eq.s32.totalorder %s28, 1
      %p396 = por %p394, %p395
      %p398 = scmp.ne.s32.totalorder %s383, %s397
      %p399 = scmp.eq.s32.totalorder %s28, 0
      %p400 = por %p398, %p399
      %s402 = sadd.s32 %s401, 1
      %p405 = scmp.eq.s32.totalorder %s22, 1
      %p406 = scmp.ne.s32.totalorder %s401, %s403
      %p407 = scmp.eq.s32.totalorder %s22, 0
      %p408 = por %p406, %p407
      %p409 = scmp.ne.s32.totalorder %s401, %s403
      %p410 = scmp.eq.s32.totalorder %s27, 1
      %p411 = por %p409, %p410
      %p412 = scmp.ne.s32.totalorder %s403, %s404
      %p413 = scmp.eq.s32.totalorder %s27, 0
      %p414 = por %p412, %p413
      %p415 = scmp.ne.s32.totalorder %s403, %s404
      %p416 = scmp.eq.s32.totalorder %s28, 1
      %p417 = por %p415, %p416
      %p419 = scmp.ne.s32.totalorder %s404, %s418
      %p420 = scmp.eq.s32.totalorder %s28, 0
      %p421 = por %p419, %p420
      %s422 = ssub.s32 %s29, %s41
      %p423 = scmp.eq.s32.totalorder %s422, 0
      %s425 = sadd.s32 %s424, 1
      %s426 = scalar_select %p423, %s424, %s425
      %p429 = pneg %p423
      %p430 = scmp.eq.s32.totalorder %s22, 1
      %p431 = por %p429, %p430
      %p432 = scmp.ne.s32.totalorder %s424, %s427
      %p433 = scmp.eq.s32.totalorder %s22, 0
      %p434 = por %p432, %p433
      %p435 = scmp.ne.s32.totalorder %s424, %s427
      %p436 = scmp.eq.s32.totalorder %s27, 1
      %p437 = por %p435, %p436
      %p438 = scmp.ne.s32.totalorder %s427, %s428
      %p439 = scmp.eq.s32.totalorder %s27, 0
      %p440 = por %p438, %p439
      %p441 = scmp.ne.s32.totalorder %s427, %s428
      %p442 = scmp.eq.s32.totalorder %s28, 1
      %p443 = por %p441, %p442
      %p445 = scmp.ne.s32.totalorder %s428, %s444
      %p446 = scmp.eq.s32.totalorder %s28, 0
      %p447 = por %p445, %p446
      %p448 = scmp.le.s32.totalorder 1, %s22
      %p449 = scmp.lt.s32.totalorder %s22, 3
      %p450 = pnand %p448, %p449
      %p451 = pneg %p450
      // Predicated region
      $region9: #{vision_transformer_forward.3} parent=5 // pred_check
        _
      $region10: #{vision_transformer_forward.3} parent=5 // pred_check_branch
        %453 = sbr.rel (%p450) target = $region12
      $region11: #{vision_transformer_forward.3} parent=5 // pred_region
        %s454 = ssub.s32 %s22, 1
        // Predicated region
        $region13: #{vision_transformer_forward.3} parent=11 // pred_check
          %p455 = pneg %p60
        $region14: #{vision_transformer_forward.3} parent=11 // pred_check_branch
          %457 = sbr.rel (%p455) target = $region16
        $region15: #{vision_transformer_forward.3} parent=11 // pred_region
          %s458 = smul.u32 2, %s31
          %p459 = scmp.lt.s32.totalorder %s458, 1
          %s460 = scalar_select %p459, %s458, 1
          %s461 = smul.addr %s460, 4
          %s462 = smul.addr %s461, 8
          %s463 = scalar_lea.vmem %s0, %s462
          %s464 = smul.u32 2, %s31
        $region16: #{vision_transformer_forward.3} parent=11 // pred_fallthru
          _
        // Predicated region
        $region17: #{vision_transformer_forward.3} parent=11 // pred_check
          %p465 = pneg %p393
        $region18: #{vision_transformer_forward.3} parent=11 // pred_check_branch
          %467 = sbr.rel (%p465) target = $region20
        $region19: #{vision_transformer_forward.3} parent=11 // pred_region
          _
        $region20: #{vision_transformer_forward.3} parent=11 // pred_fallthru
          _
        // Predicated region
        $region21: #{vision_transformer_forward.3} parent=11 // pred_check
          %p468 = pneg %p414
        $region22: #{vision_transformer_forward.3} parent=11 // pred_check_branch
          %470 = sbr.rel (%p468) target = $region24
        $region23: #{vision_transformer_forward.3} parent=11 // pred_region
          _
        $region24: #{vision_transformer_forward.3} parent=11 // pred_fallthru
          _
      $region12: #{vision_transformer_forward.3} parent=5 // pred_fallthru
        _
      %p471 = scmp.lt.s32.totalorder %s22, 2
      // Predicated region
      $region25: #{vision_transformer_forward.3} parent=5 // pred_check
        %p472 = pneg %p471
      $region26: #{vision_transformer_forward.3} parent=5 // pred_check_branch
        %474 = sbr.rel (%p472) target = $region28
      $region27: #{vision_transformer_forward.3} parent=5 // pred_region
        // Predicated region
        $region29: #{vision_transformer_forward.3} parent=27 // pred_check
          %p475 = pneg %p80
        $region30: #{vision_transformer_forward.3} parent=27 // pred_check_branch
          %477 = sbr.rel (%p475) target = $region32
        $region31: #{vision_transformer_forward.3} parent=27 // pred_region
          %p478 = scmp.lt.s32.totalorder %s30, 1
          %s479 = scalar_select %p478, %s30, 1
          %s480 = smul.addr %s479, 96
          %s481 = smul.addr %s480, 4
          %s482 = scalar_lea.vmem %s1, %s481
        $region32: #{vision_transformer_forward.3} parent=27 // pred_fallthru
          _
        // Predicated region
        $region33: #{vision_transformer_forward.3} parent=27 // pred_check
          %p483 = pneg %p106
        $region34: #{vision_transformer_forward.3} parent=27 // pred_check_branch
          %485 = sbr.rel (%p483) target = $region36
        $region35: #{vision_transformer_forward.3} parent=27 // pred_region
          %p486 = scmp.lt.s32.totalorder %s30, 1
          %s487 = scalar_select %p486, %s30, 1
          %s488 = smul.addr %s487, 6
          %s489 = scalar_lea.vmem %s2, %s488
        $region36: #{vision_transformer_forward.3} parent=27 // pred_fallthru
          _
        // Predicated region
        $region37: #{vision_transformer_forward.3} parent=27 // pred_check
          %p490 = pneg %p132
        $region38: #{vision_transformer_forward.3} parent=27 // pred_check_branch
          %492 = sbr.rel (%p490) target = $region40
        $region39: #{vision_transformer_forward.3} parent=27 // pred_region
          %p493 = scmp.lt.s32.totalorder %s30, 1
          %s494 = scalar_select %p493, %s30, 1
          %s495 = smul.addr %s494, 32
          %s496 = smul.addr %s495, 4
          %s497 = scalar_lea.vmem %s3, %s496
        $region40: #{vision_transformer_forward.3} parent=27 // pred_fallthru
          _
        // Predicated region
        $region41: #{vision_transformer_forward.3} parent=27 // pred_check
          %p498 = pneg %p158
        $region42: #{vision_transformer_forward.3} parent=27 // pred_check_branch
          %500 = sbr.rel (%p498) target = $region44
        $region43: #{vision_transformer_forward.3} parent=27 // pred_region
          %p501 = scmp.lt.s32.totalorder %s30, 1
          %s502 = scalar_select %p501, %s30, 1
          %s503 = scalar_lea.vmem %s4, %s502
        $region44: #{vision_transformer_forward.3} parent=27 // pred_fallthru
          _
        // Predicated region
        $region45: #{vision_transformer_forward.3} parent=27 // pred_check
          %p504 = pneg %p184
        $region46: #{vision_transformer_forward.3} parent=27 // pred_check_branch
          %506 = sbr.rel (%p504) target = $region48
        $region47: #{vision_transformer_forward.3} parent=27 // pred_region
          %p507 = scmp.lt.s32.totalorder %s30, 1
          %s508 = scalar_select %p507, %s30, 1
          %s509 = scalar_lea.vmem %s5, %s508
        $region48: #{vision_transformer_forward.3} parent=27 // pred_fallthru
          _
        // Predicated region
        $region49: #{vision_transformer_forward.3} parent=27 // pred_check
          %p510 = pneg %p210
        $region50: #{vision_transformer_forward.3} parent=27 // pred_check_branch
          %512 = sbr.rel (%p510) target = $region52
        $region51: #{vision_transformer_forward.3} parent=27 // pred_region
          %p513 = scmp.lt.s32.totalorder %s30, 1
          %s514 = scalar_select %p513, %s30, 1
          %s515 = scalar_lea.vmem %s6, %s514
        $region52: #{vision_transformer_forward.3} parent=27 // pred_fallthru
          _
        // Predicated region
        $region53: #{vision_transformer_forward.3} parent=27 // pred_check
          %p516 = pneg %p236
        $region54: #{vision_transformer_forward.3} parent=27 // pred_check_branch
          %518 = sbr.rel (%p516) target = $region56
        $region55: #{vision_transformer_forward.3} parent=27 // pred_region
          %p519 = scmp.lt.s32.totalorder %s30, 1
          %s520 = scalar_select %p519, %s30, 1
          %s521 = smul.addr %s520, 16
          %s522 = smul.addr %s521, 4
          %s523 = scalar_lea.vmem %s7, %s522
        $region56: #{vision_transformer_forward.3} parent=27 // pred_fallthru
          _
        // Predicated region
        $region57: #{vision_transformer_forward.3} parent=27 // pred_check
          %p524 = pneg %p262
        $region58: #{vision_transformer_forward.3} parent=27 // pred_check_branch
          %526 = sbr.rel (%p524) target = $region60
        $region59: #{vision_transformer_forward.3} parent=27 // pred_region
          %p527 = scmp.lt.s32.totalorder %s30, 1
          %s528 = scalar_select %p527, %s30, 1
          %s529 = scalar_lea.vmem %s8, %s528
        $region60: #{vision_transformer_forward.3} parent=27 // pred_fallthru
          _
        // Predicated region
        $region61: #{vision_transformer_forward.3} parent=27 // pred_check
          %p530 = pneg %p288
        $region62: #{vision_transformer_forward.3} parent=27 // pred_check_branch
          %532 = sbr.rel (%p530) target = $region64
        $region63: #{vision_transformer_forward.3} parent=27 // pred_region
          %p533 = scmp.lt.s32.totalorder %s30, 1
          %s534 = scalar_select %p533, %s30, 1
          %s535 = smul.addr %s534, 16
          %s536 = smul.addr %s535, 4
          %s537 = scalar_lea.vmem %s9, %s536
        $region64: #{vision_transformer_forward.3} parent=27 // pred_fallthru
          _
        // Predicated region
        $region65: #{vision_transformer_forward.3} parent=27 // pred_check
          %p538 = pneg %p314
        $region66: #{vision_transformer_forward.3} parent=27 // pred_check_branch
          %540 = sbr.rel (%p538) target = $region68
        $region67: #{vision_transformer_forward.3} parent=27 // pred_region
          %p541 = scmp.lt.s32.totalorder %s30, 1
          %s542 = scalar_select %p541, %s30, 1
          %s543 = scalar_lea.vmem %s10, %s542
        $region68: #{vision_transformer_forward.3} parent=27 // pred_fallthru
          _
        // Predicated region
        $region69: #{vision_transformer_forward.3} parent=27 // pred_check
          %p544 = pneg %p340
        $region70: #{vision_transformer_forward.3} parent=27 // pred_check_branch
          %546 = sbr.rel (%p544) target = $region72
        $region71: #{vision_transformer_forward.3} parent=27 // pred_region
          %p547 = scmp.lt.s32.totalorder %s30, 1
          %s548 = scalar_select %p547, %s30, 1
          %s549 = scalar_lea.vmem %s11, %s548
        $region72: #{vision_transformer_forward.3} parent=27 // pred_fallthru
          _
        // Predicated region
        $region73: #{vision_transformer_forward.3} parent=27 // pred_check
          %p550 = pneg %p366
        $region74: #{vision_transformer_forward.3} parent=27 // pred_check_branch
          %552 = sbr.rel (%p550) target = $region76
        $region75: #{vision_transformer_forward.3} parent=27 // pred_region
          %p553 = scmp.lt.s32.totalorder %s30, 1
          %s554 = scalar_select %p553, %s30, 1
          %s555 = scalar_lea.vmem %s12, %s554
        $region76: #{vision_transformer_forward.3} parent=27 // pred_fallthru
          _
      $region28: #{vision_transformer_forward.3} parent=5 // pred_fallthru
        _
      %p556 = scmp.le.s32.totalorder 1, %s22
      %p557 = scmp.lt.s32.totalorder %s22, 3
      %p558 = pnand %p556, %p557
      %p559 = pneg %p558
      // Predicated region
      $region77: #{vision_transformer_forward.3} parent=5 // pred_check
        _
      $region78: #{vision_transformer_forward.3} parent=5 // pred_check_branch
        %561 = sbr.rel (%p558) target = $region80
      $region79: #{vision_transformer_forward.3} parent=5 // pred_region
        %s562 = ssub.s32 %s22, 1
        %s563 = smul.u32 2, %s31
        %p564 = scmp.lt.s32.totalorder %s563, 1
        %s565 = scalar_select %p564, %s563, 1
        %s566 = smul.addr %s565, 4
        %s567 = smul.addr %s566, 8
        %s568 = scalar_lea.vmem %s0, %s567
        %p569 = pneg %p60
        %p570 = pneg %p57
        %p571 = scmp.lt.s32.totalorder %s32, 1
        %s572 = scalar_select %p571, %s32, 1
        %s573 = smul.addr %s572, 96
        %s574 = smul.addr %s573, 4
        %s575 = scalar_lea.vmem %s1, %s574
        %p576 = pneg %p86
        %p577 = pneg %p83
        %p578 = scmp.lt.s32.totalorder %s32, 1
        %s579 = scalar_select %p578, %s32, 1
        %s580 = smul.addr %s579, 6
        %s581 = scalar_lea.vmem %s2, %s580
        %p582 = pneg %p112
        %p583 = pneg %p109
        %p584 = scmp.lt.s32.totalorder %s32, 1
        %s585 = scalar_select %p584, %s32, 1
        %s586 = smul.addr %s585, 32
        %s587 = smul.addr %s586, 4
        %s588 = scalar_lea.vmem %s3, %s587
        %p589 = pneg %p138
        %p590 = pneg %p135
        %p591 = scmp.lt.s32.totalorder %s32, 1
        %s592 = scalar_select %p591, %s32, 1
        %s593 = scalar_lea.vmem %s4, %s592
        %p594 = pneg %p164
        %p595 = pneg %p161
        %p596 = scmp.lt.s32.totalorder %s32, 1
        %s597 = scalar_select %p596, %s32, 1
        %s598 = scalar_lea.vmem %s5, %s597
        %p599 = pneg %p190
        %p600 = pneg %p187
        %p601 = scmp.lt.s32.totalorder %s32, 1
        %s602 = scalar_select %p601, %s32, 1
        %s603 = scalar_lea.vmem %s6, %s602
        %p604 = pneg %p216
        %p605 = pneg %p213
        %p606 = scmp.lt.s32.totalorder %s32, 1
        %s607 = scalar_select %p606, %s32, 1
        %s608 = smul.addr %s607, 16
        %s609 = smul.addr %s608, 4
        %s610 = scalar_lea.vmem %s7, %s609
        %p611 = pneg %p242
        %p612 = pneg %p239
        %p613 = scmp.lt.s32.totalorder %s32, 1
        %s614 = scalar_select %p613, %s32, 1
        %s615 = scalar_lea.vmem %s8, %s614
        %p616 = pneg %p268
        %p617 = pneg %p265
        %p618 = scmp.lt.s32.totalorder %s32, 1
        %s619 = scalar_select %p618, %s32, 1
        %s620 = smul.addr %s619, 16
        %s621 = smul.addr %s620, 4
        %s622 = scalar_lea.vmem %s9, %s621
        %p623 = pneg %p294
        %p624 = pneg %p291
        %p625 = scmp.lt.s32.totalorder %s32, 1
        %s626 = scalar_select %p625, %s32, 1
        %s627 = scalar_lea.vmem %s10, %s626
        %p628 = pneg %p320
        %p629 = pneg %p317
        %p630 = scmp.lt.s32.totalorder %s32, 1
        %s631 = scalar_select %p630, %s32, 1
        %s632 = scalar_lea.vmem %s11, %s631
        %p633 = pneg %p346
        %p634 = pneg %p343
        %p635 = scmp.lt.s32.totalorder %s32, 1
        %s636 = scalar_select %p635, %s32, 1
        %s637 = scalar_lea.vmem %s12, %s636
        %p638 = pneg %p372
        %p639 = pneg %p369
        %p640 = pneg %p393
        %p641 = pneg %p390
        %p642 = pneg %p414
        %p643 = pneg %p411
        %p644 = pneg %p440
        %p645 = pneg %p437
        %s646 = smul.u32 2, %s31
        %p647 = scmp.lt.s32.totalorder %s646, 1
        %s648 = scalar_select %p647, %s646, 1
        %s649 = smul.addr %s648, 4
        %s650 = smul.addr %s649, 8
        %s651 = scalar_lea.vmem %s0, %s650
        %s652 = smul.u32 2, %s31
        %p653 = scmp.lt.s32.totalorder %s32, 1
        %s654 = scalar_select %p653, %s32, 1
        %s655 = smul.addr %s654, 96
        %s656 = smul.addr %s655, 4
        %s657 = scalar_lea.vmem %s1, %s656
        %p658 = scmp.lt.s32.totalorder %s32, 1
        %s659 = scalar_select %p658, %s32, 1
        %s660 = smul.addr %s659, 6
        %s661 = scalar_lea.vmem %s2, %s660
        %p662 = scmp.lt.s32.totalorder %s32, 1
        %s663 = scalar_select %p662, %s32, 1
        %s664 = smul.addr %s663, 32
        %s665 = smul.addr %s664, 4
        %s666 = scalar_lea.vmem %s3, %s665
        %p667 = scmp.lt.s32.totalorder %s32, 1
        %s668 = scalar_select %p667, %s32, 1
        %s669 = scalar_lea.vmem %s4, %s668
        %p670 = scmp.lt.s32.totalorder %s32, 1
        %s671 = scalar_select %p670, %s32, 1
        %s672 = scalar_lea.vmem %s5, %s671
        %p673 = scmp.lt.s32.totalorder %s32, 1
        %s674 = scalar_select %p673, %s32, 1
        %s675 = scalar_lea.vmem %s6, %s674
        %p676 = scmp.lt.s32.totalorder %s32, 1
        %s677 = scalar_select %p676, %s32, 1
        %s678 = smul.addr %s677, 16
        %s679 = smul.addr %s678, 4
        %s680 = scalar_lea.vmem %s7, %s679
        %p681 = scmp.lt.s32.totalorder %s32, 1
        %s682 = scalar_select %p681, %s32, 1
        %s683 = scalar_lea.vmem %s8, %s682
        %p684 = scmp.lt.s32.totalorder %s32, 1
        %s685 = scalar_select %p684, %s32, 1
        %s686 = smul.addr %s685, 16
        %s687 = smul.addr %s686, 4
        %s688 = scalar_lea.vmem %s9, %s687
        %p689 = scmp.lt.s32.totalorder %s32, 1
        %s690 = scalar_select %p689, %s32, 1
        %s691 = scalar_lea.vmem %s10, %s690
        %p692 = scmp.lt.s32.totalorder %s32, 1
        %s693 = scalar_select %p692, %s32, 1
        %s694 = scalar_lea.vmem %s11, %s693
        %p695 = scmp.lt.s32.totalorder %s32, 1
        %s696 = scalar_select %p695, %s32, 1
        %s697 = scalar_lea.vmem %s12, %s696
        %p699 = scmp.eq.s32.totalorder %s32, 0
        // Predicated region
        $region81: #{vision_transformer_forward.3} parent=79 // pred_check
          %p700 = pneg %p699
        $region82: #{vision_transformer_forward.3} parent=79 // pred_check_branch
          %702 = sbr.rel (%p700) target = $region84
        $region83: #{vision_transformer_forward.3} parent=79 // pred_region
          %v703 = vld [vmem:[%s651] sm:$0xff]
          %v704 = vld [vmem:[%s651 + $0x8] sm:$0xff]
          %v705 = vld [vmem:[%s651 + $0x10] sm:$0xff]
          %v706 = vld [vmem:[%s651 + $0x18] sm:$0xff]
          %v707 = vld [vmem:[%s651 + $0x20] sm:$0xff]
          %v708 = vld [vmem:[%s651 + $0x28] sm:$0xff]
          %v709 = vld [vmem:[%s651 + $0x30] sm:$0xff]
          %v710 = vld [vmem:[%s651 + $0x38] sm:$0xff]
          %711 = vst [vmem:[#allocation2] sm:$0xff] %v703
          %712 = vst [vmem:[#allocation2 + $0x8] sm:$0xff] %v704
          %713 = vst [vmem:[#allocation2 + $0x10] sm:$0xff] %v705
          %714 = vst [vmem:[#allocation2 + $0x18] sm:$0xff] %v706
          %715 = vst [vmem:[#allocation2 + $0x20] sm:$0xff] %v707
          %716 = vst [vmem:[#allocation2 + $0x28] sm:$0xff] %v708
          %717 = vst [vmem:[#allocation2 + $0x30] sm:$0xff] %v709
          %718 = vst [vmem:[#allocation2 + $0x38] sm:$0xff] %v710
        $region84: #{vision_transformer_forward.3} parent=79 // pred_fallthru
          _
        %v719 = vlaneseq
        %v720 = vand.u32 %v719, 127
        %vm721 = vcmp.lt.s32.totalorder %v720, 32
        %vm722 = vcmp.lt.s32.totalorder %v720, 17
        %v723 = vld [vmem:[#allocation2] sm:$0xff]
        %v724 = vld [vmem:[#allocation2 + $0x8] sm:$0xff]
        %v725 = vld [vmem:[#allocation2 + $0x10] sm:$0xff]
        %v726 = vld [vmem:[#allocation2 + $0x18] sm:$0xff]
        %v727 = vld [vmem:[#allocation2 + $0x20] sm:$0xff]
        %v728 = vld [vmem:[#allocation2 + $0x28] sm:$0xff]
        %v729 = vld [vmem:[#allocation2 + $0x30] sm:$0xff]
        %v730 = vld [vmem:[#allocation2 + $0x38] sm:$0xff]
        %v731 = vpack.c.bf16 %v724, %v723
        %v732 = vpack.c.bf16 %v726, %v725
        %v733 = vpack.c.bf16 %v728, %v727
        %v734 = vpack.c.bf16 %v730, %v729
        %v735 = vld [vmem:[%s657] sm:$0xff]
        %v736 = vld [vmem:[%s657 + $0x8] sm:$0xff]
        %v737 = vld [vmem:[%s657 + $0x10] sm:$0xff]
        %v738 = vld [vmem:[%s657 + $0x18] sm:$0xff]
        %v739 = vld [vmem:[%s657 + $0x20] sm:$0xff]
        %v740 = vld [vmem:[%s657 + $0x28] sm:$0xff]
        %v741 = vld [vmem:[%s657 + $0x30] sm:$0xff]
        %v742 = vld [vmem:[%s657 + $0x38] sm:$0xff]
        %v743 = vld [vmem:[%s657 + $0x40] sm:$0xff]
        %v744 = vld [vmem:[%s657 + $0x48] sm:$0xff]
        %v745 = vld [vmem:[%s657 + $0x50] sm:$0xff]
        %v746 = vld [vmem:[%s657 + $0x58] sm:$0xff]
        %v747 = vld [vmem:[%s657 + $0x60] sm:$0xff]
        %v748 = vld [vmem:[%s657 + $0x68] sm:$0xff]
        %v749 = vld [vmem:[%s657 + $0x70] sm:$0xff]
        %v750 = vld [vmem:[%s657 + $0x78] sm:$0xff]
        %v751 = vld [vmem:[%s657 + $0x80] sm:$0xff]
        %v752 = vld [vmem:[%s657 + $0x88] sm:$0xff]
        %v753 = vld [vmem:[%s657 + $0x90] sm:$0xff]
        %v754 = vld [vmem:[%s657 + $0x98] sm:$0xff]
        %v755 = vld [vmem:[%s657 + $0xa0] sm:$0xff]
        %v756 = vld [vmem:[%s657 + $0xa8] sm:$0xff]
        %v757 = vld [vmem:[%s657 + $0xb0] sm:$0xff]
        %v758 = vld [vmem:[%s657 + $0xb8] sm:$0xff]
        %v759 = vld [vmem:[%s657 + $0xc0] sm:$0xff]
        %v760 = vld [vmem:[%s657 + $0xc8] sm:$0xff]
        %v761 = vld [vmem:[%s657 + $0xd0] sm:$0xff]
        %v762 = vld [vmem:[%s657 + $0xd8] sm:$0xff]
        %v763 = vld [vmem:[%s657 + $0xe0] sm:$0xff]
        %v764 = vld [vmem:[%s657 + $0xe8] sm:$0xff]
        %v765 = vld [vmem:[%s657 + $0xf0] sm:$0xff]
        %v766 = vld [vmem:[%s657 + $0xf8] sm:$0xff]
        %v767 = vld [vmem:[%s657 + $0x100] sm:$0xff]
        %v768 = vld [vmem:[%s657 + $0x108] sm:$0xff]
        %v769 = vld [vmem:[%s657 + $0x110] sm:$0xff]
        %v770 = vld [vmem:[%s657 + $0x118] sm:$0xff]
        %v771 = vld [vmem:[%s657 + $0x120] sm:$0xff]
        %v772 = vld [vmem:[%s657 + $0x128] sm:$0xff]
        %v773 = vld [vmem:[%s657 + $0x130] sm:$0xff]
        %v774 = vld [vmem:[%s657 + $0x138] sm:$0xff]
        %v775 = vld [vmem:[%s657 + $0x140] sm:$0xff]
        %v776 = vld [vmem:[%s657 + $0x148] sm:$0xff]
        %v777 = vld [vmem:[%s657 + $0x150] sm:$0xff]
        %v778 = vld [vmem:[%s657 + $0x158] sm:$0xff]
        %v779 = vld [vmem:[%s657 + $0x160] sm:$0xff]
        %v780 = vld [vmem:[%s657 + $0x168] sm:$0xff]
        %v781 = vld [vmem:[%s657 + $0x170] sm:$0xff]
        %v782 = vld [vmem:[%s657 + $0x178] sm:$0xff]
        %v783 = vld [vmem:[%s661] sm:$0x3f]
        %v785 = vlaneseq
        %v786 = vshrl.u32 %v785, 7
        %v787 = vsub.s32 0, %v786
        %v788 = vrot.slane %v783, %v787
        %v789 = vlaneseq
        %v790 = vshrl.u32 %v789, 7
        %v791 = vsub.s32 1, %v790
        %v792 = vrot.slane %v783, %v791
        %v793 = vlaneseq
        %v794 = vshrl.u32 %v793, 7
        %v795 = vsub.s32 2, %v794
        %v796 = vrot.slane %v783, %v795
        %v797 = vlaneseq
        %v798 = vshrl.u32 %v797, 7
        %v799 = vsub.s32 3, %v798
        %v800 = vrot.slane %v783, %v799
        %v801 = vlaneseq
        %v802 = vshrl.u32 %v801, 7
        %v803 = vsub.s32 4, %v802
        %v804 = vrot.slane %v783, %v803
        %v805 = vlaneseq
        %v806 = vshrl.u32 %v805, 7
        %v807 = vsub.s32 5, %v806
        %v808 = vrot.slane %v783, %v807
        %v863 = vunpack.c.l.b16 %v735
        %v864 = vunpack.c.h.b16 %v735
        %v865 = vunpack.c.l.b16 %v736
        %v866 = vunpack.c.h.b16 %v736
        %v867 = vunpack.c.l.b16 %v737
        %v868 = vunpack.c.h.b16 %v737
        %v869 = vunpack.c.l.b16 %v738
        %v870 = vunpack.c.h.b16 %v738
        %v871 = vunpack.c.l.b16 %v739
        %v872 = vunpack.c.h.b16 %v739
        %v873 = vunpack.c.l.b16 %v740
        %v874 = vunpack.c.h.b16 %v740
        %v875 = vunpack.c.l.b16 %v741
        %v876 = vunpack.c.h.b16 %v741
        %v877 = vunpack.c.l.b16 %v742
        %v878 = vunpack.c.h.b16 %v742
        %v879 = vunpack.c.l.b16 %v743
        %v880 = vunpack.c.h.b16 %v743
        %v881 = vunpack.c.l.b16 %v744
        %v882 = vunpack.c.h.b16 %v744
        %v883 = vunpack.c.l.b16 %v745
        %v884 = vunpack.c.h.b16 %v745
        %v885 = vunpack.c.l.b16 %v746
        %v886 = vunpack.c.h.b16 %v746
        %v887 = vunpack.c.l.b16 %v747
        %v888 = vunpack.c.h.b16 %v747
        %v889 = vunpack.c.l.b16 %v748
        %v890 = vunpack.c.h.b16 %v748
        %v891 = vunpack.c.l.b16 %v749
        %v892 = vunpack.c.h.b16 %v749
        %v893 = vunpack.c.l.b16 %v750
        %v894 = vunpack.c.h.b16 %v750
        %v895 = vunpack.c.l.b16 %v751
        %v896 = vunpack.c.h.b16 %v751
        %v897 = vunpack.c.l.b16 %v752
        %v898 = vunpack.c.h.b16 %v752
        %v899 = vunpack.c.l.b16 %v753
        %v900 = vunpack.c.h.b16 %v753
        %v901 = vunpack.c.l.b16 %v754
        %v902 = vunpack.c.h.b16 %v754
        %v903 = vunpack.c.l.b16 %v755
        %v904 = vunpack.c.h.b16 %v755
        %v905 = vunpack.c.l.b16 %v756
        %v906 = vunpack.c.h.b16 %v756
        %v907 = vunpack.c.l.b16 %v757
        %v908 = vunpack.c.h.b16 %v757
        %v909 = vunpack.c.l.b16 %v758
        %v910 = vunpack.c.h.b16 %v758
        %v911 = vunpack.c.l.b16 %v759
        %v912 = vunpack.c.h.b16 %v759
        %v913 = vunpack.c.l.b16 %v760
        %v914 = vunpack.c.h.b16 %v760
        %v915 = vunpack.c.l.b16 %v761
        %v916 = vunpack.c.h.b16 %v761
        %v917 = vunpack.c.l.b16 %v762
        %v918 = vunpack.c.h.b16 %v762
        %v919 = vunpack.c.l.b16 %v763
        %v920 = vunpack.c.h.b16 %v763
        %v921 = vunpack.c.l.b16 %v764
        %v922 = vunpack.c.h.b16 %v764
        %v923 = vunpack.c.l.b16 %v765
        %v924 = vunpack.c.h.b16 %v765
        %v925 = vunpack.c.l.b16 %v766
        %v926 = vunpack.c.h.b16 %v766
        %v927 = vunpack.c.l.b16 %v767
        %v928 = vunpack.c.h.b16 %v767
        %v929 = vunpack.c.l.b16 %v768
        %v930 = vunpack.c.h.b16 %v768
        %v931 = vunpack.c.l.b16 %v769
        %v932 = vunpack.c.h.b16 %v769
        %v933 = vunpack.c.l.b16 %v770
        %v934 = vunpack.c.h.b16 %v770
        %v935 = vunpack.c.l.b16 %v771
        %v936 = vunpack.c.h.b16 %v771
        %v937 = vunpack.c.l.b16 %v772
        %v938 = vunpack.c.h.b16 %v772
        %v939 = vunpack.c.l.b16 %v773
        %v940 = vunpack.c.h.b16 %v773
        %v941 = vunpack.c.l.b16 %v774
        %v942 = vunpack.c.h.b16 %v774
        %v943 = vunpack.c.l.b16 %v775
        %v944 = vunpack.c.h.b16 %v775
        %v945 = vunpack.c.l.b16 %v776
        %v946 = vunpack.c.h.b16 %v776
        %v947 = vunpack.c.l.b16 %v777
        %v948 = vunpack.c.h.b16 %v777
        %v949 = vunpack.c.l.b16 %v778
        %v950 = vunpack.c.h.b16 %v778
        %v951 = vunpack.c.l.b16 %v779
        %v952 = vunpack.c.h.b16 %v779
        %v953 = vunpack.c.l.b16 %v780
        %v954 = vunpack.c.h.b16 %v780
        %v955 = vunpack.c.l.b16 %v781
        %v956 = vunpack.c.h.b16 %v781
        %v957 = vunpack.c.l.b16 %v782
        %v958 = vunpack.c.h.b16 %v782
        %v959 = vpack.c.b16 %v869, %v863
        %v960 = vpack.c.b16 %v870, %v864
        %v961 = vpack.c.b16 %v871, %v865
        %v962 = vpack.c.b16 %v872, %v866
        %v963 = vpack.c.b16 %v873, %v867
        %v964 = vpack.c.b16 %v874, %v868
        %v965 = vpack.c.b16 %v881, %v875
        %v966 = vpack.c.b16 %v882, %v876
        %v967 = vpack.c.b16 %v883, %v877
        %v968 = vpack.c.b16 %v884, %v878
        %v969 = vpack.c.b16 %v885, %v879
        %v970 = vpack.c.b16 %v886, %v880
        %v971 = vpack.c.b16 %v893, %v887
        %v972 = vpack.c.b16 %v894, %v888
        %v973 = vpack.c.b16 %v895, %v889
        %v974 = vpack.c.b16 %v896, %v890
        %v975 = vpack.c.b16 %v897, %v891
        %v976 = vpack.c.b16 %v898, %v892
        %v977 = vpack.c.b16 %v905, %v899
        %v978 = vpack.c.b16 %v906, %v900
        %v979 = vpack.c.b16 %v907, %v901
        %v980 = vpack.c.b16 %v908, %v902
        %v981 = vpack.c.b16 %v909, %v903
        %v982 = vpack.c.b16 %v910, %v904
        %v983 = vpack.c.b16 %v917, %v911
        %v984 = vpack.c.b16 %v918, %v912
        %v985 = vpack.c.b16 %v919, %v913
        %v986 = vpack.c.b16 %v920, %v914
        %v987 = vpack.c.b16 %v921, %v915
        %v988 = vpack.c.b16 %v922, %v916
        %v989 = vpack.c.b16 %v929, %v923
        %v990 = vpack.c.b16 %v930, %v924
        %v991 = vpack.c.b16 %v931, %v925
        %v992 = vpack.c.b16 %v932, %v926
        %v993 = vpack.c.b16 %v933, %v927
        %v994 = vpack.c.b16 %v934, %v928
        %v995 = vpack.c.b16 %v941, %v935
        %v996 = vpack.c.b16 %v942, %v936
        %v997 = vpack.c.b16 %v943, %v937
        %v998 = vpack.c.b16 %v944, %v938
        %v999 = vpack.c.b16 %v945, %v939
        %v1000 = vpack.c.b16 %v946, %v940
        %v1001 = vpack.c.b16 %v953, %v947
        %v1002 = vpack.c.b16 %v954, %v948
        %v1003 = vpack.c.b16 %v955, %v949
        %v1004 = vpack.c.b16 %v956, %v950
        %v1005 = vpack.c.b16 %v957, %v951
        %v1006 = vpack.c.b16 %v958, %v952
        %1055 = vmatprep.subr.bf16.mxu0 %v1002
        %1056 = vmatpush1.bf16.msra.mxu0 %v1001
        %1057 = vmatprep.subr.bf16.mxu0 %v996
        %1058 = vmatpush1.bf16.msra.mxu0 %v995
        %1059 = vmatprep.subr.bf16.mxu0 %v990
        %1060 = vmatpush1.bf16.msra.mxu0 %v989
        %1061 = vmatprep.subr.bf16.mxu0 %v984
        %1062 = vmatpush1.bf16.msra.mxu0 %v983
        %1063 = vmatprep.subr.bf16.mxu0 %v978
        %1064 = vmatpush1.bf16.msra.mxu0 %v977
        %1065 = vmatprep.subr.bf16.mxu0 %v972
        %1066 = vmatpush1.bf16.msra.mxu0 %v971
        %1067 = vmatprep.subr.bf16.mxu0 %v966
        %1068 = vmatpush1.bf16.msra.mxu0 %v965
        %1069 = vmatprep.subr.bf16.mxu0 %v960
        %1070 = vmatpush1.bf16.msra.mxu0 %v959
        %1071 = vmatprep.subr.bf16.mxu0 0
        %1072 = vmatpush2.bf16.msra.mxu0 0
        %1073 = vmatprep.subr.bf16.mxu0 0
        %1074 = vmatpush2.bf16.msra.mxu0 0
        %1075 = vmatprep.subr.bf16.mxu0 0
        %1076 = vmatpush2.bf16.msra.mxu0 0
        %1077 = vmatprep.subr.bf16.mxu0 0
        %1078 = vmatpush2.bf16.msra.mxu0 0
        %1079 = vmatprep.subr.bf16.mxu0 0
        %1080 = vmatpush2.bf16.msra.mxu0 0
        %1081 = vmatprep.subr.bf16.mxu0 0
        %1082 = vmatpush2.bf16.msra.mxu0 0
        %1083 = vmatprep.subr.bf16.mxu0 0
        %1084 = vmatpush2.bf16.msra.mxu0 0
        %1085 = vmatprep.subr.bf16.mxu0 0
        %1086 = vmatpush2.bf16.msra.mxu0 0
        %1087 = vmatprep.mubr.bf16.mxu0 0
        %1088 = vmatmul.mubr.bf16.gmra.mxu0 %v731
        %v1089 = vpop.f32.mrf.mxu0
        %v1090 = vadd.f32 %v788, %v1089
        %v1091 = vpop.f32.mrf.mxu0
        %v1092 = vadd.f32 %v792, %v1091
        %v1093 = vpop.f32.mrf.mxu0
        %v1094 = vadd.f32 %v788, %v1093
        %v1095 = vpop.f32.mrf.mxu0
        %v1096 = vadd.f32 %v792, %v1095
        %1097 = vmatprep.mubr.bf16.mxu0 0
        %1098 = vmatmul.mubr.bf16.gmra.mxu0 %v732
        %v1099 = vpop.f32.mrf.mxu0
        %v1100 = vadd.f32 %v788, %v1099
        %v1101 = vpop.f32.mrf.mxu0
        %v1102 = vadd.f32 %v792, %v1101
        %v1103 = vpop.f32.mrf.mxu0
        %v1104 = vadd.f32 %v788, %v1103
        %v1105 = vpop.f32.mrf.mxu0
        %v1106 = vadd.f32 %v792, %v1105
        %1107 = vmatprep.mubr.bf16.mxu0 0
        %1108 = vmatmul.mubr.bf16.gmra.mxu0 %v733
        %v1109 = vpop.f32.mrf.mxu0
        %v1110 = vadd.f32 %v788, %v1109
        %v1111 = vpop.f32.mrf.mxu0
        %v1112 = vadd.f32 %v792, %v1111
        %v1113 = vpop.f32.mrf.mxu0
        %v1114 = vadd.f32 %v788, %v1113
        %v1115 = vpop.f32.mrf.mxu0
        %v1116 = vadd.f32 %v792, %v1115
        %1117 = vmatprep.mubr.bf16.mxu0 0
        %1118 = vmatmul.mubr.bf16.gmra.mxu0 %v734
        %v1119 = vpop.f32.mrf.mxu0
        %v1120 = vadd.f32 %v788, %v1119
        %v1121 = vpop.f32.mrf.mxu0
        %v1122 = vadd.f32 %v792, %v1121
        %v1123 = vpop.f32.mrf.mxu0
        %v1124 = vadd.f32 %v788, %v1123
        %v1125 = vpop.f32.mrf.mxu0
        %v1126 = vadd.f32 %v792, %v1125
        %1127 = vdwg.mxu0
        %1128 = vmatprep.subr.bf16.mxu0 %v1004
        %1129 = vmatpush1.bf16.msra.mxu0 %v1003
        %1130 = vmatprep.subr.bf16.mxu0 %v998
        %1131 = vmatpush1.bf16.msra.mxu0 %v997
        %1132 = vmatprep.subr.bf16.mxu0 %v992
        %1133 = vmatpush1.bf16.msra.mxu0 %v991
        %1134 = vmatprep.subr.bf16.mxu0 %v986
        %1135 = vmatpush1.bf16.msra.mxu0 %v985
        %1136 = vmatprep.subr.bf16.mxu0 %v980
        %1137 = vmatpush1.bf16.msra.mxu0 %v979
        %1138 = vmatprep.subr.bf16.mxu0 %v974
        %1139 = vmatpush1.bf16.msra.mxu0 %v973
        %1140 = vmatprep.subr.bf16.mxu0 %v968
        %1141 = vmatpush1.bf16.msra.mxu0 %v967
        %1142 = vmatprep.subr.bf16.mxu0 %v962
        %1143 = vmatpush1.bf16.msra.mxu0 %v961
        %1144 = vmatprep.subr.bf16.mxu0 0
        %1145 = vmatpush2.bf16.msra.mxu0 0
        %1146 = vmatprep.subr.bf16.mxu0 0
        %1147 = vmatpush2.bf16.msra.mxu0 0
        %1148 = vmatprep.subr.bf16.mxu0 0
        %1149 = vmatpush2.bf16.msra.mxu0 0
        %1150 = vmatprep.subr.bf16.mxu0 0
        %1151 = vmatpush2.bf16.msra.mxu0 0
        %1152 = vmatprep.subr.bf16.mxu0 0
        %1153 = vmatpush2.bf16.msra.mxu0 0
        %1154 = vmatprep.subr.bf16.mxu0 0
        %1155 = vmatpush2.bf16.msra.mxu0 0
        %1156 = vmatprep.subr.bf16.mxu0 0
        %1157 = vmatpush2.bf16.msra.mxu0 0
        %1158 = vmatprep.subr.bf16.mxu0 0
        %1159 = vmatpush2.bf16.msra.mxu0 0
        %1160 = vmatprep.mubr.bf16.mxu0 0
        %1161 = vmatmul.mubr.bf16.gmra.mxu0 %v731
        %v1162 = vpop.f32.mrf.mxu0
        %v1163 = vadd.f32 %v796, %v1162
        %v1164 = vpop.f32.mrf.mxu0
        %v1165 = vadd.f32 %v800, %v1164
        %v1166 = vpop.f32.mrf.mxu0
        %v1167 = vadd.f32 %v796, %v1166
        %v1168 = vpop.f32.mrf.mxu0
        %v1169 = vadd.f32 %v800, %v1168
        %1170 = vmatprep.mubr.bf16.mxu0 0
        %1171 = vmatmul.mubr.bf16.gmra.mxu0 %v732
        %v1172 = vpop.f32.mrf.mxu0
        %v1173 = vadd.f32 %v796, %v1172
        %v1174 = vpop.f32.mrf.mxu0
        %v1175 = vadd.f32 %v800, %v1174
        %v1176 = vpop.f32.mrf.mxu0
        %v1177 = vadd.f32 %v796, %v1176
        %v1178 = vpop.f32.mrf.mxu0
        %v1179 = vadd.f32 %v800, %v1178
        %1180 = vmatprep.mubr.bf16.mxu0 0
        %1181 = vmatmul.mubr.bf16.gmra.mxu0 %v733
        %v1182 = vpop.f32.mrf.mxu0
        %v1183 = vadd.f32 %v796, %v1182
        %v1184 = vpop.f32.mrf.mxu0
        %v1185 = vadd.f32 %v800, %v1184
        %v1186 = vpop.f32.mrf.mxu0
        %v1187 = vadd.f32 %v796, %v1186
        %v1188 = vpop.f32.mrf.mxu0
        %v1189 = vadd.f32 %v800, %v1188
        %1190 = vmatprep.mubr.bf16.mxu0 0
        %1191 = vmatmul.mubr.bf16.gmra.mxu0 %v734
        %v1192 = vpop.f32.mrf.mxu0
        %v1193 = vadd.f32 %v796, %v1192
        %v1194 = vpop.f32.mrf.mxu0
        %v1195 = vadd.f32 %v800, %v1194
        %v1196 = vpop.f32.mrf.mxu0
        %v1197 = vadd.f32 %v796, %v1196
        %v1198 = vpop.f32.mrf.mxu0
        %v1199 = vadd.f32 %v800, %v1198
        %1200 = vdwg.mxu0
        %1201 = vmatprep.subr.bf16.mxu0 %v1006
        %1202 = vmatpush1.bf16.msra.mxu0 %v1005
        %1203 = vmatprep.subr.bf16.mxu0 %v1000
        %1204 = vmatpush1.bf16.msra.mxu0 %v999
        %1205 = vmatprep.subr.bf16.mxu0 %v994
        %1206 = vmatpush1.bf16.msra.mxu0 %v993
        %1207 = vmatprep.subr.bf16.mxu0 %v988
        %1208 = vmatpush1.bf16.msra.mxu0 %v987
        %1209 = vmatprep.subr.bf16.mxu0 %v982
        %1210 = vmatpush1.bf16.msra.mxu0 %v981
        %1211 = vmatprep.subr.bf16.mxu0 %v976
        %1212 = vmatpush1.bf16.msra.mxu0 %v975
        %1213 = vmatprep.subr.bf16.mxu0 %v970
        %1214 = vmatpush1.bf16.msra.mxu0 %v969
        %1215 = vmatprep.subr.bf16.mxu0 %v964
        %1216 = vmatpush1.bf16.msra.mxu0 %v963
        %1217 = vmatprep.subr.bf16.mxu0 0
        %1218 = vmatpush2.bf16.msra.mxu0 0
        %1219 = vmatprep.subr.bf16.mxu0 0
        %1220 = vmatpush2.bf16.msra.mxu0 0
        %1221 = vmatprep.subr.bf16.mxu0 0
        %1222 = vmatpush2.bf16.msra.mxu0 0
        %1223 = vmatprep.subr.bf16.mxu0 0
        %1224 = vmatpush2.bf16.msra.mxu0 0
        %1225 = vmatprep.subr.bf16.mxu0 0
        %1226 = vmatpush2.bf16.msra.mxu0 0
        %1227 = vmatprep.subr.bf16.mxu0 0
        %1228 = vmatpush2.bf16.msra.mxu0 0
        %1229 = vmatprep.subr.bf16.mxu0 0
        %1230 = vmatpush2.bf16.msra.mxu0 0
        %1231 = vmatprep.subr.bf16.mxu0 0
        %1232 = vmatpush2.bf16.msra.mxu0 0
        %1233 = vmatprep.mubr.bf16.mxu0 0
        %1234 = vmatmul.mubr.bf16.gmra.mxu0 %v731
        %v1235 = vpop.f32.mrf.mxu0
        %v1236 = vadd.f32 %v804, %v1235
        %v1237 = vpop.f32.mrf.mxu0
        %v1238 = vadd.f32 %v808, %v1237
        %v1239 = vpop.f32.mrf.mxu0
        %v1240 = vadd.f32 %v804, %v1239
        %v1241 = vpop.f32.mrf.mxu0
        %v1242 = vadd.f32 %v808, %v1241
        %1243 = vmatprep.mubr.bf16.mxu0 0
        %1244 = vmatmul.mubr.bf16.gmra.mxu0 %v732
        %v1245 = vpop.f32.mrf.mxu0
        %v1246 = vadd.f32 %v804, %v1245
        %v1247 = vpop.f32.mrf.mxu0
        %v1248 = vadd.f32 %v808, %v1247
        %v1249 = vpop.f32.mrf.mxu0
        %v1250 = vadd.f32 %v804, %v1249
        %v1251 = vpop.f32.mrf.mxu0
        %v1252 = vadd.f32 %v808, %v1251
        %1253 = vmatprep.mubr.bf16.mxu0 0
        %1254 = vmatmul.mubr.bf16.gmra.mxu0 %v733
        %v1255 = vpop.f32.mrf.mxu0
        %v1256 = vadd.f32 %v804, %v1255
        %v1257 = vpop.f32.mrf.mxu0
        %v1258 = vadd.f32 %v808, %v1257
        %v1259 = vpop.f32.mrf.mxu0
        %v1260 = vadd.f32 %v804, %v1259
        %v1261 = vpop.f32.mrf.mxu0
        %v1262 = vadd.f32 %v808, %v1261
        %1263 = vmatprep.mubr.bf16.mxu0 0
        %1264 = vmatmul.mubr.bf16.gmra.mxu0 %v734
        %v1265 = vpop.f32.mrf.mxu0
        %v1266 = vadd.f32 %v804, %v1265
        %v1267 = vpop.f32.mrf.mxu0
        %v1268 = vadd.f32 %v808, %v1267
        %v1269 = vpop.f32.mrf.mxu0
        %v1270 = vadd.f32 %v804, %v1269
        %v1271 = vpop.f32.mrf.mxu0
        %v1272 = vadd.f32 %v808, %v1271
        %1273 = vdwg.mxu0
        %v1274 = vpack.c.bf16 %v1094, %v1090
        %v1275 = vpack.c.bf16 %v1104, %v1100
        %v1276 = vpack.c.bf16 %v1114, %v1110
        %v1277 = vpack.c.bf16 %v1124, %v1120
        %v1278 = vpack.c.bf16 %v1167, %v1163
        %v1279 = vpack.c.bf16 %v1177, %v1173
        %v1280 = vpack.c.bf16 %v1187, %v1183
        %v1281 = vpack.c.bf16 %v1197, %v1193
        %v1282 = vpack.c.bf16 %v1240, %v1236
        %v1283 = vpack.c.bf16 %v1250, %v1246
        %v1284 = vpack.c.bf16 %v1260, %v1256
        %v1285 = vpack.c.bf16 %v1270, %v1266
        %1286 = vmatprep.subr.bf16.mxu0 0
        %1287 = vmatpush1.bf16.xpose.msra.mxu0 0
        %1288 = vmatprep.subr.bf16.mxu0 0
        %1289 = vmatpush1.bf16.xpose.msra.mxu0 0
        %1290 = vmatprep.subr.bf16.mxu0 0
        %1291 = vmatpush1.bf16.xpose.msra.mxu0 0
        %1292 = vmatprep.subr.bf16.mxu0 0
        %1293 = vmatpush1.bf16.xpose.msra.mxu0 0
        %1294 = vmatprep.subr.bf16.mxu0 0
        %1295 = vmatpush1.bf16.xpose.msra.mxu0 0
        %1296 = vmatprep.subr.bf16.mxu0 0
        %1297 = vmatpush1.bf16.xpose.msra.mxu0 0
        %1298 = vmatprep.subr.bf16.mxu0 0
        %1299 = vmatpush1.bf16.xpose.msra.mxu0 %v1279
        %1300 = vmatprep.subr.bf16.mxu0 0
        %1301 = vmatpush1.bf16.xpose.msra.mxu0 %v1278
        %1302 = vmatprep.subr.bf16.mxu0 0
        %1303 = vmatpush2.bf16.xpose.msra.mxu0 0
        %1304 = vmatprep.subr.bf16.mxu0 0
        %1305 = vmatpush2.bf16.xpose.msra.mxu0 0
        %1306 = vmatprep.subr.bf16.mxu0 0
        %1307 = vmatpush2.bf16.xpose.msra.mxu0 0
        %1308 = vmatprep.subr.bf16.mxu0 0
        %1309 = vmatpush2.bf16.xpose.msra.mxu0 0
        %1310 = vmatprep.subr.bf16.mxu0 0
        %1311 = vmatpush2.bf16.xpose.msra.mxu0 0
        %1312 = vmatprep.subr.bf16.mxu0 0
        %1313 = vmatpush2.bf16.xpose.msra.mxu0 0
        %1314 = vmatprep.subr.bf16.mxu0 0
        %1315 = vmatpush2.bf16.xpose.msra.mxu0 0
        %1316 = vmatprep.subr.bf16.mxu0 0
        %1317 = vmatpush2.bf16.xpose.msra.mxu0 0
        %1318 = vmatprep.mubr.bf16.mxu0 0
        %1319 = vmatmul.mubr.bf16.gmra.mxu0 %v1274
        %v1320 = vpop.f32.mrf.mxu0
        %v1321 = vadd.f32 0.0, %v1320
        %v1322 = vpop.f32.mrf.mxu0
        %v1323 = vpop.f32.mrf.mxu0
        %v1324 = vadd.f32 0.0, %v1323
        %v1325 = vpop.f32.mrf.mxu0
        %1326 = vmatprep.mubr.bf16.mxu0 0
        %1327 = vmatmul.mubr.bf16.gmra.mxu0 %v1275
        %v1328 = vpop.f32.mrf.mxu0
        %v1329 = vadd.f32 0.0, %v1328
        %v1330 = vpop.f32.mrf.mxu0
        %v1331 = vpop.f32.mrf.mxu0
        %v1332 = vadd.f32 0.0, %v1331
        %v1333 = vpop.f32.mrf.mxu0
        %1334 = vdwg.mxu0
        %1335 = vmatprep.subr.bf16.mxu0 0
        %1336 = vmatpush1.bf16.xpose.msra.mxu0 0
        %1337 = vmatprep.subr.bf16.mxu0 0
        %1338 = vmatpush1.bf16.xpose.msra.mxu0 0
        %1339 = vmatprep.subr.bf16.mxu0 0
        %1340 = vmatpush1.bf16.xpose.msra.mxu0 0
        %1341 = vmatprep.subr.bf16.mxu0 0
        %1342 = vmatpush1.bf16.xpose.msra.mxu0 0
        %1343 = vmatprep.subr.bf16.mxu0 0
        %1344 = vmatpush1.bf16.xpose.msra.mxu0 0
        %1345 = vmatprep.subr.bf16.mxu0 0
        %1346 = vmatpush1.bf16.xpose.msra.mxu0 0
        %1347 = vmatprep.subr.bf16.mxu0 0
        %1348 = vmatpush1.bf16.xpose.msra.mxu0 %v1281
        %1349 = vmatprep.subr.bf16.mxu0 0
        %1350 = vmatpush1.bf16.xpose.msra.mxu0 %v1280
        %1351 = vmatprep.subr.bf16.mxu0 0
        %1352 = vmatpush2.bf16.xpose.msra.mxu0 0
        %1353 = vmatprep.subr.bf16.mxu0 0
        %1354 = vmatpush2.bf16.xpose.msra.mxu0 0
        %1355 = vmatprep.subr.bf16.mxu0 0
        %1356 = vmatpush2.bf16.xpose.msra.mxu0 0
        %1357 = vmatprep.subr.bf16.mxu0 0
        %1358 = vmatpush2.bf16.xpose.msra.mxu0 0
        %1359 = vmatprep.subr.bf16.mxu0 0
        %1360 = vmatpush2.bf16.xpose.msra.mxu0 0
        %1361 = vmatprep.subr.bf16.mxu0 0
        %1362 = vmatpush2.bf16.xpose.msra.mxu0 0
        %1363 = vmatprep.subr.bf16.mxu0 0
        %1364 = vmatpush2.bf16.xpose.msra.mxu0 0
        %1365 = vmatprep.subr.bf16.mxu0 0
        %1366 = vmatpush2.bf16.xpose.msra.mxu0 0
        %1367 = vmatprep.mubr.bf16.mxu0 0
        %1368 = vmatmul.mubr.bf16.gmra.mxu0 %v1276
        %v1369 = vpop.f32.mrf.mxu0
        %v1370 = vadd.f32 0.0, %v1369
        %v1371 = vpop.f32.mrf.mxu0
        %v1372 = vpop.f32.mrf.mxu0
        %v1373 = vadd.f32 0.0, %v1372
        %v1374 = vpop.f32.mrf.mxu0
        %1375 = vmatprep.mubr.bf16.mxu0 0
        %1376 = vmatmul.mubr.bf16.gmra.mxu0 %v1277
        %v1377 = vpop.f32.mrf.mxu0
        %v1378 = vadd.f32 0.0, %v1377
        %v1379 = vpop.f32.mrf.mxu0
        %v1380 = vpop.f32.mrf.mxu0
        %v1381 = vadd.f32 0.0, %v1380
        %v1382 = vpop.f32.mrf.mxu0
        %1383 = vdwg.mxu0
        %v1384 = vsel %vm722, 1, 0
        %vm1385 = vcmp.eq.s32.totalorder %v1384, 1
        %v1386 = vsel %vm1385, %v1321, -1e+30
        %v1387 = vsel %vm1385, %v1324, -1e+30
        %v1388 = vsel %vm1385, %v1329, -1e+30
        %v1389 = vsel %vm1385, %v1332, -1e+30
        %v1390 = vsel %vm1385, %v1370, -1e+30
        %v1391 = vsel %vm1385, %v1373, -1e+30
        %v1392 = vsel %vm1385, %v1378, -1e+30
        %v1393 = vsel %vm1385, %v1381, -1e+30
        %vm1394 = vcmask 261120
        %v1395 = vsel %vm1394, %v1386, -inf
        %1396 = vmax.xlane.f32.xlu0 %v1395
        %v1397 = vpop.xlane.xlu0 %1396
        %v1398 = vsel %vm1394, %v1387, -inf
        %1399 = vmax.xlane.f32.xlu0 %v1398
        %v1400 = vpop.xlane.xlu0 %1399
        %v1401 = vsel %vm1394, %v1388, -inf
        %1402 = vmax.xlane.f32.xlu0 %v1401
        %v1403 = vpop.xlane.xlu0 %1402
        %v1404 = vsel %vm1394, %v1389, -inf
        %1405 = vmax.xlane.f32.xlu0 %v1404
        %v1406 = vpop.xlane.xlu0 %1405
        %v1407 = vsel %vm1394, %v1390, -inf
        %1408 = vmax.xlane.f32.xlu0 %v1407
        %v1409 = vpop.xlane.xlu0 %1408
        %v1410 = vsel %vm1394, %v1391, -inf
        %1411 = vmax.xlane.f32.xlu0 %v1410
        %v1412 = vpop.xlane.xlu0 %1411
        %v1413 = vsel %vm1394, %v1392, -inf
        %1414 = vmax.xlane.f32.xlu0 %v1413
        %v1415 = vpop.xlane.xlu0 %1414
        %v1416 = vsel %vm1394, %v1393, -inf
        %1417 = vmax.xlane.f32.xlu0 %v1416
        %v1418 = vpop.xlane.xlu0 %1417
        %v1419 = vsub.f32 %v1386, %v1397
        %v1420 = vsub.f32 %v1387, %v1400
        %v1421 = vsub.f32 %v1388, %v1403
        %v1422 = vsub.f32 %v1389, %v1406
        %v1423 = vsub.f32 %v1390, %v1409
        %v1424 = vsub.f32 %v1391, %v1412
        %v1425 = vsub.f32 %v1392, %v1415
        %v1426 = vsub.f32 %v1393, %v1418
        %v1427 = vmul.f32 %v1419, 1.442695
        %v1428 = vpow.pop %v1427
        %v1429 = vmul.f32 %v1420, 1.442695
        %v1430 = vpow.pop %v1429
        %v1431 = vmul.f32 %v1421, 1.442695
        %v1432 = vpow.pop %v1431
        %v1433 = vmul.f32 %v1422, 1.442695
        %v1434 = vpow.pop %v1433
        %v1435 = vmul.f32 %v1423, 1.442695
        %v1436 = vpow.pop %v1435
        %v1437 = vmul.f32 %v1424, 1.442695
        %v1438 = vpow.pop %v1437
        %v1439 = vmul.f32 %v1425, 1.442695
        %v1440 = vpow.pop %v1439
        %v1441 = vmul.f32 %v1426, 1.442695
        %v1442 = vpow.pop %v1441
        %v1443 = vsel %vm1394, %v1428, 0.0
        %1444 = vadd.xlane.f32.xlu0 %v1443
        %v1445 = vpop.xlane.xlu0 %1444
        %v1446 = vsel %vm1394, %v1430, 0.0
        %1447 = vadd.xlane.f32.xlu0 %v1446
        %v1448 = vpop.xlane.xlu0 %1447
        %v1449 = vsel %vm1394, %v1432, 0.0
        %1450 = vadd.xlane.f32.xlu0 %v1449
        %v1451 = vpop.xlane.xlu0 %1450
        %v1452 = vsel %vm1394, %v1434, 0.0
        %1453 = vadd.xlane.f32.xlu0 %v1452
        %v1454 = vpop.xlane.xlu0 %1453
        %v1455 = vsel %vm1394, %v1436, 0.0
        %1456 = vadd.xlane.f32.xlu0 %v1455
        %v1457 = vpop.xlane.xlu0 %1456
        %v1458 = vsel %vm1394, %v1438, 0.0
        %1459 = vadd.xlane.f32.xlu0 %v1458
        %v1460 = vpop.xlane.xlu0 %1459
        %v1461 = vsel %vm1394, %v1440, 0.0
        %1462 = vadd.xlane.f32.xlu0 %v1461
        %v1463 = vpop.xlane.xlu0 %1462
        %v1464 = vsel %vm1394, %v1442, 0.0
        %1465 = vadd.xlane.f32.xlu0 %v1464
        %v1466 = vpop.xlane.xlu0 %1465
        %v1467 = vrcp.pop %v1445
        %v1468 = vrcp.pop %v1448
        %v1469 = vrcp.pop %v1451
        %v1470 = vrcp.pop %v1454
        %v1471 = vrcp.pop %v1457
        %v1472 = vrcp.pop %v1460
        %v1473 = vrcp.pop %v1463
        %v1474 = vrcp.pop %v1466
        %v1475 = vmul.f32 %v1428, %v1467
        %v1476 = vmul.f32 %v1430, %v1468
        %v1477 = vmul.f32 %v1432, %v1469
        %v1478 = vmul.f32 %v1434, %v1470
        %v1479 = vmul.f32 %v1436, %v1471
        %v1480 = vmul.f32 %v1438, %v1472
        %v1481 = vmul.f32 %v1440, %v1473
        %v1482 = vmul.f32 %v1442, %v1474
        %v1483 = vpack.c.bf16 %v1476, %v1475
        %v1484 = vpack.c.bf16 %v1478, %v1477
        %v1485 = vpack.c.bf16 %v1480, %v1479
        %v1486 = vpack.c.bf16 %v1482, %v1481
        %v1488 = vsel %vm1394, %v1483, 0
        %v1491 = vsel %vm1394, %v1484, 0
        %1493 = vmatprep.subr.bf16.mxu0 0
        %1494 = vmatpush1.bf16.msra.mxu0 0
        %1495 = vmatprep.subr.bf16.mxu0 0
        %1496 = vmatpush1.bf16.msra.mxu0 0
        %1497 = vmatprep.subr.bf16.mxu0 0
        %1498 = vmatpush1.bf16.msra.mxu0 0
        %1499 = vmatprep.subr.bf16.mxu0 0
        %1500 = vmatpush1.bf16.msra.mxu0 0
        %1501 = vmatprep.subr.bf16.mxu0 0
        %1502 = vmatpush1.bf16.msra.mxu0 0
        %1503 = vmatprep.subr.bf16.mxu0 0
        %1504 = vmatpush1.bf16.msra.mxu0 0
        %1505 = vmatprep.subr.bf16.mxu0 0
        %1506 = vmatpush1.bf16.msra.mxu0 %v1283
        %1507 = vmatprep.subr.bf16.mxu0 0
        %1508 = vmatpush1.bf16.msra.mxu0 %v1282
        %1509 = vmatprep.subr.bf16.mxu0 0
        %1510 = vmatpush2.bf16.msra.mxu0 0
        %1511 = vmatprep.subr.bf16.mxu0 0
        %1512 = vmatpush2.bf16.msra.mxu0 0
        %1513 = vmatprep.subr.bf16.mxu0 0
        %1514 = vmatpush2.bf16.msra.mxu0 0
        %1515 = vmatprep.subr.bf16.mxu0 0
        %1516 = vmatpush2.bf16.msra.mxu0 0
        %1517 = vmatprep.subr.bf16.mxu0 0
        %1518 = vmatpush2.bf16.msra.mxu0 0
        %1519 = vmatprep.subr.bf16.mxu0 0
        %1520 = vmatpush2.bf16.msra.mxu0 0
        %1521 = vmatprep.subr.bf16.mxu0 0
        %1522 = vmatpush2.bf16.msra.mxu0 0
        %1523 = vmatprep.subr.bf16.mxu0 0
        %1524 = vmatpush2.bf16.msra.mxu0 0
        %1525 = vmatprep.mubr.bf16.mxu0 0
        %1526 = vmatmul.mubr.bf16.gmra.mxu0 %v1488
        %v1527 = vpop.f32.mrf.mxu0
        %v1528 = vadd.f32 0.0, %v1527
        %v1529 = vpop.f32.mrf.mxu0
        %v1530 = vpop.f32.mrf.mxu0
        %v1531 = vadd.f32 0.0, %v1530
        %v1532 = vpop.f32.mrf.mxu0
        %1533 = vmatprep.mubr.bf16.mxu0 0
        %1534 = vmatmul.mubr.bf16.gmra.mxu0 %v1491
        %v1535 = vpop.f32.mrf.mxu0
        %v1536 = vadd.f32 0.0, %v1535
        %v1537 = vpop.f32.mrf.mxu0
        %v1538 = vpop.f32.mrf.mxu0
        %v1539 = vadd.f32 0.0, %v1538
        %v1540 = vpop.f32.mrf.mxu0
        %1541 = vdwg.mxu0
        %v1543 = vsel %vm1394, %v1485, 0
        %v1546 = vsel %vm1394, %v1486, 0
        %1548 = vmatprep.subr.bf16.mxu0 0
        %1549 = vmatpush1.bf16.msra.mxu0 0
        %1550 = vmatprep.subr.bf16.mxu0 0
        %1551 = vmatpush1.bf16.msra.mxu0 0
        %1552 = vmatprep.subr.bf16.mxu0 0
        %1553 = vmatpush1.bf16.msra.mxu0 0
        %1554 = vmatprep.subr.bf16.mxu0 0
        %1555 = vmatpush1.bf16.msra.mxu0 0
        %1556 = vmatprep.subr.bf16.mxu0 0
        %1557 = vmatpush1.bf16.msra.mxu0 0
        %1558 = vmatprep.subr.bf16.mxu0 0
        %1559 = vmatpush1.bf16.msra.mxu0 0
        %1560 = vmatprep.subr.bf16.mxu0 0
        %1561 = vmatpush1.bf16.msra.mxu0 %v1285
        %1562 = vmatprep.subr.bf16.mxu0 0
        %1563 = vmatpush1.bf16.msra.mxu0 %v1284
        %1564 = vmatprep.subr.bf16.mxu0 0
        %1565 = vmatpush2.bf16.msra.mxu0 0
        %1566 = vmatprep.subr.bf16.mxu0 0
        %1567 = vmatpush2.bf16.msra.mxu0 0
        %1568 = vmatprep.subr.bf16.mxu0 0
        %1569 = vmatpush2.bf16.msra.mxu0 0
        %1570 = vmatprep.subr.bf16.mxu0 0
        %1571 = vmatpush2.bf16.msra.mxu0 0
        %1572 = vmatprep.subr.bf16.mxu0 0
        %1573 = vmatpush2.bf16.msra.mxu0 0
        %1574 = vmatprep.subr.bf16.mxu0 0
        %1575 = vmatpush2.bf16.msra.mxu0 0
        %1576 = vmatprep.subr.bf16.mxu0 0
        %1577 = vmatpush2.bf16.msra.mxu0 0
        %1578 = vmatprep.subr.bf16.mxu0 0
        %1579 = vmatpush2.bf16.msra.mxu0 0
        %1580 = vmatprep.mubr.bf16.mxu0 0
        %1581 = vmatmul.mubr.bf16.gmra.mxu0 %v1543
        %v1582 = vpop.f32.mrf.mxu0
        %v1583 = vadd.f32 0.0, %v1582
        %v1584 = vpop.f32.mrf.mxu0
        %v1585 = vpop.f32.mrf.mxu0
        %v1586 = vadd.f32 0.0, %v1585
        %v1587 = vpop.f32.mrf.mxu0
        %1588 = vmatprep.mubr.bf16.mxu0 0
        %1589 = vmatmul.mubr.bf16.gmra.mxu0 %v1546
        %v1590 = vpop.f32.mrf.mxu0
        %v1591 = vadd.f32 0.0, %v1590
        %v1592 = vpop.f32.mrf.mxu0
        %v1593 = vpop.f32.mrf.mxu0
        %v1594 = vadd.f32 0.0, %v1593
        %v1595 = vpop.f32.mrf.mxu0
        %1596 = vdwg.mxu0
        %v1597 = vpack.c.bf16 %v1096, %v1092
        %v1598 = vpack.c.bf16 %v1106, %v1102
        %v1599 = vpack.c.bf16 %v1116, %v1112
        %v1600 = vpack.c.bf16 %v1126, %v1122
        %v1601 = vpack.c.bf16 %v1169, %v1165
        %v1602 = vpack.c.bf16 %v1179, %v1175
        %v1603 = vpack.c.bf16 %v1189, %v1185
        %v1604 = vpack.c.bf16 %v1199, %v1195
        %v1605 = vpack.c.bf16 %v1242, %v1238
        %v1606 = vpack.c.bf16 %v1252, %v1248
        %v1607 = vpack.c.bf16 %v1262, %v1258
        %v1608 = vpack.c.bf16 %v1272, %v1268
        %1609 = vmatprep.subr.bf16.mxu0 0
        %1610 = vmatpush1.bf16.xpose.msra.mxu0 0
        %1611 = vmatprep.subr.bf16.mxu0 0
        %1612 = vmatpush1.bf16.xpose.msra.mxu0 0
        %1613 = vmatprep.subr.bf16.mxu0 0
        %1614 = vmatpush1.bf16.xpose.msra.mxu0 0
        %1615 = vmatprep.subr.bf16.mxu0 0
        %1616 = vmatpush1.bf16.xpose.msra.mxu0 0
        %1617 = vmatprep.subr.bf16.mxu0 0
        %1618 = vmatpush1.bf16.xpose.msra.mxu0 0
        %1619 = vmatprep.subr.bf16.mxu0 0
        %1620 = vmatpush1.bf16.xpose.msra.mxu0 0
        %1621 = vmatprep.subr.bf16.mxu0 0
        %1622 = vmatpush1.bf16.xpose.msra.mxu0 %v1602
        %1623 = vmatprep.subr.bf16.mxu0 0
        %1624 = vmatpush1.bf16.xpose.msra.mxu0 %v1601
        %1625 = vmatprep.subr.bf16.mxu0 0
        %1626 = vmatpush2.bf16.xpose.msra.mxu0 0
        %1627 = vmatprep.subr.bf16.mxu0 0
        %1628 = vmatpush2.bf16.xpose.msra.mxu0 0
        %1629 = vmatprep.subr.bf16.mxu0 0
        %1630 = vmatpush2.bf16.xpose.msra.mxu0 0
        %1631 = vmatprep.subr.bf16.mxu0 0
        %1632 = vmatpush2.bf16.xpose.msra.mxu0 0
        %1633 = vmatprep.subr.bf16.mxu0 0
        %1634 = vmatpush2.bf16.xpose.msra.mxu0 0
        %1635 = vmatprep.subr.bf16.mxu0 0
        %1636 = vmatpush2.bf16.xpose.msra.mxu0 0
        %1637 = vmatprep.subr.bf16.mxu0 0
        %1638 = vmatpush2.bf16.xpose.msra.mxu0 0
        %1639 = vmatprep.subr.bf16.mxu0 0
        %1640 = vmatpush2.bf16.xpose.msra.mxu0 0
        %1641 = vmatprep.mubr.bf16.mxu0 0
        %1642 = vmatmul.mubr.bf16.gmra.mxu0 %v1597
        %v1643 = vpop.f32.mrf.mxu0
        %v1644 = vadd.f32 0.0, %v1643
        %v1645 = vpop.f32.mrf.mxu0
        %v1646 = vpop.f32.mrf.mxu0
        %v1647 = vadd.f32 0.0, %v1646
        %v1648 = vpop.f32.mrf.mxu0
        %1649 = vmatprep.mubr.bf16.mxu0 0
        %1650 = vmatmul.mubr.bf16.gmra.mxu0 %v1598
        %v1651 = vpop.f32.mrf.mxu0
        %v1652 = vadd.f32 0.0, %v1651
        %v1653 = vpop.f32.mrf.mxu0
        %v1654 = vpop.f32.mrf.mxu0
        %v1655 = vadd.f32 0.0, %v1654
        %v1656 = vpop.f32.mrf.mxu0
        %1657 = vdwg.mxu0
        %1658 = vmatprep.subr.bf16.mxu0 0
        %1659 = vmatpush1.bf16.xpose.msra.mxu0 0
        %1660 = vmatprep.subr.bf16.mxu0 0
        %1661 = vmatpush1.bf16.xpose.msra.mxu0 0
        %1662 = vmatprep.subr.bf16.mxu0 0
        %1663 = vmatpush1.bf16.xpose.msra.mxu0 0
        %1664 = vmatprep.subr.bf16.mxu0 0
        %1665 = vmatpush1.bf16.xpose.msra.mxu0 0
        %1666 = vmatprep.subr.bf16.mxu0 0
        %1667 = vmatpush1.bf16.xpose.msra.mxu0 0
        %1668 = vmatprep.subr.bf16.mxu0 0
        %1669 = vmatpush1.bf16.xpose.msra.mxu0 0
        %1670 = vmatprep.subr.bf16.mxu0 0
        %1671 = vmatpush1.bf16.xpose.msra.mxu0 %v1604
        %1672 = vmatprep.subr.bf16.mxu0 0
        %1673 = vmatpush1.bf16.xpose.msra.mxu0 %v1603
        %1674 = vmatprep.subr.bf16.mxu0 0
        %1675 = vmatpush2.bf16.xpose.msra.mxu0 0
        %1676 = vmatprep.subr.bf16.mxu0 0
        %1677 = vmatpush2.bf16.xpose.msra.mxu0 0
        %1678 = vmatprep.subr.bf16.mxu0 0
        %1679 = vmatpush2.bf16.xpose.msra.mxu0 0
        %1680 = vmatprep.subr.bf16.mxu0 0
        %1681 = vmatpush2.bf16.xpose.msra.mxu0 0
        %1682 = vmatprep.subr.bf16.mxu0 0
        %1683 = vmatpush2.bf16.xpose.msra.mxu0 0
        %1684 = vmatprep.subr.bf16.mxu0 0
        %1685 = vmatpush2.bf16.xpose.msra.mxu0 0
        %1686 = vmatprep.subr.bf16.mxu0 0
        %1687 = vmatpush2.bf16.xpose.msra.mxu0 0
        %1688 = vmatprep.subr.bf16.mxu0 0
        %1689 = vmatpush2.bf16.xpose.msra.mxu0 0
        %1690 = vmatprep.mubr.bf16.mxu0 0
        %1691 = vmatmul.mubr.bf16.gmra.mxu0 %v1599
        %v1692 = vpop.f32.mrf.mxu0
        %v1693 = vadd.f32 0.0, %v1692
        %v1694 = vpop.f32.mrf.mxu0
        %v1695 = vpop.f32.mrf.mxu0
        %v1696 = vadd.f32 0.0, %v1695
        %v1697 = vpop.f32.mrf.mxu0
        %1698 = vmatprep.mubr.bf16.mxu0 0
        %1699 = vmatmul.mubr.bf16.gmra.mxu0 %v1600
        %v1700 = vpop.f32.mrf.mxu0
        %v1701 = vadd.f32 0.0, %v1700
        %v1702 = vpop.f32.mrf.mxu0
        %v1703 = vpop.f32.mrf.mxu0
        %v1704 = vadd.f32 0.0, %v1703
        %v1705 = vpop.f32.mrf.mxu0
        %1706 = vdwg.mxu0
        %v1707 = vsel %vm1385, %v1644, -1e+30
        %v1708 = vsel %vm1385, %v1647, -1e+30
        %v1709 = vsel %vm1385, %v1652, -1e+30
        %v1710 = vsel %vm1385, %v1655, -1e+30
        %v1711 = vsel %vm1385, %v1693, -1e+30
        %v1712 = vsel %vm1385, %v1696, -1e+30
        %v1713 = vsel %vm1385, %v1701, -1e+30
        %v1714 = vsel %vm1385, %v1704, -1e+30
        %v1715 = vsel %vm1394, %v1707, -inf
        %1716 = vmax.xlane.f32.xlu0 %v1715
        %v1717 = vpop.xlane.xlu0 %1716
        %v1718 = vsel %vm1394, %v1708, -inf
        %1719 = vmax.xlane.f32.xlu0 %v1718
        %v1720 = vpop.xlane.xlu0 %1719
        %v1721 = vsel %vm1394, %v1709, -inf
        %1722 = vmax.xlane.f32.xlu0 %v1721
        %v1723 = vpop.xlane.xlu0 %1722
        %v1724 = vsel %vm1394, %v1710, -inf
        %1725 = vmax.xlane.f32.xlu0 %v1724
        %v1726 = vpop.xlane.xlu0 %1725
        %v1727 = vsel %vm1394, %v1711, -inf
        %1728 = vmax.xlane.f32.xlu0 %v1727
        %v1729 = vpop.xlane.xlu0 %1728
        %v1730 = vsel %vm1394, %v1712, -inf
        %1731 = vmax.xlane.f32.xlu0 %v1730
        %v1732 = vpop.xlane.xlu0 %1731
        %v1733 = vsel %vm1394, %v1713, -inf
        %1734 = vmax.xlane.f32.xlu0 %v1733
        %v1735 = vpop.xlane.xlu0 %1734
        %v1736 = vsel %vm1394, %v1714, -inf
        %1737 = vmax.xlane.f32.xlu0 %v1736
        %v1738 = vpop.xlane.xlu0 %1737
        %v1739 = vsub.f32 %v1707, %v1717
        %v1740 = vsub.f32 %v1708, %v1720
        %v1741 = vsub.f32 %v1709, %v1723
        %v1742 = vsub.f32 %v1710, %v1726
        %v1743 = vsub.f32 %v1711, %v1729
        %v1744 = vsub.f32 %v1712, %v1732
        %v1745 = vsub.f32 %v1713, %v1735
        %v1746 = vsub.f32 %v1714, %v1738
        %v1747 = vmul.f32 %v1739, 1.442695
        %v1748 = vpow.pop %v1747
        %v1749 = vmul.f32 %v1740, 1.442695
        %v1750 = vpow.pop %v1749
        %v1751 = vmul.f32 %v1741, 1.442695
        %v1752 = vpow.pop %v1751
        %v1753 = vmul.f32 %v1742, 1.442695
        %v1754 = vpow.pop %v1753
        %v1755 = vmul.f32 %v1743, 1.442695
        %v1756 = vpow.pop %v1755
        %v1757 = vmul.f32 %v1744, 1.442695
        %v1758 = vpow.pop %v1757
        %v1759 = vmul.f32 %v1745, 1.442695
        %v1760 = vpow.pop %v1759
        %v1761 = vmul.f32 %v1746, 1.442695
        %v1762 = vpow.pop %v1761
        %v1763 = vsel %vm1394, %v1748, 0.0
        %1764 = vadd.xlane.f32.xlu0 %v1763
        %v1765 = vpop.xlane.xlu0 %1764
        %v1766 = vsel %vm1394, %v1750, 0.0
        %1767 = vadd.xlane.f32.xlu0 %v1766
        %v1768 = vpop.xlane.xlu0 %1767
        %v1769 = vsel %vm1394, %v1752, 0.0
        %1770 = vadd.xlane.f32.xlu0 %v1769
        %v1771 = vpop.xlane.xlu0 %1770
        %v1772 = vsel %vm1394, %v1754, 0.0
        %1773 = vadd.xlane.f32.xlu0 %v1772
        %v1774 = vpop.xlane.xlu0 %1773
        %v1775 = vsel %vm1394, %v1756, 0.0
        %1776 = vadd.xlane.f32.xlu0 %v1775
        %v1777 = vpop.xlane.xlu0 %1776
        %v1778 = vsel %vm1394, %v1758, 0.0
        %1779 = vadd.xlane.f32.xlu0 %v1778
        %v1780 = vpop.xlane.xlu0 %1779
        %v1781 = vsel %vm1394, %v1760, 0.0
        %1782 = vadd.xlane.f32.xlu0 %v1781
        %v1783 = vpop.xlane.xlu0 %1782
        %v1784 = vsel %vm1394, %v1762, 0.0
        %1785 = vadd.xlane.f32.xlu0 %v1784
        %v1786 = vpop.xlane.xlu0 %1785
        %v1787 = vrcp.pop %v1765
        %v1788 = vrcp.pop %v1768
        %v1789 = vrcp.pop %v1771
        %v1790 = vrcp.pop %v1774
        %v1791 = vrcp.pop %v1777
        %v1792 = vrcp.pop %v1780
        %v1793 = vrcp.pop %v1783
        %v1794 = vrcp.pop %v1786
        %v1795 = vmul.f32 %v1748, %v1787
        %v1796 = vmul.f32 %v1750, %v1788
        %v1797 = vmul.f32 %v1752, %v1789
        %v1798 = vmul.f32 %v1754, %v1790
        %v1799 = vmul.f32 %v1756, %v1791
        %v1800 = vmul.f32 %v1758, %v1792
        %v1801 = vmul.f32 %v1760, %v1793
        %v1802 = vmul.f32 %v1762, %v1794
        %v1803 = vpack.c.bf16 %v1796, %v1795
        %v1804 = vpack.c.bf16 %v1798, %v1797
        %v1805 = vpack.c.bf16 %v1800, %v1799
        %v1806 = vpack.c.bf16 %v1802, %v1801
        %v1808 = vsel %vm1394, %v1803, 0
        %v1811 = vsel %vm1394, %v1804, 0
        %1813 = vmatprep.subr.bf16.mxu0 0
        %1814 = vmatpush1.bf16.msra.mxu0 0
        %1815 = vmatprep.subr.bf16.mxu0 0
        %1816 = vmatpush1.bf16.msra.mxu0 0
        %1817 = vmatprep.subr.bf16.mxu0 0
        %1818 = vmatpush1.bf16.msra.mxu0 0
        %1819 = vmatprep.subr.bf16.mxu0 0
        %1820 = vmatpush1.bf16.msra.mxu0 0
        %1821 = vmatprep.subr.bf16.mxu0 0
        %1822 = vmatpush1.bf16.msra.mxu0 0
        %1823 = vmatprep.subr.bf16.mxu0 0
        %1824 = vmatpush1.bf16.msra.mxu0 0
        %1825 = vmatprep.subr.bf16.mxu0 0
        %1826 = vmatpush1.bf16.msra.mxu0 %v1606
        %1827 = vmatprep.subr.bf16.mxu0 0
        %1828 = vmatpush1.bf16.msra.mxu0 %v1605
        %1829 = vmatprep.subr.bf16.mxu0 0
        %1830 = vmatpush2.bf16.msra.mxu0 0
        %1831 = vmatprep.subr.bf16.mxu0 0
        %1832 = vmatpush2.bf16.msra.mxu0 0
        %1833 = vmatprep.subr.bf16.mxu0 0
        %1834 = vmatpush2.bf16.msra.mxu0 0
        %1835 = vmatprep.subr.bf16.mxu0 0
        %1836 = vmatpush2.bf16.msra.mxu0 0
        %1837 = vmatprep.subr.bf16.mxu0 0
        %1838 = vmatpush2.bf16.msra.mxu0 0
        %1839 = vmatprep.subr.bf16.mxu0 0
        %1840 = vmatpush2.bf16.msra.mxu0 0
        %1841 = vmatprep.subr.bf16.mxu0 0
        %1842 = vmatpush2.bf16.msra.mxu0 0
        %1843 = vmatprep.subr.bf16.mxu0 0
        %1844 = vmatpush2.bf16.msra.mxu0 0
        %1845 = vmatprep.mubr.bf16.mxu0 0
        %1846 = vmatmul.mubr.bf16.gmra.mxu0 %v1808
        %v1847 = vpop.f32.mrf.mxu0
        %v1848 = vadd.f32 0.0, %v1847
        %v1849 = vpop.f32.mrf.mxu0
        %v1850 = vpop.f32.mrf.mxu0
        %v1851 = vadd.f32 0.0, %v1850
        %v1852 = vpop.f32.mrf.mxu0
        %1853 = vmatprep.mubr.bf16.mxu0 0
        %1854 = vmatmul.mubr.bf16.gmra.mxu0 %v1811
        %v1855 = vpop.f32.mrf.mxu0
        %v1856 = vadd.f32 0.0, %v1855
        %v1857 = vpop.f32.mrf.mxu0
        %v1858 = vpop.f32.mrf.mxu0
        %v1859 = vadd.f32 0.0, %v1858
        %v1860 = vpop.f32.mrf.mxu0
        %1861 = vdwg.mxu0
        %v1863 = vsel %vm1394, %v1805, 0
        %v1866 = vsel %vm1394, %v1806, 0
        %1868 = vmatprep.subr.bf16.mxu0 0
        %1869 = vmatpush1.bf16.msra.mxu0 0
        %1870 = vmatprep.subr.bf16.mxu0 0
        %1871 = vmatpush1.bf16.msra.mxu0 0
        %1872 = vmatprep.subr.bf16.mxu0 0
        %1873 = vmatpush1.bf16.msra.mxu0 0
        %1874 = vmatprep.subr.bf16.mxu0 0
        %1875 = vmatpush1.bf16.msra.mxu0 0
        %1876 = vmatprep.subr.bf16.mxu0 0
        %1877 = vmatpush1.bf16.msra.mxu0 0
        %1878 = vmatprep.subr.bf16.mxu0 0
        %1879 = vmatpush1.bf16.msra.mxu0 0
        %1880 = vmatprep.subr.bf16.mxu0 0
        %1881 = vmatpush1.bf16.msra.mxu0 %v1608
        %1882 = vmatprep.subr.bf16.mxu0 0
        %1883 = vmatpush1.bf16.msra.mxu0 %v1607
        %1884 = vmatprep.subr.bf16.mxu0 0
        %1885 = vmatpush2.bf16.msra.mxu0 0
        %1886 = vmatprep.subr.bf16.mxu0 0
        %1887 = vmatpush2.bf16.msra.mxu0 0
        %1888 = vmatprep.subr.bf16.mxu0 0
        %1889 = vmatpush2.bf16.msra.mxu0 0
        %1890 = vmatprep.subr.bf16.mxu0 0
        %1891 = vmatpush2.bf16.msra.mxu0 0
        %1892 = vmatprep.subr.bf16.mxu0 0
        %1893 = vmatpush2.bf16.msra.mxu0 0
        %1894 = vmatprep.subr.bf16.mxu0 0
        %1895 = vmatpush2.bf16.msra.mxu0 0
        %1896 = vmatprep.subr.bf16.mxu0 0
        %1897 = vmatpush2.bf16.msra.mxu0 0
        %1898 = vmatprep.subr.bf16.mxu0 0
        %1899 = vmatpush2.bf16.msra.mxu0 0
        %1900 = vmatprep.mubr.bf16.mxu0 0
        %1901 = vmatmul.mubr.bf16.gmra.mxu0 %v1863
        %v1902 = vpop.f32.mrf.mxu0
        %v1903 = vadd.f32 0.0, %v1902
        %v1904 = vpop.f32.mrf.mxu0
        %v1905 = vpop.f32.mrf.mxu0
        %v1906 = vadd.f32 0.0, %v1905
        %v1907 = vpop.f32.mrf.mxu0
        %1908 = vmatprep.mubr.bf16.mxu0 0
        %1909 = vmatmul.mubr.bf16.gmra.mxu0 %v1866
        %v1910 = vpop.f32.mrf.mxu0
        %v1911 = vadd.f32 0.0, %v1910
        %v1912 = vpop.f32.mrf.mxu0
        %v1913 = vpop.f32.mrf.mxu0
        %v1914 = vadd.f32 0.0, %v1913
        %v1915 = vpop.f32.mrf.mxu0
        %1916 = vdwg.mxu0
        %v1917 = vpack.c.bf16 %v1531, %v1528
        %v1918 = vpack.c.bf16 %v1851, %v1848
        %v1919 = vpack.c.bf16 %v1539, %v1536
        %v1920 = vpack.c.bf16 %v1859, %v1856
        %v1921 = vpack.c.bf16 %v1586, %v1583
        %v1922 = vpack.c.bf16 %v1906, %v1903
        %v1923 = vpack.c.bf16 %v1594, %v1591
        %v1924 = vpack.c.bf16 %v1914, %v1911
        %v1925 = vld [vmem:[%s666] sm:$0xf]
        %v1926 = vld [vmem:[%s666 + $0x4] sm:$0xf]
        %v1927 = vld [vmem:[%s666 + $0x8] sm:$0xf]
        %v1928 = vld [vmem:[%s666 + $0xc] sm:$0xf]
        %v1929 = vld [vmem:[%s666 + $0x10] sm:$0xf]
        %v1930 = vld [vmem:[%s666 + $0x14] sm:$0xf]
        %v1931 = vld [vmem:[%s666 + $0x18] sm:$0xf]
        %v1932 = vld [vmem:[%s666 + $0x1c] sm:$0xf]
        %v1933 = vld [vmem:[%s666 + $0x20] sm:$0xf]
        %v1934 = vld [vmem:[%s666 + $0x24] sm:$0xf]
        %v1935 = vld [vmem:[%s666 + $0x28] sm:$0xf]
        %v1936 = vld [vmem:[%s666 + $0x2c] sm:$0xf]
        %v1937 = vld [vmem:[%s666 + $0x30] sm:$0xf]
        %v1938 = vld [vmem:[%s666 + $0x34] sm:$0xf]
        %v1939 = vld [vmem:[%s666 + $0x38] sm:$0xf]
        %v1940 = vld [vmem:[%s666 + $0x3c] sm:$0xf]
        %v1941 = vld [vmem:[%s666 + $0x40] sm:$0xf]
        %v1942 = vld [vmem:[%s666 + $0x44] sm:$0xf]
        %v1943 = vld [vmem:[%s666 + $0x48] sm:$0xf]
        %v1944 = vld [vmem:[%s666 + $0x4c] sm:$0xf]
        %v1945 = vld [vmem:[%s666 + $0x50] sm:$0xf]
        %v1946 = vld [vmem:[%s666 + $0x54] sm:$0xf]
        %v1947 = vld [vmem:[%s666 + $0x58] sm:$0xf]
        %v1948 = vld [vmem:[%s666 + $0x5c] sm:$0xf]
        %v1949 = vld [vmem:[%s666 + $0x60] sm:$0xf]
        %v1950 = vld [vmem:[%s666 + $0x64] sm:$0xf]
        %v1951 = vld [vmem:[%s666 + $0x68] sm:$0xf]
        %v1952 = vld [vmem:[%s666 + $0x6c] sm:$0xf]
        %v1953 = vld [vmem:[%s666 + $0x70] sm:$0xf]
        %v1954 = vld [vmem:[%s666 + $0x74] sm:$0xf]
        %v1955 = vld [vmem:[%s666 + $0x78] sm:$0xf]
        %v1956 = vld [vmem:[%s666 + $0x7c] sm:$0xf]
        %v1957 = vld [vmem:[%s669] sm:$0x1]
        %v1959 = vlaneseq
        %v1960 = vshrl.u32 %v1959, 7
        %v1961 = vsub.s32 0, %v1960
        %v1962 = vrot.slane %v1957, %v1961
        %v1996 = vunpack.c.l.b16 %v1925
        %v1997 = vunpack.c.l.b16 %v1926
        %v1998 = vunpack.c.l.b16 %v1927
        %v1999 = vunpack.c.l.b16 %v1928
        %v2000 = vunpack.c.l.b16 %v1929
        %v2001 = vunpack.c.l.b16 %v1930
        %v2002 = vunpack.c.l.b16 %v1931
        %v2003 = vunpack.c.l.b16 %v1932
        %v2004 = vunpack.c.l.b16 %v1933
        %v2005 = vunpack.c.l.b16 %v1934
        %v2006 = vunpack.c.l.b16 %v1935
        %v2007 = vunpack.c.l.b16 %v1936
        %v2008 = vunpack.c.l.b16 %v1937
        %v2009 = vunpack.c.l.b16 %v1938
        %v2010 = vunpack.c.l.b16 %v1939
        %v2011 = vunpack.c.l.b16 %v1940
        %v2012 = vunpack.c.l.b16 %v1941
        %v2013 = vunpack.c.l.b16 %v1942
        %v2014 = vunpack.c.l.b16 %v1943
        %v2015 = vunpack.c.l.b16 %v1944
        %v2016 = vunpack.c.l.b16 %v1945
        %v2017 = vunpack.c.l.b16 %v1946
        %v2018 = vunpack.c.l.b16 %v1947
        %v2019 = vunpack.c.l.b16 %v1948
        %v2020 = vunpack.c.l.b16 %v1949
        %v2021 = vunpack.c.l.b16 %v1950
        %v2022 = vunpack.c.l.b16 %v1951
        %v2023 = vunpack.c.l.b16 %v1952
        %v2024 = vunpack.c.l.b16 %v1953
        %v2025 = vunpack.c.l.b16 %v1954
        %v2026 = vunpack.c.l.b16 %v1955
        %v2027 = vunpack.c.l.b16 %v1956
        %v2028 = vpack.c.b16 %v1997, %v1996
        %v2029 = vpack.c.b16 %v1999, %v1998
        %v2030 = vpack.c.b16 %v2001, %v2000
        %v2031 = vpack.c.b16 %v2003, %v2002
        %v2032 = vpack.c.b16 %v2005, %v2004
        %v2033 = vpack.c.b16 %v2007, %v2006
        %v2034 = vpack.c.b16 %v2009, %v2008
        %v2035 = vpack.c.b16 %v2011, %v2010
        %v2036 = vpack.c.b16 %v2013, %v2012
        %v2037 = vpack.c.b16 %v2015, %v2014
        %v2038 = vpack.c.b16 %v2017, %v2016
        %v2039 = vpack.c.b16 %v2019, %v2018
        %v2040 = vpack.c.b16 %v2021, %v2020
        %v2041 = vpack.c.b16 %v2023, %v2022
        %v2042 = vpack.c.b16 %v2025, %v2024
        %v2043 = vpack.c.b16 %v2027, %v2026
        %2060 = vmatprep.subr.bf16.mxu0 0
        %2061 = vmatpush1.bf16.msra.mxu0 %v2035
        %2062 = vmatprep.subr.bf16.mxu0 0
        %2063 = vmatpush1.bf16.msra.mxu0 %v2034
        %2064 = vmatprep.subr.bf16.mxu0 0
        %2065 = vmatpush1.bf16.msra.mxu0 %v2033
        %2066 = vmatprep.subr.bf16.mxu0 0
        %2067 = vmatpush1.bf16.msra.mxu0 %v2032
        %2068 = vmatprep.subr.bf16.mxu0 0
        %2069 = vmatpush1.bf16.msra.mxu0 %v2031
        %2070 = vmatprep.subr.bf16.mxu0 0
        %2071 = vmatpush1.bf16.msra.mxu0 %v2030
        %2072 = vmatprep.subr.bf16.mxu0 0
        %2073 = vmatpush1.bf16.msra.mxu0 %v2029
        %2074 = vmatprep.subr.bf16.mxu0 0
        %2075 = vmatpush1.bf16.msra.mxu0 %v2028
        %2076 = vmatprep.subr.bf16.mxu0 0
        %2077 = vmatpush2.bf16.msra.mxu0 %v2043
        %2078 = vmatprep.subr.bf16.mxu0 0
        %2079 = vmatpush2.bf16.msra.mxu0 %v2042
        %2080 = vmatprep.subr.bf16.mxu0 0
        %2081 = vmatpush2.bf16.msra.mxu0 %v2041
        %2082 = vmatprep.subr.bf16.mxu0 0
        %2083 = vmatpush2.bf16.msra.mxu0 %v2040
        %2084 = vmatprep.subr.bf16.mxu0 0
        %2085 = vmatpush2.bf16.msra.mxu0 %v2039
        %2086 = vmatprep.subr.bf16.mxu0 0
        %2087 = vmatpush2.bf16.msra.mxu0 %v2038
        %2088 = vmatprep.subr.bf16.mxu0 0
        %2089 = vmatpush2.bf16.msra.mxu0 %v2037
        %2090 = vmatprep.subr.bf16.mxu0 0
        %2091 = vmatpush2.bf16.msra.mxu0 %v2036
        %2092 = vmatprep.mubr.bf16.mxu0 %v1918
        %2093 = vmatmul.mubr.bf16.gmra.mxu0 %v1917
        %v2094 = vpop.f32.mrf.mxu0
        %v2095 = vadd.f32 %v1962, %v2094
        %v2096 = vpop.f32.mrf.mxu0
        %v2097 = vpop.f32.mrf.mxu0
        %v2098 = vadd.f32 %v1962, %v2097
        %v2099 = vpop.f32.mrf.mxu0
        %2100 = vmatprep.mubr.bf16.mxu0 %v1920
        %2101 = vmatmul.mubr.bf16.gmra.mxu0 %v1919
        %v2102 = vpop.f32.mrf.mxu0
        %v2103 = vadd.f32 %v1962, %v2102
        %v2104 = vpop.f32.mrf.mxu0
        %v2105 = vpop.f32.mrf.mxu0
        %v2106 = vadd.f32 %v1962, %v2105
        %v2107 = vpop.f32.mrf.mxu0
        %2108 = vmatprep.mubr.bf16.mxu0 %v1922
        %2109 = vmatmul.mubr.bf16.gmra.mxu0 %v1921
        %v2110 = vpop.f32.mrf.mxu0
        %v2111 = vadd.f32 %v1962, %v2110
        %v2112 = vpop.f32.mrf.mxu0
        %v2113 = vpop.f32.mrf.mxu0
        %v2114 = vadd.f32 %v1962, %v2113
        %v2115 = vpop.f32.mrf.mxu0
        %2116 = vmatprep.mubr.bf16.mxu0 %v1924
        %2117 = vmatmul.mubr.bf16.gmra.mxu0 %v1923
        %v2118 = vpop.f32.mrf.mxu0
        %v2119 = vadd.f32 %v1962, %v2118
        %v2120 = vpop.f32.mrf.mxu0
        %v2121 = vpop.f32.mrf.mxu0
        %v2122 = vadd.f32 %v1962, %v2121
        %v2123 = vpop.f32.mrf.mxu0
        %2124 = vdwg.mxu0
        %v2125 = vadd.f32 %v2095, %v723
        %v2126 = vadd.f32 %v2098, %v724
        %v2127 = vadd.f32 %v2103, %v725
        %v2128 = vadd.f32 %v2106, %v726
        %v2129 = vadd.f32 %v2111, %v727
        %v2130 = vadd.f32 %v2114, %v728
        %v2131 = vadd.f32 %v2119, %v729
        %v2132 = vadd.f32 %v2122, %v730
        %v2133 = vld [vmem:[%s672] sm:$0x1]
        %v2134 = vld [vmem:[%s675] sm:$0x1]
        %v2135 = vsel %vm721, 1, 0
        %vm2136 = vcmp.eq.s32.totalorder %v2135, 1
        %v2137 = vsel %vm2136, %v2125, 0.0
        %v2138 = vsel %vm2136, %v2126, 0.0
        %v2139 = vsel %vm2136, %v2127, 0.0
        %v2140 = vsel %vm2136, %v2128, 0.0
        %v2141 = vsel %vm2136, %v2129, 0.0
        %v2142 = vsel %vm2136, %v2130, 0.0
        %v2143 = vsel %vm2136, %v2131, 0.0
        %v2144 = vsel %vm2136, %v2132, 0.0
        %2145 = vadd.xlane.f32.xlu0 %v2137
        %v2146 = vpop.xlane.xlu0 %2145
        %2147 = vadd.xlane.f32.xlu0 %v2138
        %v2148 = vpop.xlane.xlu0 %2147
        %2149 = vadd.xlane.f32.xlu0 %v2139
        %v2150 = vpop.xlane.xlu0 %2149
        %2151 = vadd.xlane.f32.xlu0 %v2140
        %v2152 = vpop.xlane.xlu0 %2151
        %2153 = vadd.xlane.f32.xlu0 %v2141
        %v2154 = vpop.xlane.xlu0 %2153
        %2155 = vadd.xlane.f32.xlu0 %v2142
        %v2156 = vpop.xlane.xlu0 %2155
        %2157 = vadd.xlane.f32.xlu0 %v2143
        %v2158 = vpop.xlane.xlu0 %2157
        %2159 = vadd.xlane.f32.xlu0 %v2144
        %v2160 = vpop.xlane.xlu0 %2159
        %v2161 = vrcp.pop 32.0
        %v2162 = vmul.f32 %v2146, %v2161
        %v2163 = vmul.f32 %v2148, %v2161
        %v2164 = vmul.f32 %v2150, %v2161
        %v2165 = vmul.f32 %v2152, %v2161
        %v2166 = vmul.f32 %v2154, %v2161
        %v2167 = vmul.f32 %v2156, %v2161
        %v2168 = vmul.f32 %v2158, %v2161
        %v2169 = vmul.f32 %v2160, %v2161
        %v2170 = vsub.f32 %v2125, %v2162
        %v2171 = vsub.f32 %v2126, %v2163
        %v2172 = vsub.f32 %v2127, %v2164
        %v2173 = vsub.f32 %v2128, %v2165
        %v2174 = vsub.f32 %v2129, %v2166
        %v2175 = vsub.f32 %v2130, %v2167
        %v2176 = vsub.f32 %v2131, %v2168
        %v2177 = vsub.f32 %v2132, %v2169
        %v2178 = vsel %vm2136, %v2170, 0.0
        %v2179 = vsel %vm2136, %v2171, 0.0
        %v2180 = vsel %vm2136, %v2172, 0.0
        %v2181 = vsel %vm2136, %v2173, 0.0
        %v2182 = vsel %vm2136, %v2174, 0.0
        %v2183 = vsel %vm2136, %v2175, 0.0
        %v2184 = vsel %vm2136, %v2176, 0.0
        %v2185 = vsel %vm2136, %v2177, 0.0
        %v2186 = vmul.f32 %v2178, %v2178
        %v2187 = vmul.f32 %v2179, %v2179
        %v2188 = vmul.f32 %v2180, %v2180
        %v2189 = vmul.f32 %v2181, %v2181
        %v2190 = vmul.f32 %v2182, %v2182
        %v2191 = vmul.f32 %v2183, %v2183
        %v2192 = vmul.f32 %v2184, %v2184
        %v2193 = vmul.f32 %v2185, %v2185
        %2194 = vadd.xlane.f32.xlu0 %v2186
        %v2195 = vpop.xlane.xlu0 %2194
        %2196 = vadd.xlane.f32.xlu0 %v2187
        %v2197 = vpop.xlane.xlu0 %2196
        %2198 = vadd.xlane.f32.xlu0 %v2188
        %v2199 = vpop.xlane.xlu0 %2198
        %2200 = vadd.xlane.f32.xlu0 %v2189
        %v2201 = vpop.xlane.xlu0 %2200
        %2202 = vadd.xlane.f32.xlu0 %v2190
        %v2203 = vpop.xlane.xlu0 %2202
        %2204 = vadd.xlane.f32.xlu0 %v2191
        %v2205 = vpop.xlane.xlu0 %2204
        %2206 = vadd.xlane.f32.xlu0 %v2192
        %v2207 = vpop.xlane.xlu0 %2206
        %2208 = vadd.xlane.f32.xlu0 %v2193
        %v2209 = vpop.xlane.xlu0 %2208
        %v2210 = vmul.f32 %v2195, %v2161
        %v2211 = vmul.f32 %v2197, %v2161
        %v2212 = vmul.f32 %v2199, %v2161
        %v2213 = vmul.f32 %v2201, %v2161
        %v2214 = vmul.f32 %v2203, %v2161
        %v2215 = vmul.f32 %v2205, %v2161
        %v2216 = vmul.f32 %v2207, %v2161
        %v2217 = vmul.f32 %v2209, %v2161
        %v2218 = vadd.f32 %v2210, 1e-05
        %v2219 = vadd.f32 %v2211, 1e-05
        %v2220 = vadd.f32 %v2212, 1e-05
        %v2221 = vadd.f32 %v2213, 1e-05
        %v2222 = vadd.f32 %v2214, 1e-05
        %v2223 = vadd.f32 %v2215, 1e-05
        %v2224 = vadd.f32 %v2216, 1e-05
        %v2225 = vadd.f32 %v2217, 1e-05
        %v2226 = vrsqrt.pop %v2218
        %v2227 = vrsqrt.pop %v2219
        %v2228 = vrsqrt.pop %v2220
        %v2229 = vrsqrt.pop %v2221
        %v2230 = vrsqrt.pop %v2222
        %v2231 = vrsqrt.pop %v2223
        %v2232 = vrsqrt.pop %v2224
        %v2233 = vrsqrt.pop %v2225
        %v2234 = vmul.f32 %v2170, %v2226
        %v2235 = vmul.f32 %v2171, %v2227
        %v2236 = vmul.f32 %v2172, %v2228
        %v2237 = vmul.f32 %v2173, %v2229
        %v2238 = vmul.f32 %v2174, %v2230
        %v2239 = vmul.f32 %v2175, %v2231
        %v2240 = vmul.f32 %v2176, %v2232
        %v2241 = vmul.f32 %v2177, %v2233
        %v2243 = vlaneseq
        %v2244 = vshrl.u32 %v2243, 7
        %v2245 = vsub.s32 0, %v2244
        %v2246 = vrot.slane %v2133, %v2245
        %v2248 = vmul.f32 %v2234, %v2246
        %v2249 = vmul.f32 %v2235, %v2246
        %v2250 = vmul.f32 %v2236, %v2246
        %v2251 = vmul.f32 %v2237, %v2246
        %v2252 = vmul.f32 %v2238, %v2246
        %v2253 = vmul.f32 %v2239, %v2246
        %v2254 = vmul.f32 %v2240, %v2246
        %v2255 = vmul.f32 %v2241, %v2246
        %v2257 = vlaneseq
        %v2258 = vshrl.u32 %v2257, 7
        %v2259 = vsub.s32 0, %v2258
        %v2260 = vrot.slane %v2134, %v2259
        %v2262 = vadd.f32 %v2248, %v2260
        %v2263 = vadd.f32 %v2249, %v2260
        %v2264 = vadd.f32 %v2250, %v2260
        %v2265 = vadd.f32 %v2251, %v2260
        %v2266 = vadd.f32 %v2252, %v2260
        %v2267 = vadd.f32 %v2253, %v2260
        %v2268 = vadd.f32 %v2254, %v2260
        %v2269 = vadd.f32 %v2255, %v2260
        %v2270 = vpack.c.bf16 %v2263, %v2262
        %v2271 = vpack.c.bf16 %v2265, %v2264
        %v2272 = vpack.c.bf16 %v2267, %v2266
        %v2273 = vpack.c.bf16 %v2269, %v2268
        %v2274 = vld [vmem:[%s680] sm:$0xf]
        %v2275 = vld [vmem:[%s680 + $0x4] sm:$0xf]
        %v2276 = vld [vmem:[%s680 + $0x8] sm:$0xf]
        %v2277 = vld [vmem:[%s680 + $0xc] sm:$0xf]
        %v2278 = vld [vmem:[%s680 + $0x10] sm:$0xf]
        %v2279 = vld [vmem:[%s680 + $0x14] sm:$0xf]
        %v2280 = vld [vmem:[%s680 + $0x18] sm:$0xf]
        %v2281 = vld [vmem:[%s680 + $0x1c] sm:$0xf]
        %v2282 = vld [vmem:[%s680 + $0x20] sm:$0xf]
        %v2283 = vld [vmem:[%s680 + $0x24] sm:$0xf]
        %v2284 = vld [vmem:[%s680 + $0x28] sm:$0xf]
        %v2285 = vld [vmem:[%s680 + $0x2c] sm:$0xf]
        %v2286 = vld [vmem:[%s680 + $0x30] sm:$0xf]
        %v2287 = vld [vmem:[%s680 + $0x34] sm:$0xf]
        %v2288 = vld [vmem:[%s680 + $0x38] sm:$0xf]
        %v2289 = vld [vmem:[%s680 + $0x3c] sm:$0xf]
        %v2290 = vld [vmem:[%s683] sm:$0x1]
        %v2292 = vlaneseq
        %v2293 = vshrl.u32 %v2292, 7
        %v2294 = vsub.s32 0, %v2293
        %v2295 = vrot.slane %v2290, %v2294
        %v2313 = vunpack.c.l.b16 %v2274
        %v2314 = vunpack.c.l.b16 %v2275
        %v2315 = vunpack.c.l.b16 %v2276
        %v2316 = vunpack.c.l.b16 %v2277
        %v2317 = vunpack.c.l.b16 %v2278
        %v2318 = vunpack.c.l.b16 %v2279
        %v2319 = vunpack.c.l.b16 %v2280
        %v2320 = vunpack.c.l.b16 %v2281
        %v2321 = vunpack.c.l.b16 %v2282
        %v2322 = vunpack.c.l.b16 %v2283
        %v2323 = vunpack.c.l.b16 %v2284
        %v2324 = vunpack.c.l.b16 %v2285
        %v2325 = vunpack.c.l.b16 %v2286
        %v2326 = vunpack.c.l.b16 %v2287
        %v2327 = vunpack.c.l.b16 %v2288
        %v2328 = vunpack.c.l.b16 %v2289
        %v2329 = vpack.c.b16 %v2314, %v2313
        %v2330 = vpack.c.b16 %v2316, %v2315
        %v2331 = vpack.c.b16 %v2318, %v2317
        %v2332 = vpack.c.b16 %v2320, %v2319
        %v2333 = vpack.c.b16 %v2322, %v2321
        %v2334 = vpack.c.b16 %v2324, %v2323
        %v2335 = vpack.c.b16 %v2326, %v2325
        %v2336 = vpack.c.b16 %v2328, %v2327
        %2345 = vmatprep.subr.bf16.mxu0 0
        %2346 = vmatpush1.bf16.msra.mxu0 %v2336
        %2347 = vmatprep.subr.bf16.mxu0 0
        %2348 = vmatpush1.bf16.msra.mxu0 %v2335
        %2349 = vmatprep.subr.bf16.mxu0 0
        %2350 = vmatpush1.bf16.msra.mxu0 %v2334
        %2351 = vmatprep.subr.bf16.mxu0 0
        %2352 = vmatpush1.bf16.msra.mxu0 %v2333
        %2353 = vmatprep.subr.bf16.mxu0 0
        %2354 = vmatpush1.bf16.msra.mxu0 %v2332
        %2355 = vmatprep.subr.bf16.mxu0 0
        %2356 = vmatpush1.bf16.msra.mxu0 %v2331
        %2357 = vmatprep.subr.bf16.mxu0 0
        %2358 = vmatpush1.bf16.msra.mxu0 %v2330
        %2359 = vmatprep.subr.bf16.mxu0 0
        %2360 = vmatpush1.bf16.msra.mxu0 %v2329
        %2361 = vmatprep.subr.bf16.mxu0 0
        %2362 = vmatpush2.bf16.msra.mxu0 0
        %2363 = vmatprep.subr.bf16.mxu0 0
        %2364 = vmatpush2.bf16.msra.mxu0 0
        %2365 = vmatprep.subr.bf16.mxu0 0
        %2366 = vmatpush2.bf16.msra.mxu0 0
        %2367 = vmatprep.subr.bf16.mxu0 0
        %2368 = vmatpush2.bf16.msra.mxu0 0
        %2369 = vmatprep.subr.bf16.mxu0 0
        %2370 = vmatpush2.bf16.msra.mxu0 0
        %2371 = vmatprep.subr.bf16.mxu0 0
        %2372 = vmatpush2.bf16.msra.mxu0 0
        %2373 = vmatprep.subr.bf16.mxu0 0
        %2374 = vmatpush2.bf16.msra.mxu0 0
        %2375 = vmatprep.subr.bf16.mxu0 0
        %2376 = vmatpush2.bf16.msra.mxu0 0
        %2377 = vmatprep.mubr.bf16.mxu0 0
        %2378 = vmatmul.mubr.bf16.gmra.mxu0 %v2270
        %v2379 = vpop.f32.mrf.mxu0
        %v2380 = vadd.f32 %v2295, %v2379
        %v2381 = vpop.f32.mrf.mxu0
        %v2382 = vpop.f32.mrf.mxu0
        %v2383 = vadd.f32 %v2295, %v2382
        %v2384 = vpop.f32.mrf.mxu0
        %2385 = vmatprep.mubr.bf16.mxu0 0
        %2386 = vmatmul.mubr.bf16.gmra.mxu0 %v2271
        %v2387 = vpop.f32.mrf.mxu0
        %v2388 = vadd.f32 %v2295, %v2387
        %v2389 = vpop.f32.mrf.mxu0
        %v2390 = vpop.f32.mrf.mxu0
        %v2391 = vadd.f32 %v2295, %v2390
        %v2392 = vpop.f32.mrf.mxu0
        %2393 = vmatprep.mubr.bf16.mxu0 0
        %2394 = vmatmul.mubr.bf16.gmra.mxu0 %v2272
        %v2395 = vpop.f32.mrf.mxu0
        %v2396 = vadd.f32 %v2295, %v2395
        %v2397 = vpop.f32.mrf.mxu0
        %v2398 = vpop.f32.mrf.mxu0
        %v2399 = vadd.f32 %v2295, %v2398
        %v2400 = vpop.f32.mrf.mxu0
        %2401 = vmatprep.mubr.bf16.mxu0 0
        %2402 = vmatmul.mubr.bf16.gmra.mxu0 %v2273
        %v2403 = vpop.f32.mrf.mxu0
        %v2404 = vadd.f32 %v2295, %v2403
        %v2405 = vpop.f32.mrf.mxu0
        %v2406 = vpop.f32.mrf.mxu0
        %v2407 = vadd.f32 %v2295, %v2406
        %v2408 = vpop.f32.mrf.mxu0
        %2409 = vdwg.mxu0
        %v2410 = vmax.f32 %v2380, 0.0
        %v2411 = vmax.f32 %v2383, 0.0
        %v2412 = vmax.f32 %v2388, 0.0
        %v2413 = vmax.f32 %v2391, 0.0
        %v2414 = vmax.f32 %v2396, 0.0
        %v2415 = vmax.f32 %v2399, 0.0
        %v2416 = vmax.f32 %v2404, 0.0
        %v2417 = vmax.f32 %v2407, 0.0
        %v2418 = vpack.c.bf16 %v2411, %v2410
        %v2419 = vpack.c.bf16 %v2413, %v2412
        %v2420 = vpack.c.bf16 %v2415, %v2414
        %v2421 = vpack.c.bf16 %v2417, %v2416
        %v2422 = vld [vmem:[%s688] sm:$0xf]
        %v2423 = vld [vmem:[%s688 + $0x4] sm:$0xf]
        %v2424 = vld [vmem:[%s688 + $0x8] sm:$0xf]
        %v2425 = vld [vmem:[%s688 + $0xc] sm:$0xf]
        %v2426 = vld [vmem:[%s688 + $0x10] sm:$0xf]
        %v2427 = vld [vmem:[%s688 + $0x14] sm:$0xf]
        %v2428 = vld [vmem:[%s688 + $0x18] sm:$0xf]
        %v2429 = vld [vmem:[%s688 + $0x1c] sm:$0xf]
        %v2430 = vld [vmem:[%s688 + $0x20] sm:$0xf]
        %v2431 = vld [vmem:[%s688 + $0x24] sm:$0xf]
        %v2432 = vld [vmem:[%s688 + $0x28] sm:$0xf]
        %v2433 = vld [vmem:[%s688 + $0x2c] sm:$0xf]
        %v2434 = vld [vmem:[%s688 + $0x30] sm:$0xf]
        %v2435 = vld [vmem:[%s688 + $0x34] sm:$0xf]
        %v2436 = vld [vmem:[%s688 + $0x38] sm:$0xf]
        %v2437 = vld [vmem:[%s688 + $0x3c] sm:$0xf]
        %v2438 = vld [vmem:[%s691] sm:$0x1]
        %v2440 = vlaneseq
        %v2441 = vshrl.u32 %v2440, 7
        %v2442 = vsub.s32 0, %v2441
        %v2443 = vrot.slane %v2438, %v2442
        %v2461 = vunpack.c.l.b16 %v2422
        %v2462 = vunpack.c.l.b16 %v2423
        %v2463 = vunpack.c.l.b16 %v2424
        %v2464 = vunpack.c.l.b16 %v2425
        %v2465 = vunpack.c.l.b16 %v2426
        %v2466 = vunpack.c.l.b16 %v2427
        %v2467 = vunpack.c.l.b16 %v2428
        %v2468 = vunpack.c.l.b16 %v2429
        %v2469 = vunpack.c.l.b16 %v2430
        %v2470 = vunpack.c.l.b16 %v2431
        %v2471 = vunpack.c.l.b16 %v2432
        %v2472 = vunpack.c.l.b16 %v2433
        %v2473 = vunpack.c.l.b16 %v2434
        %v2474 = vunpack.c.l.b16 %v2435
        %v2475 = vunpack.c.l.b16 %v2436
        %v2476 = vunpack.c.l.b16 %v2437
        %v2477 = vpack.c.b16 %v2462, %v2461
        %v2478 = vpack.c.b16 %v2464, %v2463
        %v2479 = vpack.c.b16 %v2466, %v2465
        %v2480 = vpack.c.b16 %v2468, %v2467
        %v2481 = vpack.c.b16 %v2470, %v2469
        %v2482 = vpack.c.b16 %v2472, %v2471
        %v2483 = vpack.c.b16 %v2474, %v2473
        %v2484 = vpack.c.b16 %v2476, %v2475
        %2493 = vmatprep.subr.bf16.mxu0 0
        %2494 = vmatpush1.bf16.msra.mxu0 %v2484
        %2495 = vmatprep.subr.bf16.mxu0 0
        %2496 = vmatpush1.bf16.msra.mxu0 %v2483
        %2497 = vmatprep.subr.bf16.mxu0 0
        %2498 = vmatpush1.bf16.msra.mxu0 %v2482
        %2499 = vmatprep.subr.bf16.mxu0 0
        %2500 = vmatpush1.bf16.msra.mxu0 %v2481
        %2501 = vmatprep.subr.bf16.mxu0 0
        %2502 = vmatpush1.bf16.msra.mxu0 %v2480
        %2503 = vmatprep.subr.bf16.mxu0 0
        %2504 = vmatpush1.bf16.msra.mxu0 %v2479
        %2505 = vmatprep.subr.bf16.mxu0 0
        %2506 = vmatpush1.bf16.msra.mxu0 %v2478
        %2507 = vmatprep.subr.bf16.mxu0 0
        %2508 = vmatpush1.bf16.msra.mxu0 %v2477
        %2509 = vmatprep.subr.bf16.mxu0 0
        %2510 = vmatpush2.bf16.msra.mxu0 0
        %2511 = vmatprep.subr.bf16.mxu0 0
        %2512 = vmatpush2.bf16.msra.mxu0 0
        %2513 = vmatprep.subr.bf16.mxu0 0
        %2514 = vmatpush2.bf16.msra.mxu0 0
        %2515 = vmatprep.subr.bf16.mxu0 0
        %2516 = vmatpush2.bf16.msra.mxu0 0
        %2517 = vmatprep.subr.bf16.mxu0 0
        %2518 = vmatpush2.bf16.msra.mxu0 0
        %2519 = vmatprep.subr.bf16.mxu0 0
        %2520 = vmatpush2.bf16.msra.mxu0 0
        %2521 = vmatprep.subr.bf16.mxu0 0
        %2522 = vmatpush2.bf16.msra.mxu0 0
        %2523 = vmatprep.subr.bf16.mxu0 0
        %2524 = vmatpush2.bf16.msra.mxu0 0
        %2525 = vmatprep.mubr.bf16.mxu0 0
        %2526 = vmatmul.mubr.bf16.gmra.mxu0 %v2418
        %v2527 = vpop.f32.mrf.mxu0
        %v2528 = vadd.f32 %v2443, %v2527
        %v2529 = vpop.f32.mrf.mxu0
        %v2530 = vpop.f32.mrf.mxu0
        %v2531 = vadd.f32 %v2443, %v2530
        %v2532 = vpop.f32.mrf.mxu0
        %2533 = vmatprep.mubr.bf16.mxu0 0
        %2534 = vmatmul.mubr.bf16.gmra.mxu0 %v2419
        %v2535 = vpop.f32.mrf.mxu0
        %v2536 = vadd.f32 %v2443, %v2535
        %v2537 = vpop.f32.mrf.mxu0
        %v2538 = vpop.f32.mrf.mxu0
        %v2539 = vadd.f32 %v2443, %v2538
        %v2540 = vpop.f32.mrf.mxu0
        %2541 = vmatprep.mubr.bf16.mxu0 0
        %2542 = vmatmul.mubr.bf16.gmra.mxu0 %v2420
        %v2543 = vpop.f32.mrf.mxu0
        %v2544 = vadd.f32 %v2443, %v2543
        %v2545 = vpop.f32.mrf.mxu0
        %v2546 = vpop.f32.mrf.mxu0
        %v2547 = vadd.f32 %v2443, %v2546
        %v2548 = vpop.f32.mrf.mxu0
        %2549 = vmatprep.mubr.bf16.mxu0 0
        %2550 = vmatmul.mubr.bf16.gmra.mxu0 %v2421
        %v2551 = vpop.f32.mrf.mxu0
        %v2552 = vadd.f32 %v2443, %v2551
        %v2553 = vpop.f32.mrf.mxu0
        %v2554 = vpop.f32.mrf.mxu0
        %v2555 = vadd.f32 %v2443, %v2554
        %v2556 = vpop.f32.mrf.mxu0
        %2557 = vdwg.mxu0
        %v2558 = vadd.f32 %v2262, %v2528
        %v2559 = vadd.f32 %v2263, %v2531
        %v2560 = vadd.f32 %v2264, %v2536
        %v2561 = vadd.f32 %v2265, %v2539
        %v2562 = vadd.f32 %v2266, %v2544
        %v2563 = vadd.f32 %v2267, %v2547
        %v2564 = vadd.f32 %v2268, %v2552
        %v2565 = vadd.f32 %v2269, %v2555
        %v2566 = vld [vmem:[%s694] sm:$0x1]
        %v2567 = vld [vmem:[%s697] sm:$0x1]
        %v2568 = vsel %vm2136, %v2558, 0.0
        %v2569 = vsel %vm2136, %v2559, 0.0
        %v2570 = vsel %vm2136, %v2560, 0.0
        %v2571 = vsel %vm2136, %v2561, 0.0
        %v2572 = vsel %vm2136, %v2562, 0.0
        %v2573 = vsel %vm2136, %v2563, 0.0
        %v2574 = vsel %vm2136, %v2564, 0.0
        %v2575 = vsel %vm2136, %v2565, 0.0
        %2576 = vadd.xlane.f32.xlu0 %v2568
        %v2577 = vpop.xlane.xlu0 %2576
        %2578 = vadd.xlane.f32.xlu0 %v2569
        %v2579 = vpop.xlane.xlu0 %2578
        %2580 = vadd.xlane.f32.xlu0 %v2570
        %v2581 = vpop.xlane.xlu0 %2580
        %2582 = vadd.xlane.f32.xlu0 %v2571
        %v2583 = vpop.xlane.xlu0 %2582
        %2584 = vadd.xlane.f32.xlu0 %v2572
        %v2585 = vpop.xlane.xlu0 %2584
        %2586 = vadd.xlane.f32.xlu0 %v2573
        %v2587 = vpop.xlane.xlu0 %2586
        %2588 = vadd.xlane.f32.xlu0 %v2574
        %v2589 = vpop.xlane.xlu0 %2588
        %2590 = vadd.xlane.f32.xlu0 %v2575
        %v2591 = vpop.xlane.xlu0 %2590
        %v2592 = vmul.f32 %v2577, %v2161
        %v2593 = vmul.f32 %v2579, %v2161
        %v2594 = vmul.f32 %v2581, %v2161
        %v2595 = vmul.f32 %v2583, %v2161
        %v2596 = vmul.f32 %v2585, %v2161
        %v2597 = vmul.f32 %v2587, %v2161
        %v2598 = vmul.f32 %v2589, %v2161
        %v2599 = vmul.f32 %v2591, %v2161
        %v2600 = vsub.f32 %v2558, %v2592
        %v2601 = vsub.f32 %v2559, %v2593
        %v2602 = vsub.f32 %v2560, %v2594
        %v2603 = vsub.f32 %v2561, %v2595
        %v2604 = vsub.f32 %v2562, %v2596
        %v2605 = vsub.f32 %v2563, %v2597
        %v2606 = vsub.f32 %v2564, %v2598
        %v2607 = vsub.f32 %v2565, %v2599
        %v2608 = vsel %vm2136, %v2600, 0.0
        %v2609 = vsel %vm2136, %v2601, 0.0
        %v2610 = vsel %vm2136, %v2602, 0.0
        %v2611 = vsel %vm2136, %v2603, 0.0
        %v2612 = vsel %vm2136, %v2604, 0.0
        %v2613 = vsel %vm2136, %v2605, 0.0
        %v2614 = vsel %vm2136, %v2606, 0.0
        %v2615 = vsel %vm2136, %v2607, 0.0
        %v2616 = vmul.f32 %v2608, %v2608
        %v2617 = vmul.f32 %v2609, %v2609
        %v2618 = vmul.f32 %v2610, %v2610
        %v2619 = vmul.f32 %v2611, %v2611
        %v2620 = vmul.f32 %v2612, %v2612
        %v2621 = vmul.f32 %v2613, %v2613
        %v2622 = vmul.f32 %v2614, %v2614
        %v2623 = vmul.f32 %v2615, %v2615
        %2624 = vadd.xlane.f32.xlu0 %v2616
        %v2625 = vpop.xlane.xlu0 %2624
        %2626 = vadd.xlane.f32.xlu0 %v2617
        %v2627 = vpop.xlane.xlu0 %2626
        %2628 = vadd.xlane.f32.xlu0 %v2618
        %v2629 = vpop.xlane.xlu0 %2628
        %2630 = vadd.xlane.f32.xlu0 %v2619
        %v2631 = vpop.xlane.xlu0 %2630
        %2632 = vadd.xlane.f32.xlu0 %v2620
        %v2633 = vpop.xlane.xlu0 %2632
        %2634 = vadd.xlane.f32.xlu0 %v2621
        %v2635 = vpop.xlane.xlu0 %2634
        %2636 = vadd.xlane.f32.xlu0 %v2622
        %v2637 = vpop.xlane.xlu0 %2636
        %2638 = vadd.xlane.f32.xlu0 %v2623
        %v2639 = vpop.xlane.xlu0 %2638
        %v2640 = vmul.f32 %v2625, %v2161
        %v2641 = vmul.f32 %v2627, %v2161
        %v2642 = vmul.f32 %v2629, %v2161
        %v2643 = vmul.f32 %v2631, %v2161
        %v2644 = vmul.f32 %v2633, %v2161
        %v2645 = vmul.f32 %v2635, %v2161
        %v2646 = vmul.f32 %v2637, %v2161
        %v2647 = vmul.f32 %v2639, %v2161
        %v2648 = vadd.f32 %v2640, 1e-05
        %v2649 = vadd.f32 %v2641, 1e-05
        %v2650 = vadd.f32 %v2642, 1e-05
        %v2651 = vadd.f32 %v2643, 1e-05
        %v2652 = vadd.f32 %v2644, 1e-05
        %v2653 = vadd.f32 %v2645, 1e-05
        %v2654 = vadd.f32 %v2646, 1e-05
        %v2655 = vadd.f32 %v2647, 1e-05
        %v2656 = vrsqrt.pop %v2648
        %v2657 = vrsqrt.pop %v2649
        %v2658 = vrsqrt.pop %v2650
        %v2659 = vrsqrt.pop %v2651
        %v2660 = vrsqrt.pop %v2652
        %v2661 = vrsqrt.pop %v2653
        %v2662 = vrsqrt.pop %v2654
        %v2663 = vrsqrt.pop %v2655
        %v2664 = vmul.f32 %v2600, %v2656
        %v2665 = vmul.f32 %v2601, %v2657
        %v2666 = vmul.f32 %v2602, %v2658
        %v2667 = vmul.f32 %v2603, %v2659
        %v2668 = vmul.f32 %v2604, %v2660
        %v2669 = vmul.f32 %v2605, %v2661
        %v2670 = vmul.f32 %v2606, %v2662
        %v2671 = vmul.f32 %v2607, %v2663
        %v2673 = vlaneseq
        %v2674 = vshrl.u32 %v2673, 7
        %v2675 = vsub.s32 0, %v2674
        %v2676 = vrot.slane %v2566, %v2675
        %v2678 = vmul.f32 %v2664, %v2676
        %v2679 = vmul.f32 %v2665, %v2676
        %v2680 = vmul.f32 %v2666, %v2676
        %v2681 = vmul.f32 %v2667, %v2676
        %v2682 = vmul.f32 %v2668, %v2676
        %v2683 = vmul.f32 %v2669, %v2676
        %v2684 = vmul.f32 %v2670, %v2676
        %v2685 = vmul.f32 %v2671, %v2676
        %v2687 = vlaneseq
        %v2688 = vshrl.u32 %v2687, 7
        %v2689 = vsub.s32 0, %v2688
        %v2690 = vrot.slane %v2567, %v2689
        %v2692 = vadd.f32 %v2678, %v2690
        %v2693 = vadd.f32 %v2679, %v2690
        %v2694 = vadd.f32 %v2680, %v2690
        %v2695 = vadd.f32 %v2681, %v2690
        %v2696 = vadd.f32 %v2682, %v2690
        %v2697 = vadd.f32 %v2683, %v2690
        %v2698 = vadd.f32 %v2684, %v2690
        %v2699 = vadd.f32 %v2685, %v2690
        %2700 = vst [vmem:[#allocation2] sm:$0xff] %v2692
        %2701 = vst [vmem:[#allocation2 + $0x8] sm:$0xff] %v2693
        %2702 = vst [vmem:[#allocation2 + $0x10] sm:$0xff] %v2694
        %2703 = vst [vmem:[#allocation2 + $0x18] sm:$0xff] %v2695
        %2704 = vst [vmem:[#allocation2 + $0x20] sm:$0xff] %v2696
        %2705 = vst [vmem:[#allocation2 + $0x28] sm:$0xff] %v2697
        %2706 = vst [vmem:[#allocation2 + $0x30] sm:$0xff] %v2698
        %2707 = vst [vmem:[#allocation2 + $0x38] sm:$0xff] %v2699
        %p2708 = scmp.eq.s32.totalorder %s32, 1
        // Predicated region
        $region85: #{vision_transformer_forward.3} parent=79 // pred_check
          %p2709 = pneg %p2708
        $region86: #{vision_transformer_forward.3} parent=79 // pred_check_branch
          %2711 = sbr.rel (%p2709) target = $region88
        $region87: #{vision_transformer_forward.3} parent=79 // pred_region
          %v2712 = vld [vmem:[#allocation2] sm:$0x1]
          %v2713 = vld [vmem:[#allocation2 + $0x20] sm:$0x1]
          %v2714 = vpack.c.bf16 %v2712, %v2712
          %v2715 = vpack.c.bf16 %v2713, %v2713
          %v2716 = vld [vmem:[%s13] sm:$0xf]
          %v2717 = vld [vmem:[%s13 + $0x4] sm:$0xf]
          %v2718 = vld [vmem:[%s13 + $0x8] sm:$0xf]
          %v2719 = vld [vmem:[%s13 + $0xc] sm:$0xf]
          %v2720 = vld [vmem:[%s13 + $0x10] sm:$0xf]
          %v2721 = vld [vmem:[%s13 + $0x14] sm:$0xf]
          %v2722 = vld [vmem:[%s13 + $0x18] sm:$0xf]
          %v2723 = vld [vmem:[%s13 + $0x1c] sm:$0xf]
          %v2724 = vld [vmem:[%s13 + $0x20] sm:$0xf]
          %v2725 = vld [vmem:[%s13 + $0x24] sm:$0xf]
          %v2726 = vld [vmem:[%s13 + $0x28] sm:$0xf]
          %v2727 = vld [vmem:[%s13 + $0x2c] sm:$0xf]
          %v2728 = vld [vmem:[%s13 + $0x30] sm:$0xf]
          %v2729 = vld [vmem:[%s13 + $0x34] sm:$0xf]
          %v2730 = vld [vmem:[%s13 + $0x38] sm:$0xf]
          %v2731 = vld [vmem:[%s13 + $0x3c] sm:$0xf]
          %v2732 = vld [vmem:[%s14] sm:$0x1]
          %v2734 = vlaneseq
          %v2735 = vshrl.u32 %v2734, 7
          %v2736 = vsub.s32 0, %v2735
          %v2737 = vrot.slane %v2732, %v2736
          %v2741 = vunpack.c.l.b16 %v2714
          %v2742 = vunpack.c.l.b16 %v2715
          %v2743 = vrot.slane %v2742, 7
          %vm2744 = vcmask 1041409
          %v2745 = vsel %vm2744, %v2743, %v2741
          %v2746 = vpack.c.b16 %v2745, %v2745
          %v2764 = vunpack.c.l.b16 %v2716
          %v2765 = vunpack.c.l.b16 %v2717
          %v2766 = vunpack.c.l.b16 %v2718
          %v2767 = vunpack.c.l.b16 %v2719
          %v2768 = vunpack.c.l.b16 %v2720
          %v2769 = vunpack.c.l.b16 %v2721
          %v2770 = vunpack.c.l.b16 %v2722
          %v2771 = vunpack.c.l.b16 %v2723
          %v2772 = vunpack.c.l.b16 %v2724
          %v2773 = vunpack.c.l.b16 %v2725
          %v2774 = vunpack.c.l.b16 %v2726
          %v2775 = vunpack.c.l.b16 %v2727
          %v2776 = vunpack.c.l.b16 %v2728
          %v2777 = vunpack.c.l.b16 %v2729
          %v2778 = vunpack.c.l.b16 %v2730
          %v2779 = vunpack.c.l.b16 %v2731
          %v2780 = vpack.c.b16 %v2765, %v2764
          %v2781 = vpack.c.b16 %v2767, %v2766
          %v2782 = vpack.c.b16 %v2769, %v2768
          %v2783 = vpack.c.b16 %v2771, %v2770
          %v2784 = vpack.c.b16 %v2773, %v2772
          %v2785 = vpack.c.b16 %v2775, %v2774
          %v2786 = vpack.c.b16 %v2777, %v2776
          %v2787 = vpack.c.b16 %v2779, %v2778
          %2796 = vmatprep.subr.bf16.mxu0 0
          %2797 = vmatpush1.bf16.msra.mxu0 %v2787
          %2798 = vmatprep.subr.bf16.mxu0 0
          %2799 = vmatpush1.bf16.msra.mxu0 %v2786
          %2800 = vmatprep.subr.bf16.mxu0 0
          %2801 = vmatpush1.bf16.msra.mxu0 %v2785
          %2802 = vmatprep.subr.bf16.mxu0 0
          %2803 = vmatpush1.bf16.msra.mxu0 %v2784
          %2804 = vmatprep.subr.bf16.mxu0 0
          %2805 = vmatpush1.bf16.msra.mxu0 %v2783
          %2806 = vmatprep.subr.bf16.mxu0 0
          %2807 = vmatpush1.bf16.msra.mxu0 %v2782
          %2808 = vmatprep.subr.bf16.mxu0 0
          %2809 = vmatpush1.bf16.msra.mxu0 %v2781
          %2810 = vmatprep.subr.bf16.mxu0 0
          %2811 = vmatpush1.bf16.msra.mxu0 %v2780
          %2812 = vmatprep.subr.bf16.mxu0 0
          %2813 = vmatpush2.bf16.msra.mxu0 0
          %2814 = vmatprep.subr.bf16.mxu0 0
          %2815 = vmatpush2.bf16.msra.mxu0 0
          %2816 = vmatprep.subr.bf16.mxu0 0
          %2817 = vmatpush2.bf16.msra.mxu0 0
          %2818 = vmatprep.subr.bf16.mxu0 0
          %2819 = vmatpush2.bf16.msra.mxu0 0
          %2820 = vmatprep.subr.bf16.mxu0 0
          %2821 = vmatpush2.bf16.msra.mxu0 0
          %2822 = vmatprep.subr.bf16.mxu0 0
          %2823 = vmatpush2.bf16.msra.mxu0 0
          %2824 = vmatprep.subr.bf16.mxu0 0
          %2825 = vmatpush2.bf16.msra.mxu0 0
          %2826 = vmatprep.subr.bf16.mxu0 0
          %2827 = vmatpush2.bf16.msra.mxu0 0
          %2828 = vmatprep.mubr.bf16.mxu0 0
          %2829 = vmatmul.mubr.bf16.gmra.mxu0 %v2746
          %v2830 = vpop.f32.mrf.mxu0
          %v2831 = vadd.f32 %v2737, %v2830
          %v2832 = vpop.f32.mrf.mxu0
          %v2833 = vpop.f32.mrf.mxu0
          %v2834 = vpop.f32.mrf.mxu0
          %2835 = vdwg.mxu0
          %vm2836 = vcmp.lt.s32.totalorder %v720, 10
          %v2837 = vsel %vm2836, %v2831, -1e+30
          %vm2838 = vcmask 1041408
          %v2839 = vsel %vm2838, %v2837, -inf
          %2840 = vmax.xlane.f32.xlu0 %v2839
          %v2841 = vpop.xlane.xlu0 %2840
          %v2842 = vsub.f32 %v2837, %v2841
          %v2843 = vmul.f32 %v2842, 1.442695
          %v2844 = vpow.pop %v2843
          %v2845 = vsel %vm2838, %v2844, 0.0
          %2846 = vadd.xlane.f32.xlu0 %v2845
          %v2847 = vpop.xlane.xlu0 %2846
          %v2848 = vrcp.pop %v2847
          %v2849 = vmul.f32 %v2844, %v2848
          %2850 = vst [vmem:[#allocation3] sm:$0x3] %v2849
        $region88: #{vision_transformer_forward.3} parent=79 // pred_fallthru
          _
        // Predicated region
        $region89: #{vision_transformer_forward.3} parent=79 // pred_check
          %p2851 = pneg %p437
        $region90: #{vision_transformer_forward.3} parent=79 // pred_check_branch
          %2853 = sbr.rel (%p2851) target = $region92
        $region91: #{vision_transformer_forward.3} parent=79 // pred_region
          %s2855 = ssub.s32 32, 32
          %2856 = vsyncadd [#allocation4], %s2855
          %s2857 = smul.addr %s31, 32
          %s2858 = scalar_lea.hbm %s15, %s2857
          %s2860 = sshll.u32 [#allocation3], 4
          %s2861 = int_to_ptr.vmem [resolvable:$true] %s2860
          %2863 = dma.vmem_to_hbm [thread:$0]  %s2861, 32, %s2858, [#allocation4]
        $region92: #{vision_transformer_forward.3} parent=79 // pred_fallthru
          _
        // Predicated region
        $region93: #{vision_transformer_forward.3} parent=79 // pred_check
          %p2864 = pneg %p437
        $region94: #{vision_transformer_forward.3} parent=79 // pred_check_branch
          %2866 = sbr.rel (%p2864) target = $region96
        $region95: #{vision_transformer_forward.3} parent=79 // pred_region
          %2867 = dma.done [#allocation4], 32
        $region96: #{vision_transformer_forward.3} parent=79 // pred_fallthru
          _
      $region80: #{vision_transformer_forward.3} parent=5 // pred_fallthru
        _
      %p2868 = scmp.le.s32.totalorder 2, %s22
      // Predicated region
      $region97: #{vision_transformer_forward.3} parent=5 // pred_check
        %p2869 = pneg %p2868
      $region98: #{vision_transformer_forward.3} parent=5 // pred_check_branch
        %2871 = sbr.rel (%p2869) target = $region100
      $region99: #{vision_transformer_forward.3} parent=5 // pred_region
        %s2872 = ssub.s32 %s22, 2
      $region100: #{vision_transformer_forward.3} parent=5 // pred_fallthru
        _
    $region6: #{vision_transformer_forward.3} parent=1 // loop_footer
      %s26 = sadd.s32 1, %s22
    $region7: #{vision_transformer_forward.3} parent=1 // loop_footer_branch
      %21 = sbr.rel target = $region3
    $region8: #{vision_transformer_forward.3} parent=1 // loop_exit
      _
    %2873 = vsyncpa [#allocation4], 1
    %s2874 = scalar_lea.sflag [#allocation4], 1
    %2875 = vsyncpa %s2874, 1

</llo_original>
